<compile_context>
chip_gen: v5e
topology: v5e:2x2
jax: 0.10.0
libtpu: 0.0.40
codegen_flags: <defaults>
</compile_context>

<pallas_src>
import functools

import jax
import jax.numpy as jnp
from jax.experimental import pallas as pl
from jax.experimental.pallas import tpu as pltpu

TM_MAX = 1024  # max M-tile (rows) for the conv matmul grid
TB_MAX = 512   # max batch-tile for the fused FC head


# ---------------------------------------------------------------------------
# Pallas kernels
# ---------------------------------------------------------------------------
def _conv_mm_kernel(x_ref, w_ref, b_ref, *rest, bn):
    """relu(patches @ w + b) [* bn_scale + bn_shift]  (Conv->ReLU(->Drop=id)->BN)."""
    if bn:
        s_ref, t_ref, o_ref = rest
    else:
        (o_ref,) = rest
    acc = jnp.dot(x_ref[...], w_ref[...], preferred_element_type=jnp.float32)
    acc = jnp.maximum(acc + b_ref[...], 0.0)
    if bn:  # folded BatchNorm2d (eval mode): per-output-channel affine
        acc = acc * s_ref[...] + t_ref[...]
    o_ref[...] = acc.astype(o_ref.dtype)


def conv_matmul(patches, wm, b, bn_scale=None, bn_shift=None,
                out_dtype=jnp.bfloat16):
    M, K = patches.shape
    Kw, N = wm.shape
    assert K == Kw
    tm = M if M <= TM_MAX else TM_MAX
    bn = bn_scale is not None

    args = [patches, wm, b.reshape(1, N).astype(jnp.float32)]
    in_specs = [
        pl.BlockSpec((tm, K), lambda i: (i, 0)),
        pl.BlockSpec((K, N), lambda i: (0, 0)),
        pl.BlockSpec((1, N), lambda i: (0, 0)),
    ]
    if bn:
        args += [bn_scale.reshape(1, N).astype(jnp.float32),
                 bn_shift.reshape(1, N).astype(jnp.float32)]
        in_specs += [pl.BlockSpec((1, N), lambda i: (0, 0)),
                     pl.BlockSpec((1, N), lambda i: (0, 0))]

    return pl.pallas_call(
        functools.partial(_conv_mm_kernel, bn=bn),
        out_shape=jax.ShapeDtypeStruct((M, N), out_dtype),
        grid=(pl.cdiv(M, tm),),
        in_specs=in_specs,
        out_specs=pl.BlockSpec((tm, N), lambda i: (i, 0)),
        compiler_params=pltpu.CompilerParams(dimension_semantics=("parallel",)),
    )(*args)


def _fc_head_kernel(x_ref, w1, b1, s1, t1, w2, b2, w3, b3, w4, b4, o_ref):
    """fc1+ReLU -> BatchNorm1d -> fc2+ReLU -> fc3+ReLU -> fc4+ReLU -> Softmax."""
    bf16 = jnp.bfloat16
    h = jnp.dot(x_ref[...], w1[...], preferred_element_type=jnp.float32)
    h = jnp.maximum(h + b1[...], 0.0) * s1[...] + t1[...]   # Linear->ReLU->BN1d
    h = jnp.dot(h.astype(bf16), w2[...], preferred_element_type=jnp.float32)
    h = jnp.maximum(h + b2[...], 0.0)
    h = jnp.dot(h.astype(bf16), w3[...], preferred_element_type=jnp.float32)
    h = jnp.maximum(h + b3[...], 0.0)
    h = jnp.dot(h.astype(bf16), w4[...], preferred_element_type=jnp.float32)
    h = jnp.maximum(h + b4[...], 0.0)       # spec: final linear() includes ReLU
    m = jnp.max(h, axis=1, keepdims=True)   # Softmax(dim=1)
    e = jnp.exp(h - m)
    o_ref[...] = e / jnp.sum(e, axis=1, keepdims=True)


def fc_head(x, fc_args):
    B, K = x.shape
    n_classes = fc_args[-2].shape[1]
    tb = B if B <= TB_MAX else TB_MAX

    def _full2d(a):
        return pl.BlockSpec(a.shape, lambda i: (0, 0))

    return pl.pallas_call(
        _fc_head_kernel,
        out_shape=jax.ShapeDtypeStruct((B, n_classes), jnp.float32),
        grid=(pl.cdiv(B, tb),),
        in_specs=[pl.BlockSpec((tb, K), lambda i: (i, 0))]
                 + [_full2d(a) for a in fc_args],
        out_specs=pl.BlockSpec((tb, n_classes), lambda i: (i, 0)),
        compiler_params=pltpu.CompilerParams(dimension_semantics=("parallel",)),
    )(x, *fc_args)


# ---------------------------------------------------------------------------
# Glue (layout plumbing only)
# ---------------------------------------------------------------------------
def _im2col_nhwc(x, k, pad):
    # x: (B, H, W, C) -> (B*Ho*Wo, k*k*C); column order (kh, kw, Cin).
    B, H, W, C = x.shape
    Ho = H + 2 * pad - k + 1
    Wo = W + 2 * pad - k + 1
    xp = jnp.pad(x, ((0, 0), (pad, pad), (pad, pad), (0, 0)))
    cols = [xp[:, di:di + Ho, dj:dj + Wo, :]
            for di in range(k) for dj in range(k)]
    p = jnp.stack(cols, axis=3)                 # (B, Ho, Wo, k*k, C)
    return p.reshape(B * Ho * Wo, k * k * C), Ho, Wo


def conv2d_relu(x, w, b, bn_scale=None, bn_shift=None):
    # Conv2d(stride=1, padding=1) + ReLU (+ folded BatchNorm2d); NHWC in/out.
    B, H, W, Cin = x.shape
    Cout, _, k, _ = w.shape
    patches, Ho, Wo = _im2col_nhwc(x, k, pad=1)
    # weight columns reordered to (kh, kw, Cin) to match the NHWC patch layout
    wm = w.transpose(2, 3, 1, 0).reshape(k * k * Cin, Cout).astype(jnp.bfloat16)
    out = conv_matmul(patches, wm, b, bn_scale, bn_shift)
    return out.reshape(B, Ho, Wo, Cout)


def max_pool2(x):
    # MaxPool2d(2) on NHWC (tiny reduction; kept as XLA glue).
    B, H, W, C = x.shape
    Ho, Wo = H // 2, W // 2
    return x[:, :Ho * 2, :Wo * 2, :].reshape(B, Ho, 2, Wo, 2, C).max(axis=(2, 4))


def _bn_affine(gamma, beta, mean, var, eps=1e-5):
    scale = gamma / jnp.sqrt(var + eps)
    return scale, beta - mean * scale


# ---------------------------------------------------------------------------
# Parameters (deterministic, PyTorch-default-style uniform init)
# ---------------------------------------------------------------------------
def init_params(key, n_classes):
    ks = jax.random.split(key, 16)

    def uni(k, shape, fan_in):
        bound = float(fan_in) ** -0.5
        return jax.random.uniform(k, shape, jnp.float32, -bound, bound)

    p = {}
    p["conv1_w"] = uni(ks[0], (8, 1, 4, 4), 1 * 16)
    p["conv1_b"] = uni(ks[1], (8,), 1 * 16)
    p["conv2_w"] = uni(ks[2], (8, 8, 4, 4), 8 * 16)
    p["conv2_b"] = uni(ks[3], (8,), 8 * 16)
    p["conv3_w"] = uni(ks[4], (8, 8, 4, 4), 8 * 16)
    p["conv3_b"] = uni(ks[5], (8,), 8 * 16)
    p["fc1_w"] = uni(ks[6], (32, 648), 648)
    p["fc1_b"] = uni(ks[7], (32,), 648)
    p["fc2_w"] = uni(ks[8], (32, 32), 32)
    p["fc2_b"] = uni(ks[9], (32,), 32)
    p["fc3_w"] = uni(ks[10], (32, 32), 32)
    p["fc3_b"] = uni(ks[11], (32,), 32)
    p["fc4_w"] = uni(ks[12], (n_classes, 32), 32)
    p["fc4_b"] = uni(ks[13], (n_classes,), 32)
    # BatchNorm2d(8) and BatchNorm1d(32), default init / running stats.
    p["bn2d_gamma"], p["bn2d_beta"] = jnp.ones(8), jnp.zeros(8)
    p["bn2d_mean"], p["bn2d_var"] = jnp.zeros(8), jnp.ones(8)
    p["bn1d_gamma"], p["bn1d_beta"] = jnp.ones(32), jnp.zeros(32)
    p["bn1d_mean"], p["bn1d_var"] = jnp.zeros(32), jnp.ones(32)
    return p


# ---------------------------------------------------------------------------
# Forward pass (mirrors nn.Sequential in cnn.__init__)
# ---------------------------------------------------------------------------
def forward(params, x):
    p = params
    bn2_s, bn2_t = _bn_affine(p["bn2d_gamma"], p["bn2d_beta"],
                              p["bn2d_mean"], p["bn2d_var"])
    bn1_s, bn1_t = _bn_affine(p["bn1d_gamma"], p["bn1d_beta"],
                              p["bn1d_mean"], p["bn1d_var"])

    # NCHW -> NHWC once (C=1: pure relabel); bf16 activations from here on.
    x = x.transpose(0, 2, 3, 1).astype(jnp.bfloat16)

    # Conv(1->8)+ReLU(+Dropout2d=id) with BatchNorm2d(8) fused in-kernel.
    x = conv2d_relu(x, p["conv1_w"], p["conv1_b"], bn2_s, bn2_t)   # (B,39,39,8)
    x = conv2d_relu(x, p["conv2_w"], p["conv2_b"])                 # (B,38,38,8)
    x = max_pool2(x)                                               # (B,19,19,8)
    x = conv2d_relu(x, p["conv3_w"], p["conv3_b"])                 # (B,18,18,8)
    x = max_pool2(x)                                               # (B,9,9,8)

    B, Hf, Wf, Cf = x.shape
    x = x.reshape(B, Hf * Wf * Cf)                                 # Flatten (NHWC order)

    # fc1 weight columns permuted from PyTorch's (C,H,W) flatten order to the
    # NHWC (H,W,C) order used above -> identical math, no activation transpose.
    w1 = p["fc1_w"].reshape(-1, Cf, Hf, Wf).transpose(0, 2, 3, 1)
    w1 = w1.reshape(-1, Hf * Wf * Cf).T.astype(jnp.bfloat16)       # (648, 32)

    fc_args = (
        w1,
        p["fc1_b"].reshape(1, -1).astype(jnp.float32),
        bn1_s.reshape(1, -1).astype(jnp.float32),
        bn1_t.reshape(1, -1).astype(jnp.float32),
        p["fc2_w"].T.astype(jnp.bfloat16),
        p["fc2_b"].reshape(1, -1).astype(jnp.float32),
        p["fc3_w"].T.astype(jnp.bfloat16),
        p["fc3_b"].reshape(1, -1).astype(jnp.float32),
        p["fc4_w"].T.astype(jnp.bfloat16),
        p["fc4_b"].reshape(1, -1).astype(jnp.float32),
    )
    # Single fused kernel: fc1 -> BatchNorm1d -> fc2 -> fc3 -> fc4 -> Softmax.
    return fc_head(x, fc_args)


if __name__ == "__main__":
    n_classes = 3
    key = jax.random.PRNGKey(0)
    kp, kx = jax.random.split(key)
    params = init_params(kp, n_classes)
    # Input 40x40 grayscale -> Flatten width 648 (= 8*9*9), matching Linear(648, 32).
    x = jax.random.normal(kx, (2, 1, 40, 40), jnp.float32)

    out = jax.jit(forward)(params, x)
    out = jax.block_until_ready(out)
    assert out.shape == (2, n_classes)
    assert bool(jnp.all(jnp.isfinite(out)))
    print("KERNEL_OK")
</pallas_src>

<mosaic_0001>
module attributes {stable_mosaic.version = 11 : i64} {
  func.func @_conv_mm_kernel(%arg0: i32, %arg1: memref<1024x16xbf16, #tpu.memory_space<vmem>>, %arg2: memref<16x8xbf16, #tpu.memory_space<vmem>>, %arg3: memref<1x8xf32, #tpu.memory_space<vmem>>, %arg4: memref<1x8xf32, #tpu.memory_space<vmem>>, %arg5: memref<1x8xf32, #tpu.memory_space<vmem>>, %arg6: memref<1024x8xbf16, #tpu.memory_space<vmem>>) attributes {dimension_semantics = [#tpu.dimension_semantics<parallel>], iteration_bounds = array<i64: 3>, scalar_prefetch = 0 : i64, scratch_operands = 0 : i64, tpu.core_type = #tpu.core_type<tc>, window_params = [{transform_indices = @transform_0, window_bounds = array<i64: 1024, 16>}, {pipeline_mode = #tpu.pipeline_mode<synchronous>, transform_indices = @transform_1, window_bounds = array<i64: 16, 8>}, {pipeline_mode = #tpu.pipeline_mode<synchronous>, transform_indices = @transform_2, window_bounds = array<i64: 1, 8>}, {pipeline_mode = #tpu.pipeline_mode<synchronous>, transform_indices = @transform_3, window_bounds = array<i64: 1, 8>}, {pipeline_mode = #tpu.pipeline_mode<synchronous>, transform_indices = @transform_4, window_bounds = array<i64: 1, 8>}, {transform_indices = @transform_5, window_bounds = array<i64: 1024, 8>}]} {
    %c0 = arith.constant 0 : index
    %c0_0 = arith.constant 0 : index
    %0 = vector.load %arg1[%c0, %c0_0] : memref<1024x16xbf16, #tpu.memory_space<vmem>>, vector<1024x16xbf16>
    %c0_1 = arith.constant 0 : index
    %c0_2 = arith.constant 0 : index
    %1 = vector.load %arg2[%c0_1, %c0_2] : memref<16x8xbf16, #tpu.memory_space<vmem>>, vector<16x8xbf16>
    %cst = arith.constant dense<0.000000e+00> : vector<1024x8xf32>
    %2 = tpu.matmul %0, %1, %cst {dimension_numbers = #tpu.dot_dimension_numbers<[1], [0], [0], [1], [0, 0, 1, 1], [], []>} : vector<1024x16xbf16>, vector<16x8xbf16>, vector<1024x8xf32> -> vector<1024x8xf32>
    %c0_3 = arith.constant 0 : index
    %c0_4 = arith.constant 0 : index
    %3 = vector.load %arg3[%c0_3, %c0_4] : memref<1x8xf32, #tpu.memory_space<vmem>>, vector<1x8xf32>
    %4 = vector.broadcast %3 : vector<1x8xf32> to vector<1024x8xf32>
    %5 = arith.addf %2, %4 : vector<1024x8xf32>
    %cst_5 = arith.constant 0.000000e+00 : f32
    %6 = vector.broadcast %cst_5 : f32 to vector<1024x8xf32>
    %7 = arith.maximumf %5, %6 : vector<1024x8xf32>
    %c0_6 = arith.constant 0 : index
    %c0_7 = arith.constant 0 : index
    %8 = vector.load %arg4[%c0_6, %c0_7] : memref<1x8xf32, #tpu.memory_space<vmem>>, vector<1x8xf32>
    %9 = vector.broadcast %8 : vector<1x8xf32> to vector<1024x8xf32>
    %10 = arith.mulf %7, %9 : vector<1024x8xf32>
    %c0_8 = arith.constant 0 : index
    %c0_9 = arith.constant 0 : index
    %11 = vector.load %arg5[%c0_8, %c0_9] : memref<1x8xf32, #tpu.memory_space<vmem>>, vector<1x8xf32>
    %12 = vector.broadcast %11 : vector<1x8xf32> to vector<1024x8xf32>
    %13 = arith.addf %10, %12 : vector<1024x8xf32>
    %14 = arith.truncf %13 : vector<1024x8xf32> to vector<1024x8xbf16>
    %c0_10 = arith.constant 0 : index
    %c0_11 = arith.constant 0 : index
    %15 = vector.load %arg6[%c0_10, %c0_11] : memref<1024x8xbf16, #tpu.memory_space<vmem>>, vector<1024x8xbf16>
    tpu.vector_store %arg6[%c0_10, %c0_11], %14 {strides = array<i32>} : memref<1024x8xbf16, #tpu.memory_space<vmem>>, vector<1024x8xbf16>,
    return
  }
  func.func @transform_0(%arg0: i32) -> (i32, i32) {
    %c0_i32 = arith.constant 0 : i32
    %c0_i32_0 = arith.constant 0 : i32
    return %arg0, %c0_i32 : i32, i32
  }
  func.func @transform_1(%arg0: i32) -> (i32, i32) {
    %c0_i32 = arith.constant 0 : i32
    %c0_i32_0 = arith.constant 0 : i32
    %c0_i32_1 = arith.constant 0 : i32
    return %c0_i32, %c0_i32_0 : i32, i32
  }
  func.func @transform_2(%arg0: i32) -> (i32, i32) {
    %c0_i32 = arith.constant 0 : i32
    %c0_i32_0 = arith.constant 0 : i32
    %c0_i32_1 = arith.constant 0 : i32
    return %c0_i32, %c0_i32_0 : i32, i32
  }
  func.func @transform_3(%arg0: i32) -> (i32, i32) {
    %c0_i32 = arith.constant 0 : i32
    %c0_i32_0 = arith.constant 0 : i32
    %c0_i32_1 = arith.constant 0 : i32
    return %c0_i32, %c0_i32_0 : i32, i32
  }
  func.func @transform_4(%arg0: i32) -> (i32, i32) {
    %c0_i32 = arith.constant 0 : i32
    %c0_i32_0 = arith.constant 0 : i32
    %c0_i32_1 = arith.constant 0 : i32
    return %c0_i32, %c0_i32_0 : i32, i32
  }
  func.func @transform_5(%arg0: i32) -> (i32, i32) {
    %c0_i32 = arith.constant 0 : i32
    %c0_i32_0 = arith.constant 0 : i32
    return %arg0, %c0_i32 : i32, i32
  }
}

module attributes {stable_mosaic.version = 11 : i64} {
  func.func @_conv_mm_kernel(%arg0: i32, %arg1: memref<1024x128xbf16, #tpu.memory_space<vmem>>, %arg2: memref<128x8xbf16, #tpu.memory_space<vmem>>, %arg3: memref<1x8xf32, #tpu.memory_space<vmem>>, %arg4: memref<1024x8xbf16, #tpu.memory_space<vmem>>) attributes {dimension_semantics = [#tpu.dimension_semantics<parallel>], iteration_bounds = array<i64: 3>, scalar_prefetch = 0 : i64, scratch_operands = 0 : i64, tpu.core_type = #tpu.core_type<tc>, window_params = [{transform_indices = @transform_0, window_bounds = array<i64: 1024, 128>}, {pipeline_mode = #tpu.pipeline_mode<synchronous>, transform_indices = @transform_1, window_bounds = array<i64: 128, 8>}, {pipeline_mode = #tpu.pipeline_mode<synchronous>, transform_indices = @transform_2, window_bounds = array<i64: 1, 8>}, {transform_indices = @transform_3, window_bounds = array<i64: 1024, 8>}]} {
    %c0 = arith.constant 0 : index
    %c0_0 = arith.constant 0 : index
    %0 = vector.load %arg1[%c0, %c0_0] : memref<1024x128xbf16, #tpu.memory_space<vmem>>, vector<1024x128xbf16>
    %c0_1 = arith.constant 0 : index
    %c0_2 = arith.constant 0 : index
    %1 = vector.load %arg2[%c0_1, %c0_2] : memref<128x8xbf16, #tpu.memory_space<vmem>>, vector<128x8xbf16>
    %cst = arith.constant dense<0.000000e+00> : vector<1024x8xf32>
    %2 = tpu.matmul %0, %1, %cst {dimension_numbers = #tpu.dot_dimension_numbers<[1], [0], [0], [1], [0, 0, 1, 1], [], []>} : vector<1024x128xbf16>, vector<128x8xbf16>, vector<1024x8xf32> -> vector<1024x8xf32>
    %c0_3 = arith.constant 0 : index
    %c0_4 = arith.constant 0 : index
    %3 = vector.load %arg3[%c0_3, %c0_4] : memref<1x8xf32, #tpu.memory_space<vmem>>, vector<1x8xf32>
    %4 = vector.broadcast %3 : vector<1x8xf32> to vector<1024x8xf32>
    %5 = arith.addf %2, %4 : vector<1024x8xf32>
    %cst_5 = arith.constant 0.000000e+00 : f32
    %6 = vector.broadcast %cst_5 : f32 to vector<1024x8xf32>
    %7 = arith.maximumf %5, %6 : vector<1024x8xf32>
    %8 = arith.truncf %7 : vector<1024x8xf32> to vector<1024x8xbf16>
    %c0_6 = arith.constant 0 : index
    %c0_7 = arith.constant 0 : index
    %9 = vector.load %arg4[%c0_6, %c0_7] : memref<1024x8xbf16, #tpu.memory_space<vmem>>, vector<1024x8xbf16>
    tpu.vector_store %arg4[%c0_6, %c0_7], %8 {strides = array<i32>} : memref<1024x8xbf16, #tpu.memory_space<vmem>>, vector<1024x8xbf16>,
    return
  }
  func.func @transform_0(%arg0: i32) -> (i32, i32) {
    %c0_i32 = arith.constant 0 : i32
    %c0_i32_0 = arith.constant 0 : i32
    return %arg0, %c0_i32 : i32, i32
  }
  func.func @transform_1(%arg0: i32) -> (i32, i32) {
    %c0_i32 = arith.constant 0 : i32
    %c0_i32_0 = arith.constant 0 : i32
    %c0_i32_1 = arith.constant 0 : i32
    return %c0_i32, %c0_i32_0 : i32, i32
  }
  func.func @transform_2(%arg0: i32) -> (i32, i32) {
    %c0_i32 = arith.constant 0 : i32
    %c0_i32_0 = arith.constant 0 : i32
    %c0_i32_1 = arith.constant 0 : i32
    return %c0_i32, %c0_i32_0 : i32, i32
  }
  func.func @transform_3(%arg0: i32) -> (i32, i32) {
    %c0_i32 = arith.constant 0 : i32
    %c0_i32_0 = arith.constant 0 : i32
    return %arg0, %c0_i32 : i32, i32
  }
}

module attributes {stable_mosaic.version = 11 : i64} {
  func.func @_conv_mm_kernel(%arg0: i32, %arg1: memref<648x128xbf16, #tpu.memory_space<vmem>>, %arg2: memref<128x8xbf16, #tpu.memory_space<vmem>>, %arg3: memref<1x8xf32, #tpu.memory_space<vmem>>, %arg4: memref<648x8xbf16, #tpu.memory_space<vmem>>) attributes {dimension_semantics = [#tpu.dimension_semantics<parallel>], iteration_bounds = array<i64: 1>, scalar_prefetch = 0 : i64, scratch_operands = 0 : i64, tpu.core_type = #tpu.core_type<tc>, window_params = [{transform_indices = @transform_0, window_bounds = array<i64: 648, 128>}, {pipeline_mode = #tpu.pipeline_mode<synchronous>, transform_indices = @transform_1, window_bounds = array<i64: 128, 8>}, {pipeline_mode = #tpu.pipeline_mode<synchronous>, transform_indices = @transform_2, window_bounds = array<i64: 1, 8>}, {transform_indices = @transform_3, window_bounds = array<i64: 648, 8>}]} {
    %c0 = arith.constant 0 : index
    %c0_0 = arith.constant 0 : index
    %0 = vector.load %arg1[%c0, %c0_0] : memref<648x128xbf16, #tpu.memory_space<vmem>>, vector<648x128xbf16>
    %c0_1 = arith.constant 0 : index
    %c0_2 = arith.constant 0 : index
    %1 = vector.load %arg2[%c0_1, %c0_2] : memref<128x8xbf16, #tpu.memory_space<vmem>>, vector<128x8xbf16>
    %cst = arith.constant dense<0.000000e+00> : vector<648x8xf32>
    %2 = tpu.matmul %0, %1, %cst {dimension_numbers = #tpu.dot_dimension_numbers<[1], [0], [0], [1], [0, 0, 1, 1], [], []>} : vector<648x128xbf16>, vector<128x8xbf16>, vector<648x8xf32> -> vector<648x8xf32>
    %c0_3 = arith.constant 0 : index
    %c0_4 = arith.constant 0 : index
    %3 = vector.load %arg3[%c0_3, %c0_4] : memref<1x8xf32, #tpu.memory_space<vmem>>, vector<1x8xf32>
    %4 = vector.broadcast %3 : vector<1x8xf32> to vector<648x8xf32>
    %5 = arith.addf %2, %4 : vector<648x8xf32>
    %cst_5 = arith.constant 0.000000e+00 : f32
    %6 = vector.broadcast %cst_5 : f32 to vector<648x8xf32>
    %7 = arith.maximumf %5, %6 : vector<648x8xf32>
    %8 = arith.truncf %7 : vector<648x8xf32> to vector<648x8xbf16>
    %c0_6 = arith.constant 0 : index
    %c0_7 = arith.constant 0 : index
    %9 = vector.load %arg4[%c0_6, %c0_7] : memref<648x8xbf16, #tpu.memory_space<vmem>>, vector<648x8xbf16>
    tpu.vector_store %arg4[%c0_6, %c0_7], %8 {strides = array<i32>} : memref<648x8xbf16, #tpu.memory_space<vmem>>, vector<648x8xbf16>,
    return
  }
  func.func @transform_0(%arg0: i32) -> (i32, i32) {
    %c0_i32 = arith.constant 0 : i32
    %c0_i32_0 = arith.constant 0 : i32
    return %arg0, %c0_i32 : i32, i32
  }
  func.func @transform_1(%arg0: i32) -> (i32, i32) {
    %c0_i32 = arith.constant 0 : i32
    %c0_i32_0 = arith.constant 0 : i32
    %c0_i32_1 = arith.constant 0 : i32
    return %c0_i32, %c0_i32_0 : i32, i32
  }
  func.func @transform_2(%arg0: i32) -> (i32, i32) {
    %c0_i32 = arith.constant 0 : i32
    %c0_i32_0 = arith.constant 0 : i32
    %c0_i32_1 = arith.constant 0 : i32
    return %c0_i32, %c0_i32_0 : i32, i32
  }
  func.func @transform_3(%arg0: i32) -> (i32, i32) {
    %c0_i32 = arith.constant 0 : i32
    %c0_i32_0 = arith.constant 0 : i32
    return %arg0, %c0_i32 : i32, i32
  }
}

module attributes {stable_mosaic.version = 11 : i64} {
  func.func @_fc_head_kernel(%arg0: i32, %arg1: memref<2x648xbf16, #tpu.memory_space<vmem>>, %arg2: memref<648x32xbf16, #tpu.memory_space<vmem>>, %arg3: memref<1x32xf32, #tpu.memory_space<vmem>>, %arg4: memref<1x32xf32, #tpu.memory_space<vmem>>, %arg5: memref<1x32xf32, #tpu.memory_space<vmem>>, %arg6: memref<32x32xbf16, #tpu.memory_space<vmem>>, %arg7: memref<1x32xf32, #tpu.memory_space<vmem>>, %arg8: memref<32x32xbf16, #tpu.memory_space<vmem>>, %arg9: memref<1x32xf32, #tpu.memory_space<vmem>>, %arg10: memref<32x3xbf16, #tpu.memory_space<vmem>>, %arg11: memref<1x3xf32, #tpu.memory_space<vmem>>, %arg12: memref<2x3xf32, #tpu.memory_space<vmem>>) attributes {dimension_semantics = [#tpu.dimension_semantics<parallel>], iteration_bounds = array<i64: 1>, scalar_prefetch = 0 : i64, scratch_operands = 0 : i64, tpu.core_type = #tpu.core_type<tc>, window_params = [{transform_indices = @transform_0, window_bounds = array<i64: 2, 648>}, {pipeline_mode = #tpu.pipeline_mode<synchronous>, transform_indices = @transform_1, window_bounds = array<i64: 648, 32>}, {pipeline_mode = #tpu.pipeline_mode<synchronous>, transform_indices = @transform_2, window_bounds = array<i64: 1, 32>}, {pipeline_mode = #tpu.pipeline_mode<synchronous>, transform_indices = @transform_3, window_bounds = array<i64: 1, 32>}, {pipeline_mode = #tpu.pipeline_mode<synchronous>, transform_indices = @transform_4, window_bounds = array<i64: 1, 32>}, {pipeline_mode = #tpu.pipeline_mode<synchronous>, transform_indices = @transform_5, window_bounds = array<i64: 32, 32>}, {pipeline_mode = #tpu.pipeline_mode<synchronous>, transform_indices = @transform_6, window_bounds = array<i64: 1, 32>}, {pipeline_mode = #tpu.pipeline_mode<synchronous>, transform_indices = @transform_7, window_bounds = array<i64: 32, 32>}, {pipeline_mode = #tpu.pipeline_mode<synchronous>, transform_indices = @transform_8, window_bounds = array<i64: 1, 32>}, {pipeline_mode = #tpu.pipeline_mode<synchronous>, transform_indices = @transform_9, window_bounds = array<i64: 32, 3>}, {pipeline_mode = #tpu.pipeline_mode<synchronous>, transform_indices = @transform_10, window_bounds = array<i64: 1, 3>}, {transform_indices = @transform_11, window_bounds = array<i64: 2, 3>}]} {
    %c0 = arith.constant 0 : index
    %c0_0 = arith.constant 0 : index
    %0 = vector.load %arg1[%c0, %c0_0] : memref<2x648xbf16, #tpu.memory_space<vmem>>, vector<2x648xbf16>
    %c0_1 = arith.constant 0 : index
    %c0_2 = arith.constant 0 : index
    %1 = vector.load %arg2[%c0_1, %c0_2] : memref<648x32xbf16, #tpu.memory_space<vmem>>, vector<648x32xbf16>
    %cst = arith.constant dense<0.000000e+00> : vector<2x32xf32>
    %2 = tpu.matmul %0, %1, %cst {dimension_numbers = #tpu.dot_dimension_numbers<[1], [0], [0], [1], [0, 0, 1, 1], [], []>} : vector<2x648xbf16>, vector<648x32xbf16>, vector<2x32xf32> -> vector<2x32xf32>
    %c0_3 = arith.constant 0 : index
    %c0_4 = arith.constant 0 : index
    %3 = vector.load %arg3[%c0_3, %c0_4] : memref<1x32xf32, #tpu.memory_space<vmem>>, vector<1x32xf32>
    %4 = vector.broadcast %3 : vector<1x32xf32> to vector<2x32xf32>
    %5 = arith.addf %2, %4 : vector<2x32xf32>
    %cst_5 = arith.constant 0.000000e+00 : f32
    %6 = vector.broadcast %cst_5 : f32 to vector<2x32xf32>
    %7 = arith.maximumf %5, %6 : vector<2x32xf32>
    %c0_6 = arith.constant 0 : index
    %c0_7 = arith.constant 0 : index
    %8 = vector.load %arg4[%c0_6, %c0_7] : memref<1x32xf32, #tpu.memory_space<vmem>>, vector<1x32xf32>
    %9 = vector.broadcast %8 : vector<1x32xf32> to vector<2x32xf32>
    %10 = arith.mulf %7, %9 : vector<2x32xf32>
    %c0_8 = arith.constant 0 : index
    %c0_9 = arith.constant 0 : index
    %11 = vector.load %arg5[%c0_8, %c0_9] : memref<1x32xf32, #tpu.memory_space<vmem>>, vector<1x32xf32>
    %12 = vector.broadcast %11 : vector<1x32xf32> to vector<2x32xf32>
    %13 = arith.addf %10, %12 : vector<2x32xf32>
    %14 = arith.truncf %13 : vector<2x32xf32> to vector<2x32xbf16>
    %c0_10 = arith.constant 0 : index
    %c0_11 = arith.constant 0 : index
    %15 = vector.load %arg6[%c0_10, %c0_11] : memref<32x32xbf16, #tpu.memory_space<vmem>>, vector<32x32xbf16>
    %cst_12 = arith.constant dense<0.000000e+00> : vector<2x32xf32>
    %16 = tpu.matmul %14, %15, %cst_12 {dimension_numbers = #tpu.dot_dimension_numbers<[1], [0], [0], [1], [0, 0, 1, 1], [], []>} : vector<2x32xbf16>, vector<32x32xbf16>, vector<2x32xf32> -> vector<2x32xf32>
    %c0_13 = arith.constant 0 : index
    %c0_14 = arith.constant 0 : index
    %17 = vector.load %arg7[%c0_13, %c0_14] : memref<1x32xf32, #tpu.memory_space<vmem>>, vector<1x32xf32>
    %18 = vector.broadcast %17 : vector<1x32xf32> to vector<2x32xf32>
    %19 = arith.addf %16, %18 : vector<2x32xf32>
    %cst_15 = arith.constant 0.000000e+00 : f32
    %20 = vector.broadcast %cst_15 : f32 to vector<2x32xf32>
    %21 = arith.maximumf %19, %20 : vector<2x32xf32>
    %22 = arith.truncf %21 : vector<2x32xf32> to vector<2x32xbf16>
    %c0_16 = arith.constant 0 : index
    %c0_17 = arith.constant 0 : index
    %23 = vector.load %arg8[%c0_16, %c0_17] : memref<32x32xbf16, #tpu.memory_space<vmem>>, vector<32x32xbf16>
    %cst_18 = arith.constant dense<0.000000e+00> : vector<2x32xf32>
    %24 = tpu.matmul %22, %23, %cst_18 {dimension_numbers = #tpu.dot_dimension_numbers<[1], [0], [0], [1], [0, 0, 1, 1], [], []>} : vector<2x32xbf16>, vector<32x32xbf16>, vector<2x32xf32> -> vector<2x32xf32>
    %c0_19 = arith.constant 0 : index
    %c0_20 = arith.constant 0 : index
    %25 = vector.load %arg9[%c0_19, %c0_20] : memref<1x32xf32, #tpu.memory_space<vmem>>, vector<1x32xf32>
    %26 = vector.broadcast %25 : vector<1x32xf32> to vector<2x32xf32>
    %27 = arith.addf %24, %26 : vector<2x32xf32>
    %cst_21 = arith.constant 0.000000e+00 : f32
    %28 = vector.broadcast %cst_21 : f32 to vector<2x32xf32>
    %29 = arith.maximumf %27, %28 : vector<2x32xf32>
    %30 = arith.truncf %29 : vector<2x32xf32> to vector<2x32xbf16>
    %c0_22 = arith.constant 0 : index
    %c0_23 = arith.constant 0 : index
    %31 = vector.load %arg10[%c0_22, %c0_23] : memref<32x3xbf16, #tpu.memory_space<vmem>>, vector<32x3xbf16>
    %cst_24 = arith.constant dense<0.000000e+00> : vector<2x3xf32>
    %32 = tpu.matmul %30, %31, %cst_24 {dimension_numbers = #tpu.dot_dimension_numbers<[1], [0], [0], [1], [0, 0, 1, 1], [], []>} : vector<2x32xbf16>, vector<32x3xbf16>, vector<2x3xf32> -> vector<2x3xf32>
    %c0_25 = arith.constant 0 : index
    %c0_26 = arith.constant 0 : index
    %33 = vector.load %arg11[%c0_25, %c0_26] : memref<1x3xf32, #tpu.memory_space<vmem>>, vector<1x3xf32>
    %34 = vector.broadcast %33 : vector<1x3xf32> to vector<2x3xf32>
    %35 = arith.addf %32, %34 : vector<2x3xf32>
    %cst_27 = arith.constant 0.000000e+00 : f32
    %36 = vector.broadcast %cst_27 : f32 to vector<2x3xf32>
    %37 = arith.maximumf %35, %36 : vector<2x3xf32>
    %cst_28 = arith.constant dense<0xFF800000> : vector<2xf32>
    %38 = vector.multi_reduction <maximumf>, %37, %cst_28 [1] : vector<2x3xf32> to vector<2xf32>
    %39 = vector.shape_cast %38 : vector<2xf32> to vector<2x1xf32>
    %40 = vector.broadcast %39 : vector<2x1xf32> to vector<2x3xf32>
    %41 = arith.subf %37, %40 : vector<2x3xf32>
    %42 = math.exp %41 : vector<2x3xf32>
    %cst_29 = arith.constant dense<0.000000e+00> : vector<2xf32>
    %43 = vector.multi_reduction <add>, %42, %cst_29 [1] : vector<2x3xf32> to vector<2xf32>
    %44 = vector.shape_cast %43 : vector<2xf32> to vector<2x1xf32>
    %45 = vector.broadcast %44 : vector<2x1xf32> to vector<2x3xf32>
    %46 = arith.divf %42, %45 : vector<2x3xf32>
    %c0_30 = arith.constant 0 : index
    %c0_31 = arith.constant 0 : index
    %47 = vector.load %arg12[%c0_30, %c0_31] : memref<2x3xf32, #tpu.memory_space<vmem>>, vector<2x3xf32>
    tpu.vector_store %arg12[%c0_30, %c0_31], %46 {strides = array<i32>} : memref<2x3xf32, #tpu.memory_space<vmem>>, vector<2x3xf32>,
    return
  }
  func.func @transform_0(%arg0: i32) -> (i32, i32) {
    %c0_i32 = arith.constant 0 : i32
    %c0_i32_0 = arith.constant 0 : i32
    return %arg0, %c0_i32 : i32, i32
  }
  func.func @transform_1(%arg0: i32) -> (i32, i32) {
    %c0_i32 = arith.constant 0 : i32
    %c0_i32_0 = arith.constant 0 : i32
    %c0_i32_1 = arith.constant 0 : i32
    return %c0_i32, %c0_i32_0 : i32, i32
  }
  func.func @transform_2(%arg0: i32) -> (i32, i32) {
    %c0_i32 = arith.constant 0 : i32
    %c0_i32_0 = arith.constant 0 : i32
    %c0_i32_1 = arith.constant 0 : i32
    return %c0_i32, %c0_i32_0 : i32, i32
  }
  func.func @transform_3(%arg0: i32) -> (i32, i32) {
    %c0_i32 = arith.constant 0 : i32
    %c0_i32_0 = arith.constant 0 : i32
    %c0_i32_1 = arith.constant 0 : i32
    return %c0_i32, %c0_i32_0 : i32, i32
  }
  func.func @transform_4(%arg0: i32) -> (i32, i32) {
    %c0_i32 = arith.constant 0 : i32
    %c0_i32_0 = arith.constant 0 : i32
    %c0_i32_1 = arith.constant 0 : i32
    return %c0_i32, %c0_i32_0 : i32, i32
  }
  func.func @transform_5(%arg0: i32) -> (i32, i32) {
    %c0_i32 = arith.constant 0 : i32
    %c0_i32_0 = arith.constant 0 : i32
    %c0_i32_1 = arith.constant 0 : i32
    return %c0_i32, %c0_i32_0 : i32, i32
  }
  func.func @transform_6(%arg0: i32) -> (i32, i32) {
    %c0_i32 = arith.constant 0 : i32
    %c0_i32_0 = arith.constant 0 : i32
    %c0_i32_1 = arith.constant 0 : i32
    return %c0_i32, %c0_i32_0 : i32, i32
  }
  func.func @transform_7(%arg0: i32) -> (i32, i32) {
    %c0_i32 = arith.constant 0 : i32
    %c0_i32_0 = arith.constant 0 : i32
    %c0_i32_1 = arith.constant 0 : i32
    return %c0_i32, %c0_i32_0 : i32, i32
  }
  func.func @transform_8(%arg0: i32) -> (i32, i32) {
    %c0_i32 = arith.constant 0 : i32
    %c0_i32_0 = arith.constant 0 : i32
    %c0_i32_1 = arith.constant 0 : i32
    return %c0_i32, %c0_i32_0 : i32, i32
  }
  func.func @transform_9(%arg0: i32) -> (i32, i32) {
    %c0_i32 = arith.constant 0 : i32
    %c0_i32_0 = arith.constant 0 : i32
    %c0_i32_1 = arith.constant 0 : i32
    return %c0_i32, %c0_i32_0 : i32, i32
  }
  func.func @transform_10(%arg0: i32) -> (i32, i32) {
    %c0_i32 = arith.constant 0 : i32
    %c0_i32_0 = arith.constant 0 : i32
    %c0_i32_1 = arith.constant 0 : i32
    return %c0_i32, %c0_i32_0 : i32, i32
  }
  func.func @transform_11(%arg0: i32) -> (i32, i32) {
    %c0_i32 = arith.constant 0 : i32
    %c0_i32_0 = arith.constant 0 : i32
    return %arg0, %c0_i32 : i32, i32
  }
}

</mosaic_0001>

<llo_original>
// kernel: forward.4
$region0: #{forward.4}
  #allocation0 [shape = 'u32[]', space=smem, size = 0x4, offset = 0x4, fixed_abs, tag = 'smem constant byte address 0x4 - core index']
  #allocation1 [shape = 'u32[72,128]{1,0:T(1,128)}', space=vmem, size = 0x9000, scoped, tag = 'internal scratch']
  %s0 = inlined_call_operand.vmem [shape: bf16[3042,16], index: 0, kind: input, shape index: {}]
  %s1 = inlined_call_operand.vmem [shape: bf16[16,8], index: 1, kind: input, shape index: {}]
  %s2 = inlined_call_operand.hbm [shape: f32[1,8], index: 2, kind: input, shape index: {}]
  %s3 = inlined_call_operand.vmem [shape: f32[1,8], index: 3, kind: input, shape index: {}]
  %s4 = inlined_call_operand.vmem [shape: f32[1,8], index: 4, kind: input, shape index: {}]
  %s5 = inlined_call_operand.vmem [shape: bf16[3042,8], index: 5, kind: output, shape index: {}]
  %s6 = sld [smem:[#allocation0]]
  $region101: #{forward.4} parent=0
    _
  %s8 = ssub.s32 1, %s6
  %s9 = scalar_select 0, %s8, %s6
  $region1: #{forward.4} parent=0
    #allocation2 [shape = 'u8[512]{0}', space=vmem, size = 0x400, scoped, tag = 'input window, operand 2, single buffered']
    #allocation3 [shape = 's32[2]{0}', space=sflag, size = 0x8, scoped, tag = 'scoped memory for forward.4']
    #allocation4 [shape = 'u8[524288]{0}', space=vmem, size = 0x80000, scoped, tag = 'output window, operand 0']
    %10 = vsyncpa [#allocation3], 0
    loop: start=0, step=1, limit=5
    $region2: #{forward.4} parent=1 // loop_pre_header
      _
    $region3: #{forward.4} parent=1 // loop_header
      %s12 = sphi 0, %s16
      %p13 = scmp.ge.s32.totalorder %s12, 5
      %s22 = sphi 0, %s24
      %s25 = sphi 0, %s22
      %s26 = sphi 0, %s25
      %s42 = sphi 0, %s26
      %s46 = sphi 0, %s46
      %s48 = sphi 0, %s46
      %s49 = sphi 0, %s48
      %s63 = sphi 0, %s49
      %s67 = sphi 0, %s67
      %s69 = sphi 0, %s67
      %s70 = sphi 0, %s69
      %s84 = sphi 0, %s70
      %s88 = sphi 0, %s88
      %s90 = sphi 0, %s88
      %s91 = sphi 0, %s90
      %s105 = sphi 0, %s91
      %s109 = sphi 0, %s109
      %s111 = sphi 0, %s109
      %s112 = sphi 0, %s111
      %s126 = sphi 0, %s112
      %s132 = sphi 0, %s134
      %s135 = sphi 0, %s132
      %s136 = sphi 0, %s135
      %s152 = sphi 0, %s136
    $region4: #{forward.4} parent=1 // loop_header_branch
      %15 = sbr.rel (%p13) target = $region8
    $region5: #{forward.4} parent=1 // loop_body
      %s17 = ssub.s32 %s12, 1
      %s18 = ssub.s32 %s12, 2
      %s19 = sadd.s32 %s12, 1
      %s20 = ssub.s32 %s12, %s19
      %p21 = scmp.eq.s32.totalorder %s20, 0
      %s23 = sadd.s32 %s22, 1
      %s24 = scalar_select %p21, %s22, %s23
      %p27 = pneg %p21
      %p28 = scmp.eq.s32.totalorder %s12, 2
      %p29 = por %p27, %p28
      %p30 = scmp.ne.s32.totalorder %s22, %s25
      %p31 = scmp.eq.s32.totalorder %s12, 0
      %p32 = por %p30, %p31
      %p33 = scmp.ne.s32.totalorder %s22, %s25
      %p34 = scmp.eq.s32.totalorder %s17, 2
      %p35 = por %p33, %p34
      %p36 = scmp.ne.s32.totalorder %s25, %s26
      %p37 = scmp.eq.s32.totalorder %s17, 0
      %p38 = por %p36, %p37
      %p39 = scmp.ne.s32.totalorder %s25, %s26
      %p40 = scmp.eq.s32.totalorder %s18, 2
      %p41 = por %p39, %p40
      %p43 = scmp.ne.s32.totalorder %s26, %s42
      %p44 = scmp.eq.s32.totalorder %s18, 0
      %p45 = por %p43, %p44
      %s47 = sadd.s32 %s46, 1
      %p50 = scmp.eq.s32.totalorder %s12, 2
      %p51 = scmp.ne.s32.totalorder %s46, %s48
      %p52 = scmp.eq.s32.totalorder %s12, 0
      %p53 = por %p51, %p52
      %p54 = scmp.ne.s32.totalorder %s46, %s48
      %p55 = scmp.eq.s32.totalorder %s17, 2
      %p56 = por %p54, %p55
      %p57 = scmp.ne.s32.totalorder %s48, %s49
      %p58 = scmp.eq.s32.totalorder %s17, 0
      %p59 = por %p57, %p58
      %p60 = scmp.ne.s32.totalorder %s48, %s49
      %p61 = scmp.eq.s32.totalorder %s18, 2
      %p62 = por %p60, %p61
      %p64 = scmp.ne.s32.totalorder %s49, %s63
      %p65 = scmp.eq.s32.totalorder %s18, 0
      %p66 = por %p64, %p65
      %s68 = sadd.s32 %s67, 1
      %p71 = scmp.eq.s32.totalorder %s12, 2
      %p72 = scmp.ne.s32.totalorder %s67, %s69
      %p73 = scmp.eq.s32.totalorder %s12, 0
      %p74 = por %p72, %p73
      %p75 = scmp.ne.s32.totalorder %s67, %s69
      %p76 = scmp.eq.s32.totalorder %s17, 2
      %p77 = por %p75, %p76
      %p78 = scmp.ne.s32.totalorder %s69, %s70
      %p79 = scmp.eq.s32.totalorder %s17, 0
      %p80 = por %p78, %p79
      %p81 = scmp.ne.s32.totalorder %s69, %s70
      %p82 = scmp.eq.s32.totalorder %s18, 2
      %p83 = por %p81, %p82
      %p85 = scmp.ne.s32.totalorder %s70, %s84
      %p86 = scmp.eq.s32.totalorder %s18, 0
      %p87 = por %p85, %p86
      %s89 = sadd.s32 %s88, 1
      %p92 = scmp.eq.s32.totalorder %s12, 2
      %p93 = scmp.ne.s32.totalorder %s88, %s90
      %p94 = scmp.eq.s32.totalorder %s12, 0
      %p95 = por %p93, %p94
      %p96 = scmp.ne.s32.totalorder %s88, %s90
      %p97 = scmp.eq.s32.totalorder %s17, 2
      %p98 = por %p96, %p97
      %p99 = scmp.ne.s32.totalorder %s90, %s91
      %p100 = scmp.eq.s32.totalorder %s17, 0
      %p101 = por %p99, %p100
      %p102 = scmp.ne.s32.totalorder %s90, %s91
      %p103 = scmp.eq.s32.totalorder %s18, 2
      %p104 = por %p102, %p103
      %p106 = scmp.ne.s32.totalorder %s91, %s105
      %p107 = scmp.eq.s32.totalorder %s18, 0
      %p108 = por %p106, %p107
      %s110 = sadd.s32 %s109, 1
      %p113 = scmp.eq.s32.totalorder %s12, 2
      %p114 = scmp.ne.s32.totalorder %s109, %s111
      %p115 = scmp.eq.s32.totalorder %s12, 0
      %p116 = por %p114, %p115
      %p117 = scmp.ne.s32.totalorder %s109, %s111
      %p118 = scmp.eq.s32.totalorder %s17, 2
      %p119 = por %p117, %p118
      %p120 = scmp.ne.s32.totalorder %s111, %s112
      %p121 = scmp.eq.s32.totalorder %s17, 0
      %p122 = por %p120, %p121
      %p123 = scmp.ne.s32.totalorder %s111, %s112
      %p124 = scmp.eq.s32.totalorder %s18, 2
      %p125 = por %p123, %p124
      %p127 = scmp.ne.s32.totalorder %s112, %s126
      %p128 = scmp.eq.s32.totalorder %s18, 0
      %p129 = por %p127, %p128
      %s130 = ssub.s32 %s12, %s19
      %p131 = scmp.eq.s32.totalorder %s130, 0
      %s133 = sadd.s32 %s132, 1
      %s134 = scalar_select %p131, %s132, %s133
      %p137 = pneg %p131
      %p138 = scmp.eq.s32.totalorder %s12, 2
      %p139 = por %p137, %p138
      %p140 = scmp.ne.s32.totalorder %s132, %s135
      %p141 = scmp.eq.s32.totalorder %s12, 0
      %p142 = por %p140, %p141
      %p143 = scmp.ne.s32.totalorder %s132, %s135
      %p144 = scmp.eq.s32.totalorder %s17, 2
      %p145 = por %p143, %p144
      %p146 = scmp.ne.s32.totalorder %s135, %s136
      %p147 = scmp.eq.s32.totalorder %s17, 0
      %p148 = por %p146, %p147
      %p149 = scmp.ne.s32.totalorder %s135, %s136
      %p150 = scmp.eq.s32.totalorder %s18, 2
      %p151 = por %p149, %p150
      %p153 = scmp.ne.s32.totalorder %s136, %s152
      %p154 = scmp.eq.s32.totalorder %s18, 0
      %p155 = por %p153, %p154
      %p156 = scmp.le.s32.totalorder 1, %s12
      %p157 = scmp.lt.s32.totalorder %s12, 4
      %p158 = pnand %p156, %p157
      %p159 = pneg %p158
      // Predicated region
      $region9: #{forward.4} parent=5 // pred_check
        _
      $region10: #{forward.4} parent=5 // pred_check_branch
        %161 = sbr.rel (%p158) target = $region12
      $region11: #{forward.4} parent=5 // pred_region
        %s162 = ssub.s32 %s12, 1
        // Predicated region
        $region13: #{forward.4} parent=11 // pred_check
          %p163 = pneg %p59
        $region14: #{forward.4} parent=11 // pred_check_branch
          %165 = sbr.rel (%p163) target = $region16
        $region15: #{forward.4} parent=11 // pred_region
          _
        $region16: #{forward.4} parent=11 // pred_fallthru
          _
        // Predicated region
        $region17: #{forward.4} parent=11 // pred_check
          %p166 = pneg %p80
        $region18: #{forward.4} parent=11 // pred_check_branch
          %168 = sbr.rel (%p166) target = $region20
        $region19: #{forward.4} parent=11 // pred_region
          %170 = vsyncadd [#allocation3], 0
          %s172 = sshll.u32 %s2, 4
          %s173 = int_to_ptr.hbm [resolvable:$true] %s172
          %s174 = sshll.u32 [#allocation2], 4
          %s175 = int_to_ptr.vmem [resolvable:$true] %s174
          %177 = dma.hbm_to_vmem [thread:$0]  %s173, 16, %s175, [#allocation3]
        $region20: #{forward.4} parent=11 // pred_fallthru
          _
        // Predicated region
        $region21: #{forward.4} parent=11 // pred_check
          %p178 = pneg %p101
        $region22: #{forward.4} parent=11 // pred_check_branch
          %180 = sbr.rel (%p178) target = $region24
        $region23: #{forward.4} parent=11 // pred_region
          _
        $region24: #{forward.4} parent=11 // pred_fallthru
          _
        // Predicated region
        $region25: #{forward.4} parent=11 // pred_check
          %p181 = pneg %p122
        $region26: #{forward.4} parent=11 // pred_check_branch
          %183 = sbr.rel (%p181) target = $region28
        $region27: #{forward.4} parent=11 // pred_region
          _
        $region28: #{forward.4} parent=11 // pred_fallthru
          _
      $region12: #{forward.4} parent=5 // pred_fallthru
        _
      %p184 = scmp.lt.s32.totalorder %s12, 3
      // Predicated region
      $region29: #{forward.4} parent=5 // pred_check
        %p185 = pneg %p184
      $region30: #{forward.4} parent=5 // pred_check_branch
        %187 = sbr.rel (%p185) target = $region32
      $region31: #{forward.4} parent=5 // pred_region
        // Predicated region
        $region33: #{forward.4} parent=31 // pred_check
          %p188 = pneg %p32
        $region34: #{forward.4} parent=31 // pred_check_branch
          %190 = sbr.rel (%p188) target = $region36
        $region35: #{forward.4} parent=31 // pred_region
          %s191 = smul.u32 128, %s12
          %s192 = ssub.s32 381, %s191
          %p193 = scmp.lt.s32.totalorder %s192, 128
          %s194 = scalar_select %p193, %s192, 128
          %s195 = smul.u32 4, %s194
          %p196 = scmp.lt.s32.totalorder %s191, 380
          %s197 = scalar_select %p196, %s191, 380
          %s198 = smul.addr %s197, 4
          %s199 = scalar_lea.vmem %s0, %s198
          %s200 = smul.u32 128, %s12
          %s201 = ssub.s32 381, %s200
          %p202 = scmp.lt.s32.totalorder %s201, 128
          %s203 = scalar_select %p202, %s201, 128
          %s204 = smul.u32 4, %s203
        $region36: #{forward.4} parent=31 // pred_fallthru
          _
      $region32: #{forward.4} parent=5 // pred_fallthru
        _
      %p205 = scmp.le.s32.totalorder 1, %s12
      %p206 = scmp.lt.s32.totalorder %s12, 4
      %p207 = pnand %p205, %p206
      %p208 = pneg %p207
      // Predicated region
      $region37: #{forward.4} parent=5 // pred_check
        _
      $region38: #{forward.4} parent=5 // pred_check_branch
        %210 = sbr.rel (%p207) target = $region40
      $region39: #{forward.4} parent=5 // pred_region
        %s211 = ssub.s32 %s12, 1
        // Predicated region
        $region41: #{forward.4} parent=39 // pred_check
          %p212 = pneg %p80
        $region42: #{forward.4} parent=39 // pred_check_branch
          %214 = sbr.rel (%p212) target = $region44
        $region43: #{forward.4} parent=39 // pred_region
          %216 = dma.done [#allocation3], 16
        $region44: #{forward.4} parent=39 // pred_fallthru
          _
        %s217 = smul.u32 128, %s17
        %s218 = ssub.s32 381, %s217
        %p219 = scmp.lt.s32.totalorder %s218, 128
        %s220 = scalar_select %p219, %s218, 128
        %s221 = smul.u32 4, %s220
        %p222 = scmp.lt.s32.totalorder %s217, 380
        %s223 = scalar_select %p222, %s217, 380
        %s224 = smul.addr %s223, 4
        %s225 = scalar_lea.vmem %s0, %s224
        %p226 = pneg %p38
        %p227 = pneg %p35
        %p228 = pneg %p59
        %p229 = pneg %p56
        %p230 = pneg %p80
        %p231 = pneg %p77
        %p232 = pneg %p101
        %p233 = pneg %p98
        %p234 = pneg %p122
        %p235 = pneg %p119
        %p236 = pneg %p148
        %p237 = pneg %p145
        %s238 = sand.u32 %s135, 1
        %s239 = sand.u32 %s135, 1
        %s240 = smul.addr %s239, 512
        %s241 = scalar_lea.vmem [#allocation4], %s240
        %s242 = smul.u32 128, %s17
        %s243 = ssub.s32 381, %s242
        %p244 = scmp.lt.s32.totalorder %s243, 128
        %s245 = scalar_select %p244, %s243, 128
        %s246 = smul.u32 4, %s245
        %p247 = scmp.lt.s32.totalorder %s242, 380
        %s248 = scalar_select %p247, %s242, 380
        %s249 = smul.addr %s248, 4
        %s250 = scalar_lea.vmem %s0, %s249
        %s251 = smul.u32 128, %s17
        %s252 = ssub.s32 381, %s251
        %p253 = scmp.lt.s32.totalorder %s252, 128
        %s254 = scalar_select %p253, %s252, 128
        %s255 = smul.u32 4, %s254
        %s256 = smul.u32 128, %s17
        %s257 = ssub.s32 381, %s256
        %p258 = scmp.lt.s32.totalorder %s257, 128
        %s259 = scalar_select %p258, %s257, 128
        %s260 = smul.u32 4, %s259
        %v262 = vld [vmem:[%s250] sm:$0xf]
        %v263 = vld [vmem:[%s250 + $0x4] sm:$0xf]
        %v264 = vld [vmem:[%s250 + $0x8] sm:$0xf]
        %v265 = vld [vmem:[%s250 + $0xc] sm:$0xf]
        %v266 = vld [vmem:[%s250 + $0x10] sm:$0xf]
        %v267 = vld [vmem:[%s250 + $0x14] sm:$0xf]
        %v268 = vld [vmem:[%s250 + $0x18] sm:$0xf]
        %v269 = vld [vmem:[%s250 + $0x1c] sm:$0xf]
        %v270 = vld [vmem:[%s250 + $0x20] sm:$0xf]
        %v271 = vld [vmem:[%s250 + $0x24] sm:$0xf]
        %v272 = vld [vmem:[%s250 + $0x28] sm:$0xf]
        %v273 = vld [vmem:[%s250 + $0x2c] sm:$0xf]
        %v274 = vld [vmem:[%s250 + $0x30] sm:$0xf]
        %v275 = vld [vmem:[%s250 + $0x34] sm:$0xf]
        %v276 = vld [vmem:[%s250 + $0x38] sm:$0xf]
        %v277 = vld [vmem:[%s250 + $0x3c] sm:$0xf]
        %v278 = vld [vmem:[%s250 + $0x40] sm:$0xf]
        %v279 = vld [vmem:[%s250 + $0x44] sm:$0xf]
        %v280 = vld [vmem:[%s250 + $0x48] sm:$0xf]
        %v281 = vld [vmem:[%s250 + $0x4c] sm:$0xf]
        %v282 = vld [vmem:[%s250 + $0x50] sm:$0xf]
        %v283 = vld [vmem:[%s250 + $0x54] sm:$0xf]
        %v284 = vld [vmem:[%s250 + $0x58] sm:$0xf]
        %v285 = vld [vmem:[%s250 + $0x5c] sm:$0xf]
        %v286 = vld [vmem:[%s250 + $0x60] sm:$0xf]
        %v287 = vld [vmem:[%s250 + $0x64] sm:$0xf]
        %v288 = vld [vmem:[%s250 + $0x68] sm:$0xf]
        %v289 = vld [vmem:[%s250 + $0x6c] sm:$0xf]
        %v290 = vld [vmem:[%s250 + $0x70] sm:$0xf]
        %v291 = vld [vmem:[%s250 + $0x74] sm:$0xf]
        %v292 = vld [vmem:[%s250 + $0x78] sm:$0xf]
        %v293 = vld [vmem:[%s250 + $0x7c] sm:$0xf]
        %v294 = vld [vmem:[%s250 + $0x80] sm:$0xf]
        %v295 = vld [vmem:[%s250 + $0x84] sm:$0xf]
        %v296 = vld [vmem:[%s250 + $0x88] sm:$0xf]
        %v297 = vld [vmem:[%s250 + $0x8c] sm:$0xf]
        %v298 = vld [vmem:[%s250 + $0x90] sm:$0xf]
        %v299 = vld [vmem:[%s250 + $0x94] sm:$0xf]
        %v300 = vld [vmem:[%s250 + $0x98] sm:$0xf]
        %v301 = vld [vmem:[%s250 + $0x9c] sm:$0xf]
        %v302 = vld [vmem:[%s250 + $0xa0] sm:$0xf]
        %v303 = vld [vmem:[%s250 + $0xa4] sm:$0xf]
        %v304 = vld [vmem:[%s250 + $0xa8] sm:$0xf]
        %v305 = vld [vmem:[%s250 + $0xac] sm:$0xf]
        %v306 = vld [vmem:[%s250 + $0xb0] sm:$0xf]
        %v307 = vld [vmem:[%s250 + $0xb4] sm:$0xf]
        %v308 = vld [vmem:[%s250 + $0xb8] sm:$0xf]
        %v309 = vld [vmem:[%s250 + $0xbc] sm:$0xf]
        %v310 = vld [vmem:[%s250 + $0xc0] sm:$0xf]
        %v311 = vld [vmem:[%s250 + $0xc4] sm:$0xf]
        %v312 = vld [vmem:[%s250 + $0xc8] sm:$0xf]
        %v313 = vld [vmem:[%s250 + $0xcc] sm:$0xf]
        %v314 = vld [vmem:[%s250 + $0xd0] sm:$0xf]
        %v315 = vld [vmem:[%s250 + $0xd4] sm:$0xf]
        %v316 = vld [vmem:[%s250 + $0xd8] sm:$0xf]
        %v317 = vld [vmem:[%s250 + $0xdc] sm:$0xf]
        %v318 = vld [vmem:[%s250 + $0xe0] sm:$0xf]
        %v319 = vld [vmem:[%s250 + $0xe4] sm:$0xf]
        %v320 = vld [vmem:[%s250 + $0xe8] sm:$0xf]
        %v321 = vld [vmem:[%s250 + $0xec] sm:$0xf]
        %v322 = vld [vmem:[%s250 + $0xf0] sm:$0xf]
        %v323 = vld [vmem:[%s250 + $0xf4] sm:$0xf]
        %v324 = vld [vmem:[%s250 + $0xf8] sm:$0xf]
        %v325 = vld [vmem:[%s250 + $0xfc] sm:$0xf]
        %v326 = vld [vmem:[%s250 + $0x100] sm:$0xf]
        %v327 = vld [vmem:[%s250 + $0x104] sm:$0xf]
        %v328 = vld [vmem:[%s250 + $0x108] sm:$0xf]
        %v329 = vld [vmem:[%s250 + $0x10c] sm:$0xf]
        %v330 = vld [vmem:[%s250 + $0x110] sm:$0xf]
        %v331 = vld [vmem:[%s250 + $0x114] sm:$0xf]
        %v332 = vld [vmem:[%s250 + $0x118] sm:$0xf]
        %v333 = vld [vmem:[%s250 + $0x11c] sm:$0xf]
        %v334 = vld [vmem:[%s250 + $0x120] sm:$0xf]
        %v335 = vld [vmem:[%s250 + $0x124] sm:$0xf]
        %v336 = vld [vmem:[%s250 + $0x128] sm:$0xf]
        %v337 = vld [vmem:[%s250 + $0x12c] sm:$0xf]
        %v338 = vld [vmem:[%s250 + $0x130] sm:$0xf]
        %v339 = vld [vmem:[%s250 + $0x134] sm:$0xf]
        %v340 = vld [vmem:[%s250 + $0x138] sm:$0xf]
        %v341 = vld [vmem:[%s250 + $0x13c] sm:$0xf]
        %v342 = vld [vmem:[%s250 + $0x140] sm:$0xf]
        %v343 = vld [vmem:[%s250 + $0x144] sm:$0xf]
        %v344 = vld [vmem:[%s250 + $0x148] sm:$0xf]
        %v345 = vld [vmem:[%s250 + $0x14c] sm:$0xf]
        %v346 = vld [vmem:[%s250 + $0x150] sm:$0xf]
        %v347 = vld [vmem:[%s250 + $0x154] sm:$0xf]
        %v348 = vld [vmem:[%s250 + $0x158] sm:$0xf]
        %v349 = vld [vmem:[%s250 + $0x15c] sm:$0xf]
        %v350 = vld [vmem:[%s250 + $0x160] sm:$0xf]
        %v351 = vld [vmem:[%s250 + $0x164] sm:$0xf]
        %v352 = vld [vmem:[%s250 + $0x168] sm:$0xf]
        %v353 = vld [vmem:[%s250 + $0x16c] sm:$0xf]
        %v354 = vld [vmem:[%s250 + $0x170] sm:$0xf]
        %v355 = vld [vmem:[%s250 + $0x174] sm:$0xf]
        %v356 = vld [vmem:[%s250 + $0x178] sm:$0xf]
        %v357 = vld [vmem:[%s250 + $0x17c] sm:$0xf]
        %v358 = vld [vmem:[%s250 + $0x180] sm:$0xf]
        %v359 = vld [vmem:[%s250 + $0x184] sm:$0xf]
        %v360 = vld [vmem:[%s250 + $0x188] sm:$0xf]
        %v361 = vld [vmem:[%s250 + $0x18c] sm:$0xf]
        %v362 = vld [vmem:[%s250 + $0x190] sm:$0xf]
        %v363 = vld [vmem:[%s250 + $0x194] sm:$0xf]
        %v364 = vld [vmem:[%s250 + $0x198] sm:$0xf]
        %v365 = vld [vmem:[%s250 + $0x19c] sm:$0xf]
        %v366 = vld [vmem:[%s250 + $0x1a0] sm:$0xf]
        %v367 = vld [vmem:[%s250 + $0x1a4] sm:$0xf]
        %v368 = vld [vmem:[%s250 + $0x1a8] sm:$0xf]
        %v369 = vld [vmem:[%s250 + $0x1ac] sm:$0xf]
        %v370 = vld [vmem:[%s250 + $0x1b0] sm:$0xf]
        %v371 = vld [vmem:[%s250 + $0x1b4] sm:$0xf]
        %v372 = vld [vmem:[%s250 + $0x1b8] sm:$0xf]
        %v373 = vld [vmem:[%s250 + $0x1bc] sm:$0xf]
        %v374 = vld [vmem:[%s250 + $0x1c0] sm:$0xf]
        %v375 = vld [vmem:[%s250 + $0x1c4] sm:$0xf]
        %v376 = vld [vmem:[%s250 + $0x1c8] sm:$0xf]
        %v377 = vld [vmem:[%s250 + $0x1cc] sm:$0xf]
        %v378 = vld [vmem:[%s250 + $0x1d0] sm:$0xf]
        %v379 = vld [vmem:[%s250 + $0x1d4] sm:$0xf]
        %v380 = vld [vmem:[%s250 + $0x1d8] sm:$0xf]
        %v381 = vld [vmem:[%s250 + $0x1dc] sm:$0xf]
        %v382 = vld [vmem:[%s250 + $0x1e0] sm:$0xf]
        %v383 = vld [vmem:[%s250 + $0x1e4] sm:$0xf]
        %v384 = vld [vmem:[%s250 + $0x1e8] sm:$0xf]
        %v385 = vld [vmem:[%s250 + $0x1ec] sm:$0xf]
        %v386 = vld [vmem:[%s250 + $0x1f0] sm:$0xf]
        %v387 = vld [vmem:[%s250 + $0x1f4] sm:$0xf]
        %v388 = vld [vmem:[%s250 + $0x1f8] sm:$0xf]
        %v389 = vld [vmem:[%s250 + $0x1fc] sm:$0xf]
        %v390 = vld [vmem:[%s1] sm:$0xf]
        %v391 = vld [vmem:[%s1 + $0x4] sm:$0xf]
        %v392 = vld [vmem:[#allocation2] sm:$0x1]
        %v394 = vperm.slane %v392, 0
        %v524 = vunpack.c.l.b16 %v262
        %v525 = vunpack.c.l.b16 %v263
        %v526 = vunpack.c.l.b16 %v264
        %v527 = vunpack.c.l.b16 %v265
        %v528 = vunpack.c.l.b16 %v266
        %v529 = vunpack.c.l.b16 %v267
        %v530 = vunpack.c.l.b16 %v268
        %v531 = vunpack.c.l.b16 %v269
        %v532 = vunpack.c.l.b16 %v270
        %v533 = vunpack.c.l.b16 %v271
        %v534 = vunpack.c.l.b16 %v272
        %v535 = vunpack.c.l.b16 %v273
        %v536 = vunpack.c.l.b16 %v274
        %v537 = vunpack.c.l.b16 %v275
        %v538 = vunpack.c.l.b16 %v276
        %v539 = vunpack.c.l.b16 %v277
        %v540 = vunpack.c.l.b16 %v278
        %v541 = vunpack.c.l.b16 %v279
        %v542 = vunpack.c.l.b16 %v280
        %v543 = vunpack.c.l.b16 %v281
        %v544 = vunpack.c.l.b16 %v282
        %v545 = vunpack.c.l.b16 %v283
        %v546 = vunpack.c.l.b16 %v284
        %v547 = vunpack.c.l.b16 %v285
        %v548 = vunpack.c.l.b16 %v286
        %v549 = vunpack.c.l.b16 %v287
        %v550 = vunpack.c.l.b16 %v288
        %v551 = vunpack.c.l.b16 %v289
        %v552 = vunpack.c.l.b16 %v290
        %v553 = vunpack.c.l.b16 %v291
        %v554 = vunpack.c.l.b16 %v292
        %v555 = vunpack.c.l.b16 %v293
        %v556 = vunpack.c.l.b16 %v294
        %v557 = vunpack.c.l.b16 %v295
        %v558 = vunpack.c.l.b16 %v296
        %v559 = vunpack.c.l.b16 %v297
        %v560 = vunpack.c.l.b16 %v298
        %v561 = vunpack.c.l.b16 %v299
        %v562 = vunpack.c.l.b16 %v300
        %v563 = vunpack.c.l.b16 %v301
        %v564 = vunpack.c.l.b16 %v302
        %v565 = vunpack.c.l.b16 %v303
        %v566 = vunpack.c.l.b16 %v304
        %v567 = vunpack.c.l.b16 %v305
        %v568 = vunpack.c.l.b16 %v306
        %v569 = vunpack.c.l.b16 %v307
        %v570 = vunpack.c.l.b16 %v308
        %v571 = vunpack.c.l.b16 %v309
        %v572 = vunpack.c.l.b16 %v310
        %v573 = vunpack.c.l.b16 %v311
        %v574 = vunpack.c.l.b16 %v312
        %v575 = vunpack.c.l.b16 %v313
        %v576 = vunpack.c.l.b16 %v314
        %v577 = vunpack.c.l.b16 %v315
        %v578 = vunpack.c.l.b16 %v316
        %v579 = vunpack.c.l.b16 %v317
        %v580 = vunpack.c.l.b16 %v318
        %v581 = vunpack.c.l.b16 %v319
        %v582 = vunpack.c.l.b16 %v320
        %v583 = vunpack.c.l.b16 %v321
        %v584 = vunpack.c.l.b16 %v322
        %v585 = vunpack.c.l.b16 %v323
        %v586 = vunpack.c.l.b16 %v324
        %v587 = vunpack.c.l.b16 %v325
        %v588 = vunpack.c.l.b16 %v326
        %v589 = vunpack.c.l.b16 %v327
        %v590 = vunpack.c.l.b16 %v328
        %v591 = vunpack.c.l.b16 %v329
        %v592 = vunpack.c.l.b16 %v330
        %v593 = vunpack.c.l.b16 %v331
        %v594 = vunpack.c.l.b16 %v332
        %v595 = vunpack.c.l.b16 %v333
        %v596 = vunpack.c.l.b16 %v334
        %v597 = vunpack.c.l.b16 %v335
        %v598 = vunpack.c.l.b16 %v336
        %v599 = vunpack.c.l.b16 %v337
        %v600 = vunpack.c.l.b16 %v338
        %v601 = vunpack.c.l.b16 %v339
        %v602 = vunpack.c.l.b16 %v340
        %v603 = vunpack.c.l.b16 %v341
        %v604 = vunpack.c.l.b16 %v342
        %v605 = vunpack.c.l.b16 %v343
        %v606 = vunpack.c.l.b16 %v344
        %v607 = vunpack.c.l.b16 %v345
        %v608 = vunpack.c.l.b16 %v346
        %v609 = vunpack.c.l.b16 %v347
        %v610 = vunpack.c.l.b16 %v348
        %v611 = vunpack.c.l.b16 %v349
        %v612 = vunpack.c.l.b16 %v350
        %v613 = vunpack.c.l.b16 %v351
        %v614 = vunpack.c.l.b16 %v352
        %v615 = vunpack.c.l.b16 %v353
        %v616 = vunpack.c.l.b16 %v354
        %v617 = vunpack.c.l.b16 %v355
        %v618 = vunpack.c.l.b16 %v356
        %v619 = vunpack.c.l.b16 %v357
        %v620 = vunpack.c.l.b16 %v358
        %v621 = vunpack.c.l.b16 %v359
        %v622 = vunpack.c.l.b16 %v360
        %v623 = vunpack.c.l.b16 %v361
        %v624 = vunpack.c.l.b16 %v362
        %v625 = vunpack.c.l.b16 %v363
        %v626 = vunpack.c.l.b16 %v364
        %v627 = vunpack.c.l.b16 %v365
        %v628 = vunpack.c.l.b16 %v366
        %v629 = vunpack.c.l.b16 %v367
        %v630 = vunpack.c.l.b16 %v368
        %v631 = vunpack.c.l.b16 %v369
        %v632 = vunpack.c.l.b16 %v370
        %v633 = vunpack.c.l.b16 %v371
        %v634 = vunpack.c.l.b16 %v372
        %v635 = vunpack.c.l.b16 %v373
        %v636 = vunpack.c.l.b16 %v374
        %v637 = vunpack.c.l.b16 %v375
        %v638 = vunpack.c.l.b16 %v376
        %v639 = vunpack.c.l.b16 %v377
        %v640 = vunpack.c.l.b16 %v378
        %v641 = vunpack.c.l.b16 %v379
        %v642 = vunpack.c.l.b16 %v380
        %v643 = vunpack.c.l.b16 %v381
        %v644 = vunpack.c.l.b16 %v382
        %v645 = vunpack.c.l.b16 %v383
        %v646 = vunpack.c.l.b16 %v384
        %v647 = vunpack.c.l.b16 %v385
        %v648 = vunpack.c.l.b16 %v386
        %v649 = vunpack.c.l.b16 %v387
        %v650 = vunpack.c.l.b16 %v388
        %v651 = vunpack.c.l.b16 %v389
        %v652 = vpack.c.b16 %v525, %v524
        %v653 = vpack.c.b16 %v527, %v526
        %v654 = vpack.c.b16 %v529, %v528
        %v655 = vpack.c.b16 %v531, %v530
        %v656 = vpack.c.b16 %v533, %v532
        %v657 = vpack.c.b16 %v535, %v534
        %v658 = vpack.c.b16 %v537, %v536
        %v659 = vpack.c.b16 %v539, %v538
        %v660 = vpack.c.b16 %v541, %v540
        %v661 = vpack.c.b16 %v543, %v542
        %v662 = vpack.c.b16 %v545, %v544
        %v663 = vpack.c.b16 %v547, %v546
        %v664 = vpack.c.b16 %v549, %v548
        %v665 = vpack.c.b16 %v551, %v550
        %v666 = vpack.c.b16 %v553, %v552
        %v667 = vpack.c.b16 %v555, %v554
        %v668 = vpack.c.b16 %v557, %v556
        %v669 = vpack.c.b16 %v559, %v558
        %v670 = vpack.c.b16 %v561, %v560
        %v671 = vpack.c.b16 %v563, %v562
        %v672 = vpack.c.b16 %v565, %v564
        %v673 = vpack.c.b16 %v567, %v566
        %v674 = vpack.c.b16 %v569, %v568
        %v675 = vpack.c.b16 %v571, %v570
        %v676 = vpack.c.b16 %v573, %v572
        %v677 = vpack.c.b16 %v575, %v574
        %v678 = vpack.c.b16 %v577, %v576
        %v679 = vpack.c.b16 %v579, %v578
        %v680 = vpack.c.b16 %v581, %v580
        %v681 = vpack.c.b16 %v583, %v582
        %v682 = vpack.c.b16 %v585, %v584
        %v683 = vpack.c.b16 %v587, %v586
        %v684 = vpack.c.b16 %v589, %v588
        %v685 = vpack.c.b16 %v591, %v590
        %v686 = vpack.c.b16 %v593, %v592
        %v687 = vpack.c.b16 %v595, %v594
        %v688 = vpack.c.b16 %v597, %v596
        %v689 = vpack.c.b16 %v599, %v598
        %v690 = vpack.c.b16 %v601, %v600
        %v691 = vpack.c.b16 %v603, %v602
        %v692 = vpack.c.b16 %v605, %v604
        %v693 = vpack.c.b16 %v607, %v606
        %v694 = vpack.c.b16 %v609, %v608
        %v695 = vpack.c.b16 %v611, %v610
        %v696 = vpack.c.b16 %v613, %v612
        %v697 = vpack.c.b16 %v615, %v614
        %v698 = vpack.c.b16 %v617, %v616
        %v699 = vpack.c.b16 %v619, %v618
        %v700 = vpack.c.b16 %v621, %v620
        %v701 = vpack.c.b16 %v623, %v622
        %v702 = vpack.c.b16 %v625, %v624
        %v703 = vpack.c.b16 %v627, %v626
        %v704 = vpack.c.b16 %v629, %v628
        %v705 = vpack.c.b16 %v631, %v630
        %v706 = vpack.c.b16 %v633, %v632
        %v707 = vpack.c.b16 %v635, %v634
        %v708 = vpack.c.b16 %v637, %v636
        %v709 = vpack.c.b16 %v639, %v638
        %v710 = vpack.c.b16 %v641, %v640
        %v711 = vpack.c.b16 %v643, %v642
        %v712 = vpack.c.b16 %v645, %v644
        %v713 = vpack.c.b16 %v647, %v646
        %v714 = vpack.c.b16 %v649, %v648
        %v715 = vpack.c.b16 %v651, %v650
        %v718 = vunpack.c.l.b16 %v390
        %v719 = vunpack.c.l.b16 %v391
        %v720 = vpack.c.b16 %v719, %v718
        %vm722 = vcmask 130048
        %v724 = vsel %vm722, %v652, 0
        %v727 = vsel %vm722, %v653, 0
        %v730 = vsel %vm722, %v654, 0
        %v733 = vsel %vm722, %v655, 0
        %v736 = vsel %vm722, %v656, 0
        %v739 = vsel %vm722, %v657, 0
        %v742 = vsel %vm722, %v658, 0
        %v745 = vsel %vm722, %v659, 0
        %v748 = vsel %vm722, %v660, 0
        %v751 = vsel %vm722, %v661, 0
        %v754 = vsel %vm722, %v662, 0
        %v757 = vsel %vm722, %v663, 0
        %v760 = vsel %vm722, %v664, 0
        %v763 = vsel %vm722, %v665, 0
        %v766 = vsel %vm722, %v666, 0
        %v769 = vsel %vm722, %v667, 0
        %v772 = vsel %vm722, %v668, 0
        %v775 = vsel %vm722, %v669, 0
        %v778 = vsel %vm722, %v670, 0
        %v781 = vsel %vm722, %v671, 0
        %v784 = vsel %vm722, %v672, 0
        %v787 = vsel %vm722, %v673, 0
        %v790 = vsel %vm722, %v674, 0
        %v793 = vsel %vm722, %v675, 0
        %v796 = vsel %vm722, %v676, 0
        %v799 = vsel %vm722, %v677, 0
        %v802 = vsel %vm722, %v678, 0
        %v805 = vsel %vm722, %v679, 0
        %v808 = vsel %vm722, %v680, 0
        %v811 = vsel %vm722, %v681, 0
        %v814 = vsel %vm722, %v682, 0
        %v817 = vsel %vm722, %v683, 0
        %v820 = vsel %vm722, %v684, 0
        %v823 = vsel %vm722, %v685, 0
        %v826 = vsel %vm722, %v686, 0
        %v829 = vsel %vm722, %v687, 0
        %v832 = vsel %vm722, %v688, 0
        %v835 = vsel %vm722, %v689, 0
        %v838 = vsel %vm722, %v690, 0
        %v841 = vsel %vm722, %v691, 0
        %v844 = vsel %vm722, %v692, 0
        %v847 = vsel %vm722, %v693, 0
        %v850 = vsel %vm722, %v694, 0
        %v853 = vsel %vm722, %v695, 0
        %v856 = vsel %vm722, %v696, 0
        %v859 = vsel %vm722, %v697, 0
        %v862 = vsel %vm722, %v698, 0
        %v865 = vsel %vm722, %v699, 0
        %v868 = vsel %vm722, %v700, 0
        %v871 = vsel %vm722, %v701, 0
        %v874 = vsel %vm722, %v702, 0
        %v877 = vsel %vm722, %v703, 0
        %v880 = vsel %vm722, %v704, 0
        %v883 = vsel %vm722, %v705, 0
        %v886 = vsel %vm722, %v706, 0
        %v889 = vsel %vm722, %v707, 0
        %v892 = vsel %vm722, %v708, 0
        %v895 = vsel %vm722, %v709, 0
        %v898 = vsel %vm722, %v710, 0
        %v901 = vsel %vm722, %v711, 0
        %v904 = vsel %vm722, %v712, 0
        %v907 = vsel %vm722, %v713, 0
        %v910 = vsel %vm722, %v714, 0
        %v913 = vsel %vm722, %v715, 0
        %915 = vmatpush.bf16.msra.mxu0 0
        %916 = vmatpush.bf16.msra.mxu0 0
        %917 = vmatpush.bf16.msra.mxu0 0
        %918 = vmatpush.bf16.msra.mxu0 0
        %919 = vmatpush.bf16.msra.mxu0 0
        %920 = vmatpush.bf16.msra.mxu0 0
        %921 = vmatpush.bf16.msra.mxu0 0
        %922 = vmatpush.bf16.msra.mxu0 %v720
        %923 = vmatmul.bf16.gmra.mxu0 %v724
        %v924 = vpop.f32.mrf.mxu0
        %v925 = vadd.f32 %v394, %v924
        %v926 = vpop.f32.mrf.mxu0
        %v927 = vadd.f32 %v394, %v926
        %928 = vmatmul.bf16.gmra.mxu0 %v727
        %v929 = vpop.f32.mrf.mxu0
        %v930 = vadd.f32 %v394, %v929
        %v931 = vpop.f32.mrf.mxu0
        %v932 = vadd.f32 %v394, %v931
        %933 = vmatmul.bf16.gmra.mxu0 %v730
        %v934 = vpop.f32.mrf.mxu0
        %v935 = vadd.f32 %v394, %v934
        %v936 = vpop.f32.mrf.mxu0
        %v937 = vadd.f32 %v394, %v936
        %938 = vmatmul.bf16.gmra.mxu0 %v733
        %v939 = vpop.f32.mrf.mxu0
        %v940 = vadd.f32 %v394, %v939
        %v941 = vpop.f32.mrf.mxu0
        %v942 = vadd.f32 %v394, %v941
        %943 = vmatmul.bf16.gmra.mxu0 %v736
        %v944 = vpop.f32.mrf.mxu0
        %v945 = vadd.f32 %v394, %v944
        %v946 = vpop.f32.mrf.mxu0
        %v947 = vadd.f32 %v394, %v946
        %948 = vmatmul.bf16.gmra.mxu0 %v739
        %v949 = vpop.f32.mrf.mxu0
        %v950 = vadd.f32 %v394, %v949
        %v951 = vpop.f32.mrf.mxu0
        %v952 = vadd.f32 %v394, %v951
        %953 = vmatmul.bf16.gmra.mxu0 %v742
        %v954 = vpop.f32.mrf.mxu0
        %v955 = vadd.f32 %v394, %v954
        %v956 = vpop.f32.mrf.mxu0
        %v957 = vadd.f32 %v394, %v956
        %958 = vmatmul.bf16.gmra.mxu0 %v745
        %v959 = vpop.f32.mrf.mxu0
        %v960 = vadd.f32 %v394, %v959
        %v961 = vpop.f32.mrf.mxu0
        %v962 = vadd.f32 %v394, %v961
        %963 = vmatmul.bf16.gmra.mxu0 %v748
        %v964 = vpop.f32.mrf.mxu0
        %v965 = vadd.f32 %v394, %v964
        %v966 = vpop.f32.mrf.mxu0
        %v967 = vadd.f32 %v394, %v966
        %968 = vmatmul.bf16.gmra.mxu0 %v751
        %v969 = vpop.f32.mrf.mxu0
        %v970 = vadd.f32 %v394, %v969
        %v971 = vpop.f32.mrf.mxu0
        %v972 = vadd.f32 %v394, %v971
        %973 = vmatmul.bf16.gmra.mxu0 %v754
        %v974 = vpop.f32.mrf.mxu0
        %v975 = vadd.f32 %v394, %v974
        %v976 = vpop.f32.mrf.mxu0
        %v977 = vadd.f32 %v394, %v976
        %978 = vmatmul.bf16.gmra.mxu0 %v757
        %v979 = vpop.f32.mrf.mxu0
        %v980 = vadd.f32 %v394, %v979
        %v981 = vpop.f32.mrf.mxu0
        %v982 = vadd.f32 %v394, %v981
        %983 = vmatmul.bf16.gmra.mxu0 %v760
        %v984 = vpop.f32.mrf.mxu0
        %v985 = vadd.f32 %v394, %v984
        %v986 = vpop.f32.mrf.mxu0
        %v987 = vadd.f32 %v394, %v986
        %988 = vmatmul.bf16.gmra.mxu0 %v763
        %v989 = vpop.f32.mrf.mxu0
        %v990 = vadd.f32 %v394, %v989
        %v991 = vpop.f32.mrf.mxu0
        %v992 = vadd.f32 %v394, %v991
        %993 = vmatmul.bf16.gmra.mxu0 %v766
        %v994 = vpop.f32.mrf.mxu0
        %v995 = vadd.f32 %v394, %v994
        %v996 = vpop.f32.mrf.mxu0
        %v997 = vadd.f32 %v394, %v996
        %998 = vmatmul.bf16.gmra.mxu0 %v769
        %v999 = vpop.f32.mrf.mxu0
        %v1000 = vadd.f32 %v394, %v999
        %v1001 = vpop.f32.mrf.mxu0
        %v1002 = vadd.f32 %v394, %v1001
        %1003 = vmatmul.bf16.gmra.mxu0 %v772
        %v1004 = vpop.f32.mrf.mxu0
        %v1005 = vadd.f32 %v394, %v1004
        %v1006 = vpop.f32.mrf.mxu0
        %v1007 = vadd.f32 %v394, %v1006
        %1008 = vmatmul.bf16.gmra.mxu0 %v775
        %v1009 = vpop.f32.mrf.mxu0
        %v1010 = vadd.f32 %v394, %v1009
        %v1011 = vpop.f32.mrf.mxu0
        %v1012 = vadd.f32 %v394, %v1011
        %1013 = vmatmul.bf16.gmra.mxu0 %v778
        %v1014 = vpop.f32.mrf.mxu0
        %v1015 = vadd.f32 %v394, %v1014
        %v1016 = vpop.f32.mrf.mxu0
        %v1017 = vadd.f32 %v394, %v1016
        %1018 = vmatmul.bf16.gmra.mxu0 %v781
        %v1019 = vpop.f32.mrf.mxu0
        %v1020 = vadd.f32 %v394, %v1019
        %v1021 = vpop.f32.mrf.mxu0
        %v1022 = vadd.f32 %v394, %v1021
        %1023 = vmatmul.bf16.gmra.mxu0 %v784
        %v1024 = vpop.f32.mrf.mxu0
        %v1025 = vadd.f32 %v394, %v1024
        %v1026 = vpop.f32.mrf.mxu0
        %v1027 = vadd.f32 %v394, %v1026
        %1028 = vmatmul.bf16.gmra.mxu0 %v787
        %v1029 = vpop.f32.mrf.mxu0
        %v1030 = vadd.f32 %v394, %v1029
        %v1031 = vpop.f32.mrf.mxu0
        %v1032 = vadd.f32 %v394, %v1031
        %1033 = vmatmul.bf16.gmra.mxu0 %v790
        %v1034 = vpop.f32.mrf.mxu0
        %v1035 = vadd.f32 %v394, %v1034
        %v1036 = vpop.f32.mrf.mxu0
        %v1037 = vadd.f32 %v394, %v1036
        %1038 = vmatmul.bf16.gmra.mxu0 %v793
        %v1039 = vpop.f32.mrf.mxu0
        %v1040 = vadd.f32 %v394, %v1039
        %v1041 = vpop.f32.mrf.mxu0
        %v1042 = vadd.f32 %v394, %v1041
        %1043 = vmatmul.bf16.gmra.mxu0 %v796
        %v1044 = vpop.f32.mrf.mxu0
        %v1045 = vadd.f32 %v394, %v1044
        %v1046 = vpop.f32.mrf.mxu0
        %v1047 = vadd.f32 %v394, %v1046
        %1048 = vmatmul.bf16.gmra.mxu0 %v799
        %v1049 = vpop.f32.mrf.mxu0
        %v1050 = vadd.f32 %v394, %v1049
        %v1051 = vpop.f32.mrf.mxu0
        %v1052 = vadd.f32 %v394, %v1051
        %1053 = vmatmul.bf16.gmra.mxu0 %v802
        %v1054 = vpop.f32.mrf.mxu0
        %v1055 = vadd.f32 %v394, %v1054
        %v1056 = vpop.f32.mrf.mxu0
        %v1057 = vadd.f32 %v394, %v1056
        %1058 = vmatmul.bf16.gmra.mxu0 %v805
        %v1059 = vpop.f32.mrf.mxu0
        %v1060 = vadd.f32 %v394, %v1059
        %v1061 = vpop.f32.mrf.mxu0
        %v1062 = vadd.f32 %v394, %v1061
        %1063 = vmatmul.bf16.gmra.mxu0 %v808
        %v1064 = vpop.f32.mrf.mxu0
        %v1065 = vadd.f32 %v394, %v1064
        %v1066 = vpop.f32.mrf.mxu0
        %v1067 = vadd.f32 %v394, %v1066
        %1068 = vmatmul.bf16.gmra.mxu0 %v811
        %v1069 = vpop.f32.mrf.mxu0
        %v1070 = vadd.f32 %v394, %v1069
        %v1071 = vpop.f32.mrf.mxu0
        %v1072 = vadd.f32 %v394, %v1071
        %1073 = vmatmul.bf16.gmra.mxu0 %v814
        %v1074 = vpop.f32.mrf.mxu0
        %v1075 = vadd.f32 %v394, %v1074
        %v1076 = vpop.f32.mrf.mxu0
        %v1077 = vadd.f32 %v394, %v1076
        %1078 = vmatmul.bf16.gmra.mxu0 %v817
        %v1079 = vpop.f32.mrf.mxu0
        %v1080 = vadd.f32 %v394, %v1079
        %v1081 = vpop.f32.mrf.mxu0
        %v1082 = vadd.f32 %v394, %v1081
        %1083 = vmatmul.bf16.gmra.mxu0 %v820
        %v1084 = vpop.f32.mrf.mxu0
        %v1085 = vadd.f32 %v394, %v1084
        %v1086 = vpop.f32.mrf.mxu0
        %v1087 = vadd.f32 %v394, %v1086
        %1088 = vmatmul.bf16.gmra.mxu0 %v823
        %v1089 = vpop.f32.mrf.mxu0
        %v1090 = vadd.f32 %v394, %v1089
        %v1091 = vpop.f32.mrf.mxu0
        %v1092 = vadd.f32 %v394, %v1091
        %1093 = vmatmul.bf16.gmra.mxu0 %v826
        %v1094 = vpop.f32.mrf.mxu0
        %v1095 = vadd.f32 %v394, %v1094
        %v1096 = vpop.f32.mrf.mxu0
        %v1097 = vadd.f32 %v394, %v1096
        %1098 = vmatmul.bf16.gmra.mxu0 %v829
        %v1099 = vpop.f32.mrf.mxu0
        %v1100 = vadd.f32 %v394, %v1099
        %v1101 = vpop.f32.mrf.mxu0
        %v1102 = vadd.f32 %v394, %v1101
        %1103 = vmatmul.bf16.gmra.mxu0 %v832
        %v1104 = vpop.f32.mrf.mxu0
        %v1105 = vadd.f32 %v394, %v1104
        %v1106 = vpop.f32.mrf.mxu0
        %v1107 = vadd.f32 %v394, %v1106
        %1108 = vmatmul.bf16.gmra.mxu0 %v835
        %v1109 = vpop.f32.mrf.mxu0
        %v1110 = vadd.f32 %v394, %v1109
        %v1111 = vpop.f32.mrf.mxu0
        %v1112 = vadd.f32 %v394, %v1111
        %1113 = vmatmul.bf16.gmra.mxu0 %v838
        %v1114 = vpop.f32.mrf.mxu0
        %v1115 = vadd.f32 %v394, %v1114
        %v1116 = vpop.f32.mrf.mxu0
        %v1117 = vadd.f32 %v394, %v1116
        %1118 = vmatmul.bf16.gmra.mxu0 %v841
        %v1119 = vpop.f32.mrf.mxu0
        %v1120 = vadd.f32 %v394, %v1119
        %v1121 = vpop.f32.mrf.mxu0
        %v1122 = vadd.f32 %v394, %v1121
        %1123 = vmatmul.bf16.gmra.mxu0 %v844
        %v1124 = vpop.f32.mrf.mxu0
        %v1125 = vadd.f32 %v394, %v1124
        %v1126 = vpop.f32.mrf.mxu0
        %v1127 = vadd.f32 %v394, %v1126
        %1128 = vmatmul.bf16.gmra.mxu0 %v847
        %v1129 = vpop.f32.mrf.mxu0
        %v1130 = vadd.f32 %v394, %v1129
        %v1131 = vpop.f32.mrf.mxu0
        %v1132 = vadd.f32 %v394, %v1131
        %1133 = vmatmul.bf16.gmra.mxu0 %v850
        %v1134 = vpop.f32.mrf.mxu0
        %v1135 = vadd.f32 %v394, %v1134
        %v1136 = vpop.f32.mrf.mxu0
        %v1137 = vadd.f32 %v394, %v1136
        %1138 = vmatmul.bf16.gmra.mxu0 %v853
        %v1139 = vpop.f32.mrf.mxu0
        %v1140 = vadd.f32 %v394, %v1139
        %v1141 = vpop.f32.mrf.mxu0
        %v1142 = vadd.f32 %v394, %v1141
        %1143 = vmatmul.bf16.gmra.mxu0 %v856
        %v1144 = vpop.f32.mrf.mxu0
        %v1145 = vadd.f32 %v394, %v1144
        %v1146 = vpop.f32.mrf.mxu0
        %v1147 = vadd.f32 %v394, %v1146
        %1148 = vmatmul.bf16.gmra.mxu0 %v859
        %v1149 = vpop.f32.mrf.mxu0
        %v1150 = vadd.f32 %v394, %v1149
        %v1151 = vpop.f32.mrf.mxu0
        %v1152 = vadd.f32 %v394, %v1151
        %1153 = vmatmul.bf16.gmra.mxu0 %v862
        %v1154 = vpop.f32.mrf.mxu0
        %v1155 = vadd.f32 %v394, %v1154
        %v1156 = vpop.f32.mrf.mxu0
        %v1157 = vadd.f32 %v394, %v1156
        %1158 = vmatmul.bf16.gmra.mxu0 %v865
        %v1159 = vpop.f32.mrf.mxu0
        %v1160 = vadd.f32 %v394, %v1159
        %v1161 = vpop.f32.mrf.mxu0
        %v1162 = vadd.f32 %v394, %v1161
        %1163 = vmatmul.bf16.gmra.mxu0 %v868
        %v1164 = vpop.f32.mrf.mxu0
        %v1165 = vadd.f32 %v394, %v1164
        %v1166 = vpop.f32.mrf.mxu0
        %v1167 = vadd.f32 %v394, %v1166
        %1168 = vmatmul.bf16.gmra.mxu0 %v871
        %v1169 = vpop.f32.mrf.mxu0
        %v1170 = vadd.f32 %v394, %v1169
        %v1171 = vpop.f32.mrf.mxu0
        %v1172 = vadd.f32 %v394, %v1171
        %1173 = vmatmul.bf16.gmra.mxu0 %v874
        %v1174 = vpop.f32.mrf.mxu0
        %v1175 = vadd.f32 %v394, %v1174
        %v1176 = vpop.f32.mrf.mxu0
        %v1177 = vadd.f32 %v394, %v1176
        %1178 = vmatmul.bf16.gmra.mxu0 %v877
        %v1179 = vpop.f32.mrf.mxu0
        %v1180 = vadd.f32 %v394, %v1179
        %v1181 = vpop.f32.mrf.mxu0
        %v1182 = vadd.f32 %v394, %v1181
        %1183 = vmatmul.bf16.gmra.mxu0 %v880
        %v1184 = vpop.f32.mrf.mxu0
        %v1185 = vadd.f32 %v394, %v1184
        %v1186 = vpop.f32.mrf.mxu0
        %v1187 = vadd.f32 %v394, %v1186
        %1188 = vmatmul.bf16.gmra.mxu0 %v883
        %v1189 = vpop.f32.mrf.mxu0
        %v1190 = vadd.f32 %v394, %v1189
        %v1191 = vpop.f32.mrf.mxu0
        %v1192 = vadd.f32 %v394, %v1191
        %1193 = vmatmul.bf16.gmra.mxu0 %v886
        %v1194 = vpop.f32.mrf.mxu0
        %v1195 = vadd.f32 %v394, %v1194
        %v1196 = vpop.f32.mrf.mxu0
        %v1197 = vadd.f32 %v394, %v1196
        %1198 = vmatmul.bf16.gmra.mxu0 %v889
        %v1199 = vpop.f32.mrf.mxu0
        %v1200 = vadd.f32 %v394, %v1199
        %v1201 = vpop.f32.mrf.mxu0
        %v1202 = vadd.f32 %v394, %v1201
        %1203 = vmatmul.bf16.gmra.mxu0 %v892
        %v1204 = vpop.f32.mrf.mxu0
        %v1205 = vadd.f32 %v394, %v1204
        %v1206 = vpop.f32.mrf.mxu0
        %v1207 = vadd.f32 %v394, %v1206
        %1208 = vmatmul.bf16.gmra.mxu0 %v895
        %v1209 = vpop.f32.mrf.mxu0
        %v1210 = vadd.f32 %v394, %v1209
        %v1211 = vpop.f32.mrf.mxu0
        %v1212 = vadd.f32 %v394, %v1211
        %1213 = vmatmul.bf16.gmra.mxu0 %v898
        %v1214 = vpop.f32.mrf.mxu0
        %v1215 = vadd.f32 %v394, %v1214
        %v1216 = vpop.f32.mrf.mxu0
        %v1217 = vadd.f32 %v394, %v1216
        %1218 = vmatmul.bf16.gmra.mxu0 %v901
        %v1219 = vpop.f32.mrf.mxu0
        %v1220 = vadd.f32 %v394, %v1219
        %v1221 = vpop.f32.mrf.mxu0
        %v1222 = vadd.f32 %v394, %v1221
        %1223 = vmatmul.bf16.gmra.mxu0 %v904
        %v1224 = vpop.f32.mrf.mxu0
        %v1225 = vadd.f32 %v394, %v1224
        %v1226 = vpop.f32.mrf.mxu0
        %v1227 = vadd.f32 %v394, %v1226
        %1228 = vmatmul.bf16.gmra.mxu0 %v907
        %v1229 = vpop.f32.mrf.mxu0
        %v1230 = vadd.f32 %v394, %v1229
        %v1231 = vpop.f32.mrf.mxu0
        %v1232 = vadd.f32 %v394, %v1231
        %1233 = vmatmul.bf16.gmra.mxu0 %v910
        %v1234 = vpop.f32.mrf.mxu0
        %v1235 = vadd.f32 %v394, %v1234
        %v1236 = vpop.f32.mrf.mxu0
        %v1237 = vadd.f32 %v394, %v1236
        %1238 = vmatmul.bf16.gmra.mxu0 %v913
        %v1239 = vpop.f32.mrf.mxu0
        %v1240 = vadd.f32 %v394, %v1239
        %v1241 = vpop.f32.mrf.mxu0
        %v1242 = vadd.f32 %v394, %v1241
        %1243 = vdwg.mxu0
        %v1244 = vmax.f32 %v925, 0.0
        %v1245 = vmax.f32 %v927, 0.0
        %v1246 = vmax.f32 %v930, 0.0
        %v1247 = vmax.f32 %v932, 0.0
        %v1248 = vmax.f32 %v935, 0.0
        %v1249 = vmax.f32 %v937, 0.0
        %v1250 = vmax.f32 %v940, 0.0
        %v1251 = vmax.f32 %v942, 0.0
        %v1252 = vmax.f32 %v945, 0.0
        %v1253 = vmax.f32 %v947, 0.0
        %v1254 = vmax.f32 %v950, 0.0
        %v1255 = vmax.f32 %v952, 0.0
        %v1256 = vmax.f32 %v955, 0.0
        %v1257 = vmax.f32 %v957, 0.0
        %v1258 = vmax.f32 %v960, 0.0
        %v1259 = vmax.f32 %v962, 0.0
        %v1260 = vmax.f32 %v965, 0.0
        %v1261 = vmax.f32 %v967, 0.0
        %v1262 = vmax.f32 %v970, 0.0
        %v1263 = vmax.f32 %v972, 0.0
        %v1264 = vmax.f32 %v975, 0.0
        %v1265 = vmax.f32 %v977, 0.0
        %v1266 = vmax.f32 %v980, 0.0
        %v1267 = vmax.f32 %v982, 0.0
        %v1268 = vmax.f32 %v985, 0.0
        %v1269 = vmax.f32 %v987, 0.0
        %v1270 = vmax.f32 %v990, 0.0
        %v1271 = vmax.f32 %v992, 0.0
        %v1272 = vmax.f32 %v995, 0.0
        %v1273 = vmax.f32 %v997, 0.0
        %v1274 = vmax.f32 %v1000, 0.0
        %v1275 = vmax.f32 %v1002, 0.0
        %v1276 = vmax.f32 %v1005, 0.0
        %v1277 = vmax.f32 %v1007, 0.0
        %v1278 = vmax.f32 %v1010, 0.0
        %v1279 = vmax.f32 %v1012, 0.0
        %v1280 = vmax.f32 %v1015, 0.0
        %v1281 = vmax.f32 %v1017, 0.0
        %v1282 = vmax.f32 %v1020, 0.0
        %v1283 = vmax.f32 %v1022, 0.0
        %v1284 = vmax.f32 %v1025, 0.0
        %v1285 = vmax.f32 %v1027, 0.0
        %v1286 = vmax.f32 %v1030, 0.0
        %v1287 = vmax.f32 %v1032, 0.0
        %v1288 = vmax.f32 %v1035, 0.0
        %v1289 = vmax.f32 %v1037, 0.0
        %v1290 = vmax.f32 %v1040, 0.0
        %v1291 = vmax.f32 %v1042, 0.0
        %v1292 = vmax.f32 %v1045, 0.0
        %v1293 = vmax.f32 %v1047, 0.0
        %v1294 = vmax.f32 %v1050, 0.0
        %v1295 = vmax.f32 %v1052, 0.0
        %v1296 = vmax.f32 %v1055, 0.0
        %v1297 = vmax.f32 %v1057, 0.0
        %v1298 = vmax.f32 %v1060, 0.0
        %v1299 = vmax.f32 %v1062, 0.0
        %v1300 = vmax.f32 %v1065, 0.0
        %v1301 = vmax.f32 %v1067, 0.0
        %v1302 = vmax.f32 %v1070, 0.0
        %v1303 = vmax.f32 %v1072, 0.0
        %v1304 = vmax.f32 %v1075, 0.0
        %v1305 = vmax.f32 %v1077, 0.0
        %v1306 = vmax.f32 %v1080, 0.0
        %v1307 = vmax.f32 %v1082, 0.0
        %v1308 = vmax.f32 %v1085, 0.0
        %v1309 = vmax.f32 %v1087, 0.0
        %v1310 = vmax.f32 %v1090, 0.0
        %v1311 = vmax.f32 %v1092, 0.0
        %v1312 = vmax.f32 %v1095, 0.0
        %v1313 = vmax.f32 %v1097, 0.0
        %v1314 = vmax.f32 %v1100, 0.0
        %v1315 = vmax.f32 %v1102, 0.0
        %v1316 = vmax.f32 %v1105, 0.0
        %v1317 = vmax.f32 %v1107, 0.0
        %v1318 = vmax.f32 %v1110, 0.0
        %v1319 = vmax.f32 %v1112, 0.0
        %v1320 = vmax.f32 %v1115, 0.0
        %v1321 = vmax.f32 %v1117, 0.0
        %v1322 = vmax.f32 %v1120, 0.0
        %v1323 = vmax.f32 %v1122, 0.0
        %v1324 = vmax.f32 %v1125, 0.0
        %v1325 = vmax.f32 %v1127, 0.0
        %v1326 = vmax.f32 %v1130, 0.0
        %v1327 = vmax.f32 %v1132, 0.0
        %v1328 = vmax.f32 %v1135, 0.0
        %v1329 = vmax.f32 %v1137, 0.0
        %v1330 = vmax.f32 %v1140, 0.0
        %v1331 = vmax.f32 %v1142, 0.0
        %v1332 = vmax.f32 %v1145, 0.0
        %v1333 = vmax.f32 %v1147, 0.0
        %v1334 = vmax.f32 %v1150, 0.0
        %v1335 = vmax.f32 %v1152, 0.0
        %v1336 = vmax.f32 %v1155, 0.0
        %v1337 = vmax.f32 %v1157, 0.0
        %v1338 = vmax.f32 %v1160, 0.0
        %v1339 = vmax.f32 %v1162, 0.0
        %v1340 = vmax.f32 %v1165, 0.0
        %v1341 = vmax.f32 %v1167, 0.0
        %v1342 = vmax.f32 %v1170, 0.0
        %v1343 = vmax.f32 %v1172, 0.0
        %v1344 = vmax.f32 %v1175, 0.0
        %v1345 = vmax.f32 %v1177, 0.0
        %v1346 = vmax.f32 %v1180, 0.0
        %v1347 = vmax.f32 %v1182, 0.0
        %v1348 = vmax.f32 %v1185, 0.0
        %v1349 = vmax.f32 %v1187, 0.0
        %v1350 = vmax.f32 %v1190, 0.0
        %v1351 = vmax.f32 %v1192, 0.0
        %v1352 = vmax.f32 %v1195, 0.0
        %v1353 = vmax.f32 %v1197, 0.0
        %v1354 = vmax.f32 %v1200, 0.0
        %v1355 = vmax.f32 %v1202, 0.0
        %v1356 = vmax.f32 %v1205, 0.0
        %v1357 = vmax.f32 %v1207, 0.0
        %v1358 = vmax.f32 %v1210, 0.0
        %v1359 = vmax.f32 %v1212, 0.0
        %v1360 = vmax.f32 %v1215, 0.0
        %v1361 = vmax.f32 %v1217, 0.0
        %v1362 = vmax.f32 %v1220, 0.0
        %v1363 = vmax.f32 %v1222, 0.0
        %v1364 = vmax.f32 %v1225, 0.0
        %v1365 = vmax.f32 %v1227, 0.0
        %v1366 = vmax.f32 %v1230, 0.0
        %v1367 = vmax.f32 %v1232, 0.0
        %v1368 = vmax.f32 %v1235, 0.0
        %v1369 = vmax.f32 %v1237, 0.0
        %v1370 = vmax.f32 %v1240, 0.0
        %v1371 = vmax.f32 %v1242, 0.0
        %v1372 = vld [vmem:[%s3] sm:$0x1]
        %v1374 = vperm.slane %v1372, 0
        %v1376 = vmul.f32 %v1244, %v1374
        %v1377 = vmul.f32 %v1245, %v1374
        %v1378 = vmul.f32 %v1246, %v1374
        %v1379 = vmul.f32 %v1247, %v1374
        %v1380 = vmul.f32 %v1248, %v1374
        %v1381 = vmul.f32 %v1249, %v1374
        %v1382 = vmul.f32 %v1250, %v1374
        %v1383 = vmul.f32 %v1251, %v1374
        %v1384 = vmul.f32 %v1252, %v1374
        %v1385 = vmul.f32 %v1253, %v1374
        %v1386 = vmul.f32 %v1254, %v1374
        %v1387 = vmul.f32 %v1255, %v1374
        %v1388 = vmul.f32 %v1256, %v1374
        %v1389 = vmul.f32 %v1257, %v1374
        %v1390 = vmul.f32 %v1258, %v1374
        %v1391 = vmul.f32 %v1259, %v1374
        %v1392 = vmul.f32 %v1260, %v1374
        %v1393 = vmul.f32 %v1261, %v1374
        %v1394 = vmul.f32 %v1262, %v1374
        %v1395 = vmul.f32 %v1263, %v1374
        %v1396 = vmul.f32 %v1264, %v1374
        %v1397 = vmul.f32 %v1265, %v1374
        %v1398 = vmul.f32 %v1266, %v1374
        %v1399 = vmul.f32 %v1267, %v1374
        %v1400 = vmul.f32 %v1268, %v1374
        %v1401 = vmul.f32 %v1269, %v1374
        %v1402 = vmul.f32 %v1270, %v1374
        %v1403 = vmul.f32 %v1271, %v1374
        %v1404 = vmul.f32 %v1272, %v1374
        %v1405 = vmul.f32 %v1273, %v1374
        %v1406 = vmul.f32 %v1274, %v1374
        %v1407 = vmul.f32 %v1275, %v1374
        %v1408 = vmul.f32 %v1276, %v1374
        %v1409 = vmul.f32 %v1277, %v1374
        %v1410 = vmul.f32 %v1278, %v1374
        %v1411 = vmul.f32 %v1279, %v1374
        %v1412 = vmul.f32 %v1280, %v1374
        %v1413 = vmul.f32 %v1281, %v1374
        %v1414 = vmul.f32 %v1282, %v1374
        %v1415 = vmul.f32 %v1283, %v1374
        %v1416 = vmul.f32 %v1284, %v1374
        %v1417 = vmul.f32 %v1285, %v1374
        %v1418 = vmul.f32 %v1286, %v1374
        %v1419 = vmul.f32 %v1287, %v1374
        %v1420 = vmul.f32 %v1288, %v1374
        %v1421 = vmul.f32 %v1289, %v1374
        %v1422 = vmul.f32 %v1290, %v1374
        %v1423 = vmul.f32 %v1291, %v1374
        %v1424 = vmul.f32 %v1292, %v1374
        %v1425 = vmul.f32 %v1293, %v1374
        %v1426 = vmul.f32 %v1294, %v1374
        %v1427 = vmul.f32 %v1295, %v1374
        %v1428 = vmul.f32 %v1296, %v1374
        %v1429 = vmul.f32 %v1297, %v1374
        %v1430 = vmul.f32 %v1298, %v1374
        %v1431 = vmul.f32 %v1299, %v1374
        %v1432 = vmul.f32 %v1300, %v1374
        %v1433 = vmul.f32 %v1301, %v1374
        %v1434 = vmul.f32 %v1302, %v1374
        %v1435 = vmul.f32 %v1303, %v1374
        %v1436 = vmul.f32 %v1304, %v1374
        %v1437 = vmul.f32 %v1305, %v1374
        %v1438 = vmul.f32 %v1306, %v1374
        %v1439 = vmul.f32 %v1307, %v1374
        %v1440 = vmul.f32 %v1308, %v1374
        %v1441 = vmul.f32 %v1309, %v1374
        %v1442 = vmul.f32 %v1310, %v1374
        %v1443 = vmul.f32 %v1311, %v1374
        %v1444 = vmul.f32 %v1312, %v1374
        %v1445 = vmul.f32 %v1313, %v1374
        %v1446 = vmul.f32 %v1314, %v1374
        %v1447 = vmul.f32 %v1315, %v1374
        %v1448 = vmul.f32 %v1316, %v1374
        %v1449 = vmul.f32 %v1317, %v1374
        %v1450 = vmul.f32 %v1318, %v1374
        %v1451 = vmul.f32 %v1319, %v1374
        %v1452 = vmul.f32 %v1320, %v1374
        %v1453 = vmul.f32 %v1321, %v1374
        %v1454 = vmul.f32 %v1322, %v1374
        %v1455 = vmul.f32 %v1323, %v1374
        %v1456 = vmul.f32 %v1324, %v1374
        %v1457 = vmul.f32 %v1325, %v1374
        %v1458 = vmul.f32 %v1326, %v1374
        %v1459 = vmul.f32 %v1327, %v1374
        %v1460 = vmul.f32 %v1328, %v1374
        %v1461 = vmul.f32 %v1329, %v1374
        %v1462 = vmul.f32 %v1330, %v1374
        %v1463 = vmul.f32 %v1331, %v1374
        %v1464 = vmul.f32 %v1332, %v1374
        %v1465 = vmul.f32 %v1333, %v1374
        %v1466 = vmul.f32 %v1334, %v1374
        %v1467 = vmul.f32 %v1335, %v1374
        %v1468 = vmul.f32 %v1336, %v1374
        %v1469 = vmul.f32 %v1337, %v1374
        %v1470 = vmul.f32 %v1338, %v1374
        %v1471 = vmul.f32 %v1339, %v1374
        %v1472 = vmul.f32 %v1340, %v1374
        %v1473 = vmul.f32 %v1341, %v1374
        %v1474 = vmul.f32 %v1342, %v1374
        %v1475 = vmul.f32 %v1343, %v1374
        %v1476 = vmul.f32 %v1344, %v1374
        %v1477 = vmul.f32 %v1345, %v1374
        %v1478 = vmul.f32 %v1346, %v1374
        %v1479 = vmul.f32 %v1347, %v1374
        %v1480 = vmul.f32 %v1348, %v1374
        %v1481 = vmul.f32 %v1349, %v1374
        %v1482 = vmul.f32 %v1350, %v1374
        %v1483 = vmul.f32 %v1351, %v1374
        %v1484 = vmul.f32 %v1352, %v1374
        %v1485 = vmul.f32 %v1353, %v1374
        %v1486 = vmul.f32 %v1354, %v1374
        %v1487 = vmul.f32 %v1355, %v1374
        %v1488 = vmul.f32 %v1356, %v1374
        %v1489 = vmul.f32 %v1357, %v1374
        %v1490 = vmul.f32 %v1358, %v1374
        %v1491 = vmul.f32 %v1359, %v1374
        %v1492 = vmul.f32 %v1360, %v1374
        %v1493 = vmul.f32 %v1361, %v1374
        %v1494 = vmul.f32 %v1362, %v1374
        %v1495 = vmul.f32 %v1363, %v1374
        %v1496 = vmul.f32 %v1364, %v1374
        %v1497 = vmul.f32 %v1365, %v1374
        %v1498 = vmul.f32 %v1366, %v1374
        %v1499 = vmul.f32 %v1367, %v1374
        %v1500 = vmul.f32 %v1368, %v1374
        %v1501 = vmul.f32 %v1369, %v1374
        %v1502 = vmul.f32 %v1370, %v1374
        %v1503 = vmul.f32 %v1371, %v1374
        %v1504 = vld [vmem:[%s4] sm:$0x1]
        %v1506 = vperm.slane %v1504, 0
        %v1508 = vadd.f32 %v1376, %v1506
        %v1509 = vadd.f32 %v1377, %v1506
        %v1510 = vadd.f32 %v1378, %v1506
        %v1511 = vadd.f32 %v1379, %v1506
        %v1512 = vadd.f32 %v1380, %v1506
        %v1513 = vadd.f32 %v1381, %v1506
        %v1514 = vadd.f32 %v1382, %v1506
        %v1515 = vadd.f32 %v1383, %v1506
        %v1516 = vadd.f32 %v1384, %v1506
        %v1517 = vadd.f32 %v1385, %v1506
        %v1518 = vadd.f32 %v1386, %v1506
        %v1519 = vadd.f32 %v1387, %v1506
        %v1520 = vadd.f32 %v1388, %v1506
        %v1521 = vadd.f32 %v1389, %v1506
        %v1522 = vadd.f32 %v1390, %v1506
        %v1523 = vadd.f32 %v1391, %v1506
        %v1524 = vadd.f32 %v1392, %v1506
        %v1525 = vadd.f32 %v1393, %v1506
        %v1526 = vadd.f32 %v1394, %v1506
        %v1527 = vadd.f32 %v1395, %v1506
        %v1528 = vadd.f32 %v1396, %v1506
        %v1529 = vadd.f32 %v1397, %v1506
        %v1530 = vadd.f32 %v1398, %v1506
        %v1531 = vadd.f32 %v1399, %v1506
        %v1532 = vadd.f32 %v1400, %v1506
        %v1533 = vadd.f32 %v1401, %v1506
        %v1534 = vadd.f32 %v1402, %v1506
        %v1535 = vadd.f32 %v1403, %v1506
        %v1536 = vadd.f32 %v1404, %v1506
        %v1537 = vadd.f32 %v1405, %v1506
        %v1538 = vadd.f32 %v1406, %v1506
        %v1539 = vadd.f32 %v1407, %v1506
        %v1540 = vadd.f32 %v1408, %v1506
        %v1541 = vadd.f32 %v1409, %v1506
        %v1542 = vadd.f32 %v1410, %v1506
        %v1543 = vadd.f32 %v1411, %v1506
        %v1544 = vadd.f32 %v1412, %v1506
        %v1545 = vadd.f32 %v1413, %v1506
        %v1546 = vadd.f32 %v1414, %v1506
        %v1547 = vadd.f32 %v1415, %v1506
        %v1548 = vadd.f32 %v1416, %v1506
        %v1549 = vadd.f32 %v1417, %v1506
        %v1550 = vadd.f32 %v1418, %v1506
        %v1551 = vadd.f32 %v1419, %v1506
        %v1552 = vadd.f32 %v1420, %v1506
        %v1553 = vadd.f32 %v1421, %v1506
        %v1554 = vadd.f32 %v1422, %v1506
        %v1555 = vadd.f32 %v1423, %v1506
        %v1556 = vadd.f32 %v1424, %v1506
        %v1557 = vadd.f32 %v1425, %v1506
        %v1558 = vadd.f32 %v1426, %v1506
        %v1559 = vadd.f32 %v1427, %v1506
        %v1560 = vadd.f32 %v1428, %v1506
        %v1561 = vadd.f32 %v1429, %v1506
        %v1562 = vadd.f32 %v1430, %v1506
        %v1563 = vadd.f32 %v1431, %v1506
        %v1564 = vadd.f32 %v1432, %v1506
        %v1565 = vadd.f32 %v1433, %v1506
        %v1566 = vadd.f32 %v1434, %v1506
        %v1567 = vadd.f32 %v1435, %v1506
        %v1568 = vadd.f32 %v1436, %v1506
        %v1569 = vadd.f32 %v1437, %v1506
        %v1570 = vadd.f32 %v1438, %v1506
        %v1571 = vadd.f32 %v1439, %v1506
        %v1572 = vadd.f32 %v1440, %v1506
        %v1573 = vadd.f32 %v1441, %v1506
        %v1574 = vadd.f32 %v1442, %v1506
        %v1575 = vadd.f32 %v1443, %v1506
        %v1576 = vadd.f32 %v1444, %v1506
        %v1577 = vadd.f32 %v1445, %v1506
        %v1578 = vadd.f32 %v1446, %v1506
        %v1579 = vadd.f32 %v1447, %v1506
        %v1580 = vadd.f32 %v1448, %v1506
        %v1581 = vadd.f32 %v1449, %v1506
        %v1582 = vadd.f32 %v1450, %v1506
        %v1583 = vadd.f32 %v1451, %v1506
        %v1584 = vadd.f32 %v1452, %v1506
        %v1585 = vadd.f32 %v1453, %v1506
        %v1586 = vadd.f32 %v1454, %v1506
        %v1587 = vadd.f32 %v1455, %v1506
        %v1588 = vadd.f32 %v1456, %v1506
        %v1589 = vadd.f32 %v1457, %v1506
        %v1590 = vadd.f32 %v1458, %v1506
        %v1591 = vadd.f32 %v1459, %v1506
        %v1592 = vadd.f32 %v1460, %v1506
        %v1593 = vadd.f32 %v1461, %v1506
        %v1594 = vadd.f32 %v1462, %v1506
        %v1595 = vadd.f32 %v1463, %v1506
        %v1596 = vadd.f32 %v1464, %v1506
        %v1597 = vadd.f32 %v1465, %v1506
        %v1598 = vadd.f32 %v1466, %v1506
        %v1599 = vadd.f32 %v1467, %v1506
        %v1600 = vadd.f32 %v1468, %v1506
        %v1601 = vadd.f32 %v1469, %v1506
        %v1602 = vadd.f32 %v1470, %v1506
        %v1603 = vadd.f32 %v1471, %v1506
        %v1604 = vadd.f32 %v1472, %v1506
        %v1605 = vadd.f32 %v1473, %v1506
        %v1606 = vadd.f32 %v1474, %v1506
        %v1607 = vadd.f32 %v1475, %v1506
        %v1608 = vadd.f32 %v1476, %v1506
        %v1609 = vadd.f32 %v1477, %v1506
        %v1610 = vadd.f32 %v1478, %v1506
        %v1611 = vadd.f32 %v1479, %v1506
        %v1612 = vadd.f32 %v1480, %v1506
        %v1613 = vadd.f32 %v1481, %v1506
        %v1614 = vadd.f32 %v1482, %v1506
        %v1615 = vadd.f32 %v1483, %v1506
        %v1616 = vadd.f32 %v1484, %v1506
        %v1617 = vadd.f32 %v1485, %v1506
        %v1618 = vadd.f32 %v1486, %v1506
        %v1619 = vadd.f32 %v1487, %v1506
        %v1620 = vadd.f32 %v1488, %v1506
        %v1621 = vadd.f32 %v1489, %v1506
        %v1622 = vadd.f32 %v1490, %v1506
        %v1623 = vadd.f32 %v1491, %v1506
        %v1624 = vadd.f32 %v1492, %v1506
        %v1625 = vadd.f32 %v1493, %v1506
        %v1626 = vadd.f32 %v1494, %v1506
        %v1627 = vadd.f32 %v1495, %v1506
        %v1628 = vadd.f32 %v1496, %v1506
        %v1629 = vadd.f32 %v1497, %v1506
        %v1630 = vadd.f32 %v1498, %v1506
        %v1631 = vadd.f32 %v1499, %v1506
        %v1632 = vadd.f32 %v1500, %v1506
        %v1633 = vadd.f32 %v1501, %v1506
        %v1634 = vadd.f32 %v1502, %v1506
        %v1635 = vadd.f32 %v1503, %v1506
        %v1636 = vpack.c.bf16 %v1508, %v1508
        %v1637 = vpack.c.bf16 %v1509, %v1509
        %v1638 = vpack.c.bf16 %v1510, %v1510
        %v1639 = vpack.c.bf16 %v1511, %v1511
        %v1640 = vpack.c.bf16 %v1512, %v1512
        %v1641 = vpack.c.bf16 %v1513, %v1513
        %v1642 = vpack.c.bf16 %v1514, %v1514
        %v1643 = vpack.c.bf16 %v1515, %v1515
        %v1644 = vpack.c.bf16 %v1516, %v1516
        %v1645 = vpack.c.bf16 %v1517, %v1517
        %v1646 = vpack.c.bf16 %v1518, %v1518
        %v1647 = vpack.c.bf16 %v1519, %v1519
        %v1648 = vpack.c.bf16 %v1520, %v1520
        %v1649 = vpack.c.bf16 %v1521, %v1521
        %v1650 = vpack.c.bf16 %v1522, %v1522
        %v1651 = vpack.c.bf16 %v1523, %v1523
        %v1652 = vpack.c.bf16 %v1524, %v1524
        %v1653 = vpack.c.bf16 %v1525, %v1525
        %v1654 = vpack.c.bf16 %v1526, %v1526
        %v1655 = vpack.c.bf16 %v1527, %v1527
        %v1656 = vpack.c.bf16 %v1528, %v1528
        %v1657 = vpack.c.bf16 %v1529, %v1529
        %v1658 = vpack.c.bf16 %v1530, %v1530
        %v1659 = vpack.c.bf16 %v1531, %v1531
        %v1660 = vpack.c.bf16 %v1532, %v1532
        %v1661 = vpack.c.bf16 %v1533, %v1533
        %v1662 = vpack.c.bf16 %v1534, %v1534
        %v1663 = vpack.c.bf16 %v1535, %v1535
        %v1664 = vpack.c.bf16 %v1536, %v1536
        %v1665 = vpack.c.bf16 %v1537, %v1537
        %v1666 = vpack.c.bf16 %v1538, %v1538
        %v1667 = vpack.c.bf16 %v1539, %v1539
        %v1668 = vpack.c.bf16 %v1540, %v1540
        %v1669 = vpack.c.bf16 %v1541, %v1541
        %v1670 = vpack.c.bf16 %v1542, %v1542
        %v1671 = vpack.c.bf16 %v1543, %v1543
        %v1672 = vpack.c.bf16 %v1544, %v1544
        %v1673 = vpack.c.bf16 %v1545, %v1545
        %v1674 = vpack.c.bf16 %v1546, %v1546
        %v1675 = vpack.c.bf16 %v1547, %v1547
        %v1676 = vpack.c.bf16 %v1548, %v1548
        %v1677 = vpack.c.bf16 %v1549, %v1549
        %v1678 = vpack.c.bf16 %v1550, %v1550
        %v1679 = vpack.c.bf16 %v1551, %v1551
        %v1680 = vpack.c.bf16 %v1552, %v1552
        %v1681 = vpack.c.bf16 %v1553, %v1553
        %v1682 = vpack.c.bf16 %v1554, %v1554
        %v1683 = vpack.c.bf16 %v1555, %v1555
        %v1684 = vpack.c.bf16 %v1556, %v1556
        %v1685 = vpack.c.bf16 %v1557, %v1557
        %v1686 = vpack.c.bf16 %v1558, %v1558
        %v1687 = vpack.c.bf16 %v1559, %v1559
        %v1688 = vpack.c.bf16 %v1560, %v1560
        %v1689 = vpack.c.bf16 %v1561, %v1561
        %v1690 = vpack.c.bf16 %v1562, %v1562
        %v1691 = vpack.c.bf16 %v1563, %v1563
        %v1692 = vpack.c.bf16 %v1564, %v1564
        %v1693 = vpack.c.bf16 %v1565, %v1565
        %v1694 = vpack.c.bf16 %v1566, %v1566
        %v1695 = vpack.c.bf16 %v1567, %v1567
        %v1696 = vpack.c.bf16 %v1568, %v1568
        %v1697 = vpack.c.bf16 %v1569, %v1569
        %v1698 = vpack.c.bf16 %v1570, %v1570
        %v1699 = vpack.c.bf16 %v1571, %v1571
        %v1700 = vpack.c.bf16 %v1572, %v1572
        %v1701 = vpack.c.bf16 %v1573, %v1573
        %v1702 = vpack.c.bf16 %v1574, %v1574
        %v1703 = vpack.c.bf16 %v1575, %v1575
        %v1704 = vpack.c.bf16 %v1576, %v1576
        %v1705 = vpack.c.bf16 %v1577, %v1577
        %v1706 = vpack.c.bf16 %v1578, %v1578
        %v1707 = vpack.c.bf16 %v1579, %v1579
        %v1708 = vpack.c.bf16 %v1580, %v1580
        %v1709 = vpack.c.bf16 %v1581, %v1581
        %v1710 = vpack.c.bf16 %v1582, %v1582
        %v1711 = vpack.c.bf16 %v1583, %v1583
        %v1712 = vpack.c.bf16 %v1584, %v1584
        %v1713 = vpack.c.bf16 %v1585, %v1585
        %v1714 = vpack.c.bf16 %v1586, %v1586
        %v1715 = vpack.c.bf16 %v1587, %v1587
        %v1716 = vpack.c.bf16 %v1588, %v1588
        %v1717 = vpack.c.bf16 %v1589, %v1589
        %v1718 = vpack.c.bf16 %v1590, %v1590
        %v1719 = vpack.c.bf16 %v1591, %v1591
        %v1720 = vpack.c.bf16 %v1592, %v1592
        %v1721 = vpack.c.bf16 %v1593, %v1593
        %v1722 = vpack.c.bf16 %v1594, %v1594
        %v1723 = vpack.c.bf16 %v1595, %v1595
        %v1724 = vpack.c.bf16 %v1596, %v1596
        %v1725 = vpack.c.bf16 %v1597, %v1597
        %v1726 = vpack.c.bf16 %v1598, %v1598
        %v1727 = vpack.c.bf16 %v1599, %v1599
        %v1728 = vpack.c.bf16 %v1600, %v1600
        %v1729 = vpack.c.bf16 %v1601, %v1601
        %v1730 = vpack.c.bf16 %v1602, %v1602
        %v1731 = vpack.c.bf16 %v1603, %v1603
        %v1732 = vpack.c.bf16 %v1604, %v1604
        %v1733 = vpack.c.bf16 %v1605, %v1605
        %v1734 = vpack.c.bf16 %v1606, %v1606
        %v1735 = vpack.c.bf16 %v1607, %v1607
        %v1736 = vpack.c.bf16 %v1608, %v1608
        %v1737 = vpack.c.bf16 %v1609, %v1609
        %v1738 = vpack.c.bf16 %v1610, %v1610
        %v1739 = vpack.c.bf16 %v1611, %v1611
        %v1740 = vpack.c.bf16 %v1612, %v1612
        %v1741 = vpack.c.bf16 %v1613, %v1613
        %v1742 = vpack.c.bf16 %v1614, %v1614
        %v1743 = vpack.c.bf16 %v1615, %v1615
        %v1744 = vpack.c.bf16 %v1616, %v1616
        %v1745 = vpack.c.bf16 %v1617, %v1617
        %v1746 = vpack.c.bf16 %v1618, %v1618
        %v1747 = vpack.c.bf16 %v1619, %v1619
        %v1748 = vpack.c.bf16 %v1620, %v1620
        %v1749 = vpack.c.bf16 %v1621, %v1621
        %v1750 = vpack.c.bf16 %v1622, %v1622
        %v1751 = vpack.c.bf16 %v1623, %v1623
        %v1752 = vpack.c.bf16 %v1624, %v1624
        %v1753 = vpack.c.bf16 %v1625, %v1625
        %v1754 = vpack.c.bf16 %v1626, %v1626
        %v1755 = vpack.c.bf16 %v1627, %v1627
        %v1756 = vpack.c.bf16 %v1628, %v1628
        %v1757 = vpack.c.bf16 %v1629, %v1629
        %v1758 = vpack.c.bf16 %v1630, %v1630
        %v1759 = vpack.c.bf16 %v1631, %v1631
        %v1760 = vpack.c.bf16 %v1632, %v1632
        %v1761 = vpack.c.bf16 %v1633, %v1633
        %v1762 = vpack.c.bf16 %v1634, %v1634
        %v1763 = vpack.c.bf16 %v1635, %v1635
        %vm1764 = vcmask 60416
        %1765 = vst.msk [vmem:[%s241] sm:$0xf] %vm1764, %v1636
        %1766 = vst.msk [vmem:[%s241 + $0x4] sm:$0xf] %vm1764, %v1637
        %1767 = vst.msk [vmem:[%s241 + $0x8] sm:$0xf] %vm1764, %v1638
        %1768 = vst.msk [vmem:[%s241 + $0xc] sm:$0xf] %vm1764, %v1639
        %1769 = vst.msk [vmem:[%s241 + $0x10] sm:$0xf] %vm1764, %v1640
        %1770 = vst.msk [vmem:[%s241 + $0x14] sm:$0xf] %vm1764, %v1641
        %1771 = vst.msk [vmem:[%s241 + $0x18] sm:$0xf] %vm1764, %v1642
        %1772 = vst.msk [vmem:[%s241 + $0x1c] sm:$0xf] %vm1764, %v1643
        %1773 = vst.msk [vmem:[%s241 + $0x20] sm:$0xf] %vm1764, %v1644
        %1774 = vst.msk [vmem:[%s241 + $0x24] sm:$0xf] %vm1764, %v1645
        %1775 = vst.msk [vmem:[%s241 + $0x28] sm:$0xf] %vm1764, %v1646
        %1776 = vst.msk [vmem:[%s241 + $0x2c] sm:$0xf] %vm1764, %v1647
        %1777 = vst.msk [vmem:[%s241 + $0x30] sm:$0xf] %vm1764, %v1648
        %1778 = vst.msk [vmem:[%s241 + $0x34] sm:$0xf] %vm1764, %v1649
        %1779 = vst.msk [vmem:[%s241 + $0x38] sm:$0xf] %vm1764, %v1650
        %1780 = vst.msk [vmem:[%s241 + $0x3c] sm:$0xf] %vm1764, %v1651
        %1781 = vst.msk [vmem:[%s241 + $0x40] sm:$0xf] %vm1764, %v1652
        %1782 = vst.msk [vmem:[%s241 + $0x44] sm:$0xf] %vm1764, %v1653
        %1783 = vst.msk [vmem:[%s241 + $0x48] sm:$0xf] %vm1764, %v1654
        %1784 = vst.msk [vmem:[%s241 + $0x4c] sm:$0xf] %vm1764, %v1655
        %1785 = vst.msk [vmem:[%s241 + $0x50] sm:$0xf] %vm1764, %v1656
        %1786 = vst.msk [vmem:[%s241 + $0x54] sm:$0xf] %vm1764, %v1657
        %1787 = vst.msk [vmem:[%s241 + $0x58] sm:$0xf] %vm1764, %v1658
        %1788 = vst.msk [vmem:[%s241 + $0x5c] sm:$0xf] %vm1764, %v1659
        %1789 = vst.msk [vmem:[%s241 + $0x60] sm:$0xf] %vm1764, %v1660
        %1790 = vst.msk [vmem:[%s241 + $0x64] sm:$0xf] %vm1764, %v1661
        %1791 = vst.msk [vmem:[%s241 + $0x68] sm:$0xf] %vm1764, %v1662
        %1792 = vst.msk [vmem:[%s241 + $0x6c] sm:$0xf] %vm1764, %v1663
        %1793 = vst.msk [vmem:[%s241 + $0x70] sm:$0xf] %vm1764, %v1664
        %1794 = vst.msk [vmem:[%s241 + $0x74] sm:$0xf] %vm1764, %v1665
        %1795 = vst.msk [vmem:[%s241 + $0x78] sm:$0xf] %vm1764, %v1666
        %1796 = vst.msk [vmem:[%s241 + $0x7c] sm:$0xf] %vm1764, %v1667
        %1797 = vst.msk [vmem:[%s241 + $0x80] sm:$0xf] %vm1764, %v1668
        %1798 = vst.msk [vmem:[%s241 + $0x84] sm:$0xf] %vm1764, %v1669
        %1799 = vst.msk [vmem:[%s241 + $0x88] sm:$0xf] %vm1764, %v1670
        %1800 = vst.msk [vmem:[%s241 + $0x8c] sm:$0xf] %vm1764, %v1671
        %1801 = vst.msk [vmem:[%s241 + $0x90] sm:$0xf] %vm1764, %v1672
        %1802 = vst.msk [vmem:[%s241 + $0x94] sm:$0xf] %vm1764, %v1673
        %1803 = vst.msk [vmem:[%s241 + $0x98] sm:$0xf] %vm1764, %v1674
        %1804 = vst.msk [vmem:[%s241 + $0x9c] sm:$0xf] %vm1764, %v1675
        %1805 = vst.msk [vmem:[%s241 + $0xa0] sm:$0xf] %vm1764, %v1676
        %1806 = vst.msk [vmem:[%s241 + $0xa4] sm:$0xf] %vm1764, %v1677
        %1807 = vst.msk [vmem:[%s241 + $0xa8] sm:$0xf] %vm1764, %v1678
        %1808 = vst.msk [vmem:[%s241 + $0xac] sm:$0xf] %vm1764, %v1679
        %1809 = vst.msk [vmem:[%s241 + $0xb0] sm:$0xf] %vm1764, %v1680
        %1810 = vst.msk [vmem:[%s241 + $0xb4] sm:$0xf] %vm1764, %v1681
        %1811 = vst.msk [vmem:[%s241 + $0xb8] sm:$0xf] %vm1764, %v1682
        %1812 = vst.msk [vmem:[%s241 + $0xbc] sm:$0xf] %vm1764, %v1683
        %1813 = vst.msk [vmem:[%s241 + $0xc0] sm:$0xf] %vm1764, %v1684
        %1814 = vst.msk [vmem:[%s241 + $0xc4] sm:$0xf] %vm1764, %v1685
        %1815 = vst.msk [vmem:[%s241 + $0xc8] sm:$0xf] %vm1764, %v1686
        %1816 = vst.msk [vmem:[%s241 + $0xcc] sm:$0xf] %vm1764, %v1687
        %1817 = vst.msk [vmem:[%s241 + $0xd0] sm:$0xf] %vm1764, %v1688
        %1818 = vst.msk [vmem:[%s241 + $0xd4] sm:$0xf] %vm1764, %v1689
        %1819 = vst.msk [vmem:[%s241 + $0xd8] sm:$0xf] %vm1764, %v1690
        %1820 = vst.msk [vmem:[%s241 + $0xdc] sm:$0xf] %vm1764, %v1691
        %1821 = vst.msk [vmem:[%s241 + $0xe0] sm:$0xf] %vm1764, %v1692
        %1822 = vst.msk [vmem:[%s241 + $0xe4] sm:$0xf] %vm1764, %v1693
        %1823 = vst.msk [vmem:[%s241 + $0xe8] sm:$0xf] %vm1764, %v1694
        %1824 = vst.msk [vmem:[%s241 + $0xec] sm:$0xf] %vm1764, %v1695
        %1825 = vst.msk [vmem:[%s241 + $0xf0] sm:$0xf] %vm1764, %v1696
        %1826 = vst.msk [vmem:[%s241 + $0xf4] sm:$0xf] %vm1764, %v1697
        %1827 = vst.msk [vmem:[%s241 + $0xf8] sm:$0xf] %vm1764, %v1698
        %1828 = vst.msk [vmem:[%s241 + $0xfc] sm:$0xf] %vm1764, %v1699
        %1829 = vst.msk [vmem:[%s241 + $0x100] sm:$0xf] %vm1764, %v1700
        %1830 = vst.msk [vmem:[%s241 + $0x104] sm:$0xf] %vm1764, %v1701
        %1831 = vst.msk [vmem:[%s241 + $0x108] sm:$0xf] %vm1764, %v1702
        %1832 = vst.msk [vmem:[%s241 + $0x10c] sm:$0xf] %vm1764, %v1703
        %1833 = vst.msk [vmem:[%s241 + $0x110] sm:$0xf] %vm1764, %v1704
        %1834 = vst.msk [vmem:[%s241 + $0x114] sm:$0xf] %vm1764, %v1705
        %1835 = vst.msk [vmem:[%s241 + $0x118] sm:$0xf] %vm1764, %v1706
        %1836 = vst.msk [vmem:[%s241 + $0x11c] sm:$0xf] %vm1764, %v1707
        %1837 = vst.msk [vmem:[%s241 + $0x120] sm:$0xf] %vm1764, %v1708
        %1838 = vst.msk [vmem:[%s241 + $0x124] sm:$0xf] %vm1764, %v1709
        %1839 = vst.msk [vmem:[%s241 + $0x128] sm:$0xf] %vm1764, %v1710
        %1840 = vst.msk [vmem:[%s241 + $0x12c] sm:$0xf] %vm1764, %v1711
        %1841 = vst.msk [vmem:[%s241 + $0x130] sm:$0xf] %vm1764, %v1712
        %1842 = vst.msk [vmem:[%s241 + $0x134] sm:$0xf] %vm1764, %v1713
        %1843 = vst.msk [vmem:[%s241 + $0x138] sm:$0xf] %vm1764, %v1714
        %1844 = vst.msk [vmem:[%s241 + $0x13c] sm:$0xf] %vm1764, %v1715
        %1845 = vst.msk [vmem:[%s241 + $0x140] sm:$0xf] %vm1764, %v1716
        %1846 = vst.msk [vmem:[%s241 + $0x144] sm:$0xf] %vm1764, %v1717
        %1847 = vst.msk [vmem:[%s241 + $0x148] sm:$0xf] %vm1764, %v1718
        %1848 = vst.msk [vmem:[%s241 + $0x14c] sm:$0xf] %vm1764, %v1719
        %1849 = vst.msk [vmem:[%s241 + $0x150] sm:$0xf] %vm1764, %v1720
        %1850 = vst.msk [vmem:[%s241 + $0x154] sm:$0xf] %vm1764, %v1721
        %1851 = vst.msk [vmem:[%s241 + $0x158] sm:$0xf] %vm1764, %v1722
        %1852 = vst.msk [vmem:[%s241 + $0x15c] sm:$0xf] %vm1764, %v1723
        %1853 = vst.msk [vmem:[%s241 + $0x160] sm:$0xf] %vm1764, %v1724
        %1854 = vst.msk [vmem:[%s241 + $0x164] sm:$0xf] %vm1764, %v1725
        %1855 = vst.msk [vmem:[%s241 + $0x168] sm:$0xf] %vm1764, %v1726
        %1856 = vst.msk [vmem:[%s241 + $0x16c] sm:$0xf] %vm1764, %v1727
        %1857 = vst.msk [vmem:[%s241 + $0x170] sm:$0xf] %vm1764, %v1728
        %1858 = vst.msk [vmem:[%s241 + $0x174] sm:$0xf] %vm1764, %v1729
        %1859 = vst.msk [vmem:[%s241 + $0x178] sm:$0xf] %vm1764, %v1730
        %1860 = vst.msk [vmem:[%s241 + $0x17c] sm:$0xf] %vm1764, %v1731
        %1861 = vst.msk [vmem:[%s241 + $0x180] sm:$0xf] %vm1764, %v1732
        %1862 = vst.msk [vmem:[%s241 + $0x184] sm:$0xf] %vm1764, %v1733
        %1863 = vst.msk [vmem:[%s241 + $0x188] sm:$0xf] %vm1764, %v1734
        %1864 = vst.msk [vmem:[%s241 + $0x18c] sm:$0xf] %vm1764, %v1735
        %1865 = vst.msk [vmem:[%s241 + $0x190] sm:$0xf] %vm1764, %v1736
        %1866 = vst.msk [vmem:[%s241 + $0x194] sm:$0xf] %vm1764, %v1737
        %1867 = vst.msk [vmem:[%s241 + $0x198] sm:$0xf] %vm1764, %v1738
        %1868 = vst.msk [vmem:[%s241 + $0x19c] sm:$0xf] %vm1764, %v1739
        %1869 = vst.msk [vmem:[%s241 + $0x1a0] sm:$0xf] %vm1764, %v1740
        %1870 = vst.msk [vmem:[%s241 + $0x1a4] sm:$0xf] %vm1764, %v1741
        %1871 = vst.msk [vmem:[%s241 + $0x1a8] sm:$0xf] %vm1764, %v1742
        %1872 = vst.msk [vmem:[%s241 + $0x1ac] sm:$0xf] %vm1764, %v1743
        %1873 = vst.msk [vmem:[%s241 + $0x1b0] sm:$0xf] %vm1764, %v1744
        %1874 = vst.msk [vmem:[%s241 + $0x1b4] sm:$0xf] %vm1764, %v1745
        %1875 = vst.msk [vmem:[%s241 + $0x1b8] sm:$0xf] %vm1764, %v1746
        %1876 = vst.msk [vmem:[%s241 + $0x1bc] sm:$0xf] %vm1764, %v1747
        %1877 = vst.msk [vmem:[%s241 + $0x1c0] sm:$0xf] %vm1764, %v1748
        %1878 = vst.msk [vmem:[%s241 + $0x1c4] sm:$0xf] %vm1764, %v1749
        %1879 = vst.msk [vmem:[%s241 + $0x1c8] sm:$0xf] %vm1764, %v1750
        %1880 = vst.msk [vmem:[%s241 + $0x1cc] sm:$0xf] %vm1764, %v1751
        %1881 = vst.msk [vmem:[%s241 + $0x1d0] sm:$0xf] %vm1764, %v1752
        %1882 = vst.msk [vmem:[%s241 + $0x1d4] sm:$0xf] %vm1764, %v1753
        %1883 = vst.msk [vmem:[%s241 + $0x1d8] sm:$0xf] %vm1764, %v1754
        %1884 = vst.msk [vmem:[%s241 + $0x1dc] sm:$0xf] %vm1764, %v1755
        %1885 = vst.msk [vmem:[%s241 + $0x1e0] sm:$0xf] %vm1764, %v1756
        %1886 = vst.msk [vmem:[%s241 + $0x1e4] sm:$0xf] %vm1764, %v1757
        %1887 = vst.msk [vmem:[%s241 + $0x1e8] sm:$0xf] %vm1764, %v1758
        %1888 = vst.msk [vmem:[%s241 + $0x1ec] sm:$0xf] %vm1764, %v1759
        %1889 = vst.msk [vmem:[%s241 + $0x1f0] sm:$0xf] %vm1764, %v1760
        %1890 = vst.msk [vmem:[%s241 + $0x1f4] sm:$0xf] %vm1764, %v1761
        %1891 = vst.msk [vmem:[%s241 + $0x1f8] sm:$0xf] %vm1764, %v1762
        %1892 = vst.msk [vmem:[%s241 + $0x1fc] sm:$0xf] %vm1764, %v1763
        %s1893 = sand.u32 %s135, 1
        %s1894 = sand.u32 %s135, 1
        %s1895 = smul.addr %s1894, 512
        %s1896 = scalar_lea.vmem [#allocation4], %s1895
        // Predicated region
        $region45: #{forward.4} parent=39 // pred_check
          %p1897 = pneg %p145
        $region46: #{forward.4} parent=39 // pred_check_branch
          %1899 = sbr.rel (%p1897) target = $region48
        $region47: #{forward.4} parent=39 // pred_region
          %s1900 = smul.u32 128, %s17
          %s1901 = ssub.s32 381, %s1900
          %p1902 = scmp.lt.s32.totalorder %s1901, 128
          %s1903 = scalar_select %p1902, %s1901, 128
          %s1904 = smul.u32 4, %s1903
          %p1905 = scmp.ne.s32.totalorder 0, %s1904
          %s1906 = smul.addr %s1900, 4
          %s1907 = scalar_lea.vmem %s5, %s1906
          // Predicated region
          $region49: #{forward.4} parent=47 // pred_check
            %p1908 = pneg %p1905
          $region50: #{forward.4} parent=47 // pred_check_branch
            %1910 = sbr.rel (%p1908) target = $region52
          $region51: #{forward.4} parent=47 // pred_region
            // Predicated region
            $region53: #{forward.4} parent=51 // pred_check
              _
            $region54: #{forward.4} parent=51 // pred_check_branch
              %1912 = sbr.rel target = $region56
            $region55: #{forward.4} parent=51 // pred_region
              // Predicated region
              $region75: #{forward.4} parent=55 // pred_check
                _
              $region76: #{forward.4} parent=55 // pred_check_branch
                %2024 = sbr.rel (0) target = $region78
              $region77: #{forward.4} parent=55 // pred_region
                %s2026 = ssub.s32 16, 1
                %s2027 = sshrl.u32 %s1903, 5
                // While loop
                $region79: #{forward.4} parent=77 // loop_pre_header
                  _
                $region80: #{forward.4} parent=77 // loop_header
                  %s2029 = sphi 0, %s2031
                  %p2030 = scmp.ge.s32.totalorder %s2029, %s2027
                  %s2034 = sphi 0, %s2103
                  %s2035 = sphi %s1896, %s2106
                  %s2036 = sphi %s1907, %s2107
                $region81: #{forward.4} parent=77 // loop_header_branch
                  %2033 = sbr.rel (%p2030) target = $region85
                $region82: #{forward.4} parent=77 // loop_body
                  %v2037 = vld [vmem:[%s2035] sm:%s2026]
                  %2038 = vst [vmem:[%s2036] sm:%s2026] %v2037
                  %v2039 = vld [vmem:[%s2035 + $0x4] sm:%s2026]
                  %2040 = vst [vmem:[%s2036 + $0x4] sm:%s2026] %v2039
                  %v2041 = vld [vmem:[%s2035 + $0x8] sm:%s2026]
                  %2042 = vst [vmem:[%s2036 + $0x8] sm:%s2026] %v2041
                  %v2043 = vld [vmem:[%s2035 + $0xc] sm:%s2026]
                  %2044 = vst [vmem:[%s2036 + $0xc] sm:%s2026] %v2043
                  %v2045 = vld [vmem:[%s2035 + $0x10] sm:%s2026]
                  %2046 = vst [vmem:[%s2036 + $0x10] sm:%s2026] %v2045
                  %v2047 = vld [vmem:[%s2035 + $0x14] sm:%s2026]
                  %2048 = vst [vmem:[%s2036 + $0x14] sm:%s2026] %v2047
                  %v2049 = vld [vmem:[%s2035 + $0x18] sm:%s2026]
                  %2050 = vst [vmem:[%s2036 + $0x18] sm:%s2026] %v2049
                  %v2051 = vld [vmem:[%s2035 + $0x1c] sm:%s2026]
                  %2052 = vst [vmem:[%s2036 + $0x1c] sm:%s2026] %v2051
                  %v2053 = vld [vmem:[%s2035 + $0x20] sm:%s2026]
                  %2054 = vst [vmem:[%s2036 + $0x20] sm:%s2026] %v2053
                  %v2055 = vld [vmem:[%s2035 + $0x24] sm:%s2026]
                  %2056 = vst [vmem:[%s2036 + $0x24] sm:%s2026] %v2055
                  %v2057 = vld [vmem:[%s2035 + $0x28] sm:%s2026]
                  %2058 = vst [vmem:[%s2036 + $0x28] sm:%s2026] %v2057
                  %v2059 = vld [vmem:[%s2035 + $0x2c] sm:%s2026]
                  %2060 = vst [vmem:[%s2036 + $0x2c] sm:%s2026] %v2059
                  %v2061 = vld [vmem:[%s2035 + $0x30] sm:%s2026]
                  %2062 = vst [vmem:[%s2036 + $0x30] sm:%s2026] %v2061
                  %v2063 = vld [vmem:[%s2035 + $0x34] sm:%s2026]
                  %2064 = vst [vmem:[%s2036 + $0x34] sm:%s2026] %v2063
                  %v2065 = vld [vmem:[%s2035 + $0x38] sm:%s2026]
                  %2066 = vst [vmem:[%s2036 + $0x38] sm:%s2026] %v2065
                  %v2067 = vld [vmem:[%s2035 + $0x3c] sm:%s2026]
                  %2068 = vst [vmem:[%s2036 + $0x3c] sm:%s2026] %v2067
                  %v2069 = vld [vmem:[%s2035 + $0x40] sm:%s2026]
                  %2070 = vst [vmem:[%s2036 + $0x40] sm:%s2026] %v2069
                  %v2071 = vld [vmem:[%s2035 + $0x44] sm:%s2026]
                  %2072 = vst [vmem:[%s2036 + $0x44] sm:%s2026] %v2071
                  %v2073 = vld [vmem:[%s2035 + $0x48] sm:%s2026]
                  %2074 = vst [vmem:[%s2036 + $0x48] sm:%s2026] %v2073
                  %v2075 = vld [vmem:[%s2035 + $0x4c] sm:%s2026]
                  %2076 = vst [vmem:[%s2036 + $0x4c] sm:%s2026] %v2075
                  %v2077 = vld [vmem:[%s2035 + $0x50] sm:%s2026]
                  %2078 = vst [vmem:[%s2036 + $0x50] sm:%s2026] %v2077
                  %v2079 = vld [vmem:[%s2035 + $0x54] sm:%s2026]
                  %2080 = vst [vmem:[%s2036 + $0x54] sm:%s2026] %v2079
                  %v2081 = vld [vmem:[%s2035 + $0x58] sm:%s2026]
                  %2082 = vst [vmem:[%s2036 + $0x58] sm:%s2026] %v2081
                  %v2083 = vld [vmem:[%s2035 + $0x5c] sm:%s2026]
                  %2084 = vst [vmem:[%s2036 + $0x5c] sm:%s2026] %v2083
                  %v2085 = vld [vmem:[%s2035 + $0x60] sm:%s2026]
                  %2086 = vst [vmem:[%s2036 + $0x60] sm:%s2026] %v2085
                  %v2087 = vld [vmem:[%s2035 + $0x64] sm:%s2026]
                  %2088 = vst [vmem:[%s2036 + $0x64] sm:%s2026] %v2087
                  %v2089 = vld [vmem:[%s2035 + $0x68] sm:%s2026]
                  %2090 = vst [vmem:[%s2036 + $0x68] sm:%s2026] %v2089
                  %v2091 = vld [vmem:[%s2035 + $0x6c] sm:%s2026]
                  %2092 = vst [vmem:[%s2036 + $0x6c] sm:%s2026] %v2091
                  %v2093 = vld [vmem:[%s2035 + $0x70] sm:%s2026]
                  %2094 = vst [vmem:[%s2036 + $0x70] sm:%s2026] %v2093
                  %v2095 = vld [vmem:[%s2035 + $0x74] sm:%s2026]
                  %2096 = vst [vmem:[%s2036 + $0x74] sm:%s2026] %v2095
                  %v2097 = vld [vmem:[%s2035 + $0x78] sm:%s2026]
                  %2098 = vst [vmem:[%s2036 + $0x78] sm:%s2026] %v2097
                  %v2099 = vld [vmem:[%s2035 + $0x7c] sm:%s2026]
                  %2100 = vst [vmem:[%s2036 + $0x7c] sm:%s2026] %v2099
                  %s2101 = sadd.s32 1, %s2034
                  %p2102 = scmp.ge.s32.totalorder %s2101, %s2027
                  %s2103 = scalar_select %p2102, 0, %s2101
                  %s2104 = smul.u32 %s2103, 128
                  %s2105 = smul.u32 %s2103, 128
                  %s2106 = scalar_lea.vmem %s1896, %s2104 [#allocation4]
                  %s2107 = scalar_lea.vmem %s1907, %s2105
                $region83: #{forward.4} parent=77 // loop_footer
                  %s2031 = sadd.s32 %s2029, 1
                $region84: #{forward.4} parent=77 // loop_footer_branch
                  %2028 = sbr.rel target = $region80
                $region85: #{forward.4} parent=77 // loop_exit
                  _
                %s2108 = sshrl.u32 %s1903, 5
                %s2109 = sand.u32 %s1903, 31
                %s2110 = smul.u32 %s2108, 32
                %s2111 = smul.u32 4, %s2110
                %s2112 = scalar_lea.vmem %s1896, %s2111 [#allocation4]
                %s2113 = smul.u32 4, %s2110
                %s2114 = scalar_lea.vmem %s1907, %s2113
                // While loop
                $region86: #{forward.4} parent=77 // loop_pre_header
                  _
                $region87: #{forward.4} parent=77 // loop_header
                  %s2116 = sphi 0, %s2118
                  %p2117 = scmp.ge.s32.totalorder %s2116, %s2109
                  %s2121 = sphi 0, %s2128
                  %s2122 = sphi %s2112, %s2131
                  %s2123 = sphi %s2114, %s2132
                $region88: #{forward.4} parent=77 // loop_header_branch
                  %2120 = sbr.rel (%p2117) target = $region92
                $region89: #{forward.4} parent=77 // loop_body
                  %v2124 = vld [vmem:[%s2122] sm:%s2026]
                  %2125 = vst [vmem:[%s2123] sm:%s2026] %v2124
                  %s2126 = sadd.s32 1, %s2121
                  %p2127 = scmp.ge.s32.totalorder %s2126, %s2109
                  %s2128 = scalar_select %p2127, 0, %s2126
                  %s2129 = smul.u32 %s2128, 4
                  %s2130 = smul.u32 %s2128, 4
                  %s2131 = scalar_lea.vmem %s2112, %s2129 [#allocation4]
                  %s2132 = scalar_lea.vmem %s2114, %s2130
                $region90: #{forward.4} parent=77 // loop_footer
                  %s2118 = sadd.s32 %s2116, 1
                $region91: #{forward.4} parent=77 // loop_footer_branch
                  %2115 = sbr.rel target = $region87
                $region92: #{forward.4} parent=77 // loop_exit
                  _
              $region78: #{forward.4} parent=55 // pred_fallthru
                _
            $region56: #{forward.4} parent=51 // pred_fallthru
              _
            // Predicated region
            $region57: #{forward.4} parent=51 // pred_check
              _
            $region58: #{forward.4} parent=51 // pred_check_branch
              %1914 = sbr.rel (0) target = $region60
            $region59: #{forward.4} parent=51 // pred_region
              %s1916 = ssub.s32 16, 1
              %s1917 = sshrl.u32 %s1903, 5
              // While loop
              $region61: #{forward.4} parent=59 // loop_pre_header
                _
              $region62: #{forward.4} parent=59 // loop_header
                %s1919 = sphi 0, %s1921
                %p1920 = scmp.ge.s32.totalorder %s1919, %s1917
                %s1924 = sphi 0, %s1993
                %s1925 = sphi %s1896, %s1996
                %s1926 = sphi %s1907, %s1997
              $region63: #{forward.4} parent=59 // loop_header_branch
                %1923 = sbr.rel (%p1920) target = $region67
              $region64: #{forward.4} parent=59 // loop_body
                %v1927 = vld [vmem:[%s1925] sm:%s1916]
                %1928 = vst [vmem:[%s1926] sm:%s1916] %v1927
                %v1929 = vld [vmem:[%s1925 + $0x4] sm:%s1916]
                %1930 = vst [vmem:[%s1926 + $0x4] sm:%s1916] %v1929
                %v1931 = vld [vmem:[%s1925 + $0x8] sm:%s1916]
                %1932 = vst [vmem:[%s1926 + $0x8] sm:%s1916] %v1931
                %v1933 = vld [vmem:[%s1925 + $0xc] sm:%s1916]
                %1934 = vst [vmem:[%s1926 + $0xc] sm:%s1916] %v1933
                %v1935 = vld [vmem:[%s1925 + $0x10] sm:%s1916]
                %1936 = vst [vmem:[%s1926 + $0x10] sm:%s1916] %v1935
                %v1937 = vld [vmem:[%s1925 + $0x14] sm:%s1916]
                %1938 = vst [vmem:[%s1926 + $0x14] sm:%s1916] %v1937
                %v1939 = vld [vmem:[%s1925 + $0x18] sm:%s1916]
                %1940 = vst [vmem:[%s1926 + $0x18] sm:%s1916] %v1939
                %v1941 = vld [vmem:[%s1925 + $0x1c] sm:%s1916]
                %1942 = vst [vmem:[%s1926 + $0x1c] sm:%s1916] %v1941
                %v1943 = vld [vmem:[%s1925 + $0x20] sm:%s1916]
                %1944 = vst [vmem:[%s1926 + $0x20] sm:%s1916] %v1943
                %v1945 = vld [vmem:[%s1925 + $0x24] sm:%s1916]
                %1946 = vst [vmem:[%s1926 + $0x24] sm:%s1916] %v1945
                %v1947 = vld [vmem:[%s1925 + $0x28] sm:%s1916]
                %1948 = vst [vmem:[%s1926 + $0x28] sm:%s1916] %v1947
                %v1949 = vld [vmem:[%s1925 + $0x2c] sm:%s1916]
                %1950 = vst [vmem:[%s1926 + $0x2c] sm:%s1916] %v1949
                %v1951 = vld [vmem:[%s1925 + $0x30] sm:%s1916]
                %1952 = vst [vmem:[%s1926 + $0x30] sm:%s1916] %v1951
                %v1953 = vld [vmem:[%s1925 + $0x34] sm:%s1916]
                %1954 = vst [vmem:[%s1926 + $0x34] sm:%s1916] %v1953
                %v1955 = vld [vmem:[%s1925 + $0x38] sm:%s1916]
                %1956 = vst [vmem:[%s1926 + $0x38] sm:%s1916] %v1955
                %v1957 = vld [vmem:[%s1925 + $0x3c] sm:%s1916]
                %1958 = vst [vmem:[%s1926 + $0x3c] sm:%s1916] %v1957
                %v1959 = vld [vmem:[%s1925 + $0x40] sm:%s1916]
                %1960 = vst [vmem:[%s1926 + $0x40] sm:%s1916] %v1959
                %v1961 = vld [vmem:[%s1925 + $0x44] sm:%s1916]
                %1962 = vst [vmem:[%s1926 + $0x44] sm:%s1916] %v1961
                %v1963 = vld [vmem:[%s1925 + $0x48] sm:%s1916]
                %1964 = vst [vmem:[%s1926 + $0x48] sm:%s1916] %v1963
                %v1965 = vld [vmem:[%s1925 + $0x4c] sm:%s1916]
                %1966 = vst [vmem:[%s1926 + $0x4c] sm:%s1916] %v1965
                %v1967 = vld [vmem:[%s1925 + $0x50] sm:%s1916]
                %1968 = vst [vmem:[%s1926 + $0x50] sm:%s1916] %v1967
                %v1969 = vld [vmem:[%s1925 + $0x54] sm:%s1916]
                %1970 = vst [vmem:[%s1926 + $0x54] sm:%s1916] %v1969
                %v1971 = vld [vmem:[%s1925 + $0x58] sm:%s1916]
                %1972 = vst [vmem:[%s1926 + $0x58] sm:%s1916] %v1971
                %v1973 = vld [vmem:[%s1925 + $0x5c] sm:%s1916]
                %1974 = vst [vmem:[%s1926 + $0x5c] sm:%s1916] %v1973
                %v1975 = vld [vmem:[%s1925 + $0x60] sm:%s1916]
                %1976 = vst [vmem:[%s1926 + $0x60] sm:%s1916] %v1975
                %v1977 = vld [vmem:[%s1925 + $0x64] sm:%s1916]
                %1978 = vst [vmem:[%s1926 + $0x64] sm:%s1916] %v1977
                %v1979 = vld [vmem:[%s1925 + $0x68] sm:%s1916]
                %1980 = vst [vmem:[%s1926 + $0x68] sm:%s1916] %v1979
                %v1981 = vld [vmem:[%s1925 + $0x6c] sm:%s1916]
                %1982 = vst [vmem:[%s1926 + $0x6c] sm:%s1916] %v1981
                %v1983 = vld [vmem:[%s1925 + $0x70] sm:%s1916]
                %1984 = vst [vmem:[%s1926 + $0x70] sm:%s1916] %v1983
                %v1985 = vld [vmem:[%s1925 + $0x74] sm:%s1916]
                %1986 = vst [vmem:[%s1926 + $0x74] sm:%s1916] %v1985
                %v1987 = vld [vmem:[%s1925 + $0x78] sm:%s1916]
                %1988 = vst [vmem:[%s1926 + $0x78] sm:%s1916] %v1987
                %v1989 = vld [vmem:[%s1925 + $0x7c] sm:%s1916]
                %1990 = vst [vmem:[%s1926 + $0x7c] sm:%s1916] %v1989
                %s1991 = sadd.s32 1, %s1924
                %p1992 = scmp.ge.s32.totalorder %s1991, %s1917
                %s1993 = scalar_select %p1992, 0, %s1991
                %s1994 = smul.u32 %s1993, 128
                %s1995 = smul.u32 %s1993, 128
                %s1996 = scalar_lea.vmem %s1896, %s1994 [#allocation4]
                %s1997 = scalar_lea.vmem %s1907, %s1995
              $region65: #{forward.4} parent=59 // loop_footer
                %s1921 = sadd.s32 %s1919, 1
              $region66: #{forward.4} parent=59 // loop_footer_branch
                %1918 = sbr.rel target = $region62
              $region67: #{forward.4} parent=59 // loop_exit
                _
              %s1998 = sshrl.u32 %s1903, 5
              %s1999 = sand.u32 %s1903, 31
              %s2000 = smul.u32 %s1998, 32
              %s2001 = smul.u32 4, %s2000
              %s2002 = scalar_lea.vmem %s1896, %s2001 [#allocation4]
              %s2003 = smul.u32 4, %s2000
              %s2004 = scalar_lea.vmem %s1907, %s2003
              // While loop
              $region68: #{forward.4} parent=59 // loop_pre_header
                _
              $region69: #{forward.4} parent=59 // loop_header
                %s2006 = sphi 0, %s2008
                %p2007 = scmp.ge.s32.totalorder %s2006, %s1999
                %s2011 = sphi 0, %s2018
                %s2012 = sphi %s2002, %s2021
                %s2013 = sphi %s2004, %s2022
              $region70: #{forward.4} parent=59 // loop_header_branch
                %2010 = sbr.rel (%p2007) target = $region74
              $region71: #{forward.4} parent=59 // loop_body
                %v2014 = vld [vmem:[%s2012] sm:%s1916]
                %2015 = vst [vmem:[%s2013] sm:%s1916] %v2014
                %s2016 = sadd.s32 1, %s2011
                %p2017 = scmp.ge.s32.totalorder %s2016, %s1999
                %s2018 = scalar_select %p2017, 0, %s2016
                %s2019 = smul.u32 %s2018, 4
                %s2020 = smul.u32 %s2018, 4
                %s2021 = scalar_lea.vmem %s2002, %s2019 [#allocation4]
                %s2022 = scalar_lea.vmem %s2004, %s2020
              $region72: #{forward.4} parent=59 // loop_footer
                %s2008 = sadd.s32 %s2006, 1
              $region73: #{forward.4} parent=59 // loop_footer_branch
                %2005 = sbr.rel target = $region69
              $region74: #{forward.4} parent=59 // loop_exit
                _
            $region60: #{forward.4} parent=51 // pred_fallthru
              _
          $region52: #{forward.4} parent=47 // pred_fallthru
            _
          %2133 = vnop
        $region48: #{forward.4} parent=39 // pred_fallthru
          _
      $region40: #{forward.4} parent=5 // pred_fallthru
        _
      %p2134 = scmp.le.s32.totalorder 2, %s12
      // Predicated region
      $region93: #{forward.4} parent=5 // pred_check
        %p2135 = pneg %p2134
      $region94: #{forward.4} parent=5 // pred_check_branch
        %2137 = sbr.rel (%p2135) target = $region96
      $region95: #{forward.4} parent=5 // pred_region
        %s2138 = ssub.s32 %s12, 2
        // Predicated region
        $region97: #{forward.4} parent=95 // pred_check
          %p2139 = pneg %p151
        $region98: #{forward.4} parent=95 // pred_check_branch
          %2141 = sbr.rel (%p2139) target = $region100
        $region99: #{forward.4} parent=95 // pred_region
          %s2142 = sand.u32 %s136, 1
          %s2143 = sand.u32 %s136, 1
          %s2144 = smul.addr %s2143, 512
          %s2145 = scalar_lea.vmem [#allocation4], %s2144
        $region100: #{forward.4} parent=95 // pred_fallthru
          _
      $region96: #{forward.4} parent=5 // pred_fallthru
        _
    $region6: #{forward.4} parent=1 // loop_footer
      %s16 = sadd.s32 1, %s12
    $region7: #{forward.4} parent=1 // loop_footer_branch
      %11 = sbr.rel target = $region3
    $region8: #{forward.4} parent=1 // loop_exit
      _
    %2146 = vsyncpa [#allocation3], 1
    %s2147 = scalar_lea.sflag [#allocation3], 1
    %2148 = vsyncpa %s2147, 1

// kernel: forward.5
$region0: #{forward.5}
  #allocation0 [shape = 'u32[]', space=smem, size = 0x4, offset = 0x4, fixed_abs, tag = 'smem constant byte address 0x4 - core index']
  #allocation1 [shape = 'u32[72,128]{1,0:T(1,128)}', space=vmem, size = 0x9000, scoped, tag = 'internal scratch']
  %s0 = inlined_call_operand.vmem [shape: bf16[2888,128], index: 0, kind: input, shape index: {}]
  %s1 = inlined_call_operand.vmem [shape: bf16[128,8], index: 1, kind: input, shape index: {}]
  %s2 = inlined_call_operand.vmem [shape: f32[1,8], index: 2, kind: input, shape index: {}]
  %s3 = inlined_call_operand.vmem [shape: bf16[2888,8], index: 3, kind: output, shape index: {}]
  %s4 = sld [smem:[#allocation0]]
  $region89: #{forward.5} parent=0
    _
  %s6 = ssub.s32 1, %s4
  %s7 = scalar_select 0, %s6, %s4
  $region1: #{forward.5} parent=0
    #allocation2 [shape = 'u8[524288]{0}', space=vmem, size = 0x80000, scoped, tag = 'output window, operand 0']
    loop: start=0, step=1, limit=5
    $region2: #{forward.5} parent=1 // loop_pre_header
      _
    $region3: #{forward.5} parent=1 // loop_header
      %s9 = sphi 0, %s13
      %p10 = scmp.ge.s32.totalorder %s9, 5
      %s19 = sphi 0, %s21
      %s22 = sphi 0, %s19
      %s23 = sphi 0, %s22
      %s39 = sphi 0, %s23
      %s43 = sphi 0, %s43
      %s45 = sphi 0, %s43
      %s46 = sphi 0, %s45
      %s60 = sphi 0, %s46
      %s64 = sphi 0, %s64
      %s66 = sphi 0, %s64
      %s67 = sphi 0, %s66
      %s81 = sphi 0, %s67
      %s87 = sphi 0, %s89
      %s90 = sphi 0, %s87
      %s91 = sphi 0, %s90
      %s107 = sphi 0, %s91
    $region4: #{forward.5} parent=1 // loop_header_branch
      %12 = sbr.rel (%p10) target = $region8
    $region5: #{forward.5} parent=1 // loop_body
      %s14 = ssub.s32 %s9, 1
      %s15 = ssub.s32 %s9, 2
      %s16 = sadd.s32 %s9, 1
      %s17 = ssub.s32 %s9, %s16
      %p18 = scmp.eq.s32.totalorder %s17, 0
      %s20 = sadd.s32 %s19, 1
      %s21 = scalar_select %p18, %s19, %s20
      %p24 = pneg %p18
      %p25 = scmp.eq.s32.totalorder %s9, 2
      %p26 = por %p24, %p25
      %p27 = scmp.ne.s32.totalorder %s19, %s22
      %p28 = scmp.eq.s32.totalorder %s9, 0
      %p29 = por %p27, %p28
      %p30 = scmp.ne.s32.totalorder %s19, %s22
      %p31 = scmp.eq.s32.totalorder %s14, 2
      %p32 = por %p30, %p31
      %p33 = scmp.ne.s32.totalorder %s22, %s23
      %p34 = scmp.eq.s32.totalorder %s14, 0
      %p35 = por %p33, %p34
      %p36 = scmp.ne.s32.totalorder %s22, %s23
      %p37 = scmp.eq.s32.totalorder %s15, 2
      %p38 = por %p36, %p37
      %p40 = scmp.ne.s32.totalorder %s23, %s39
      %p41 = scmp.eq.s32.totalorder %s15, 0
      %p42 = por %p40, %p41
      %s44 = sadd.s32 %s43, 1
      %p47 = scmp.eq.s32.totalorder %s9, 2
      %p48 = scmp.ne.s32.totalorder %s43, %s45
      %p49 = scmp.eq.s32.totalorder %s9, 0
      %p50 = por %p48, %p49
      %p51 = scmp.ne.s32.totalorder %s43, %s45
      %p52 = scmp.eq.s32.totalorder %s14, 2
      %p53 = por %p51, %p52
      %p54 = scmp.ne.s32.totalorder %s45, %s46
      %p55 = scmp.eq.s32.totalorder %s14, 0
      %p56 = por %p54, %p55
      %p57 = scmp.ne.s32.totalorder %s45, %s46
      %p58 = scmp.eq.s32.totalorder %s15, 2
      %p59 = por %p57, %p58
      %p61 = scmp.ne.s32.totalorder %s46, %s60
      %p62 = scmp.eq.s32.totalorder %s15, 0
      %p63 = por %p61, %p62
      %s65 = sadd.s32 %s64, 1
      %p68 = scmp.eq.s32.totalorder %s9, 2
      %p69 = scmp.ne.s32.totalorder %s64, %s66
      %p70 = scmp.eq.s32.totalorder %s9, 0
      %p71 = por %p69, %p70
      %p72 = scmp.ne.s32.totalorder %s64, %s66
      %p73 = scmp.eq.s32.totalorder %s14, 2
      %p74 = por %p72, %p73
      %p75 = scmp.ne.s32.totalorder %s66, %s67
      %p76 = scmp.eq.s32.totalorder %s14, 0
      %p77 = por %p75, %p76
      %p78 = scmp.ne.s32.totalorder %s66, %s67
      %p79 = scmp.eq.s32.totalorder %s15, 2
      %p80 = por %p78, %p79
      %p82 = scmp.ne.s32.totalorder %s67, %s81
      %p83 = scmp.eq.s32.totalorder %s15, 0
      %p84 = por %p82, %p83
      %s85 = ssub.s32 %s9, %s16
      %p86 = scmp.eq.s32.totalorder %s85, 0
      %s88 = sadd.s32 %s87, 1
      %s89 = scalar_select %p86, %s87, %s88
      %p92 = pneg %p86
      %p93 = scmp.eq.s32.totalorder %s9, 2
      %p94 = por %p92, %p93
      %p95 = scmp.ne.s32.totalorder %s87, %s90
      %p96 = scmp.eq.s32.totalorder %s9, 0
      %p97 = por %p95, %p96
      %p98 = scmp.ne.s32.totalorder %s87, %s90
      %p99 = scmp.eq.s32.totalorder %s14, 2
      %p100 = por %p98, %p99
      %p101 = scmp.ne.s32.totalorder %s90, %s91
      %p102 = scmp.eq.s32.totalorder %s14, 0
      %p103 = por %p101, %p102
      %p104 = scmp.ne.s32.totalorder %s90, %s91
      %p105 = scmp.eq.s32.totalorder %s15, 2
      %p106 = por %p104, %p105
      %p108 = scmp.ne.s32.totalorder %s91, %s107
      %p109 = scmp.eq.s32.totalorder %s15, 0
      %p110 = por %p108, %p109
      %p111 = scmp.le.s32.totalorder 1, %s9
      %p112 = scmp.lt.s32.totalorder %s9, 4
      %p113 = pnand %p111, %p112
      %p114 = pneg %p113
      // Predicated region
      $region9: #{forward.5} parent=5 // pred_check
        _
      $region10: #{forward.5} parent=5 // pred_check_branch
        %116 = sbr.rel (%p113) target = $region12
      $region11: #{forward.5} parent=5 // pred_region
        %s117 = ssub.s32 %s9, 1
        // Predicated region
        $region13: #{forward.5} parent=11 // pred_check
          %p118 = pneg %p56
        $region14: #{forward.5} parent=11 // pred_check_branch
          %120 = sbr.rel (%p118) target = $region16
        $region15: #{forward.5} parent=11 // pred_region
          _
        $region16: #{forward.5} parent=11 // pred_fallthru
          _
        // Predicated region
        $region17: #{forward.5} parent=11 // pred_check
          %p121 = pneg %p77
        $region18: #{forward.5} parent=11 // pred_check_branch
          %123 = sbr.rel (%p121) target = $region20
        $region19: #{forward.5} parent=11 // pred_region
          _
        $region20: #{forward.5} parent=11 // pred_fallthru
          _
      $region12: #{forward.5} parent=5 // pred_fallthru
        _
      %p124 = scmp.lt.s32.totalorder %s9, 3
      // Predicated region
      $region21: #{forward.5} parent=5 // pred_check
        %p125 = pneg %p124
      $region22: #{forward.5} parent=5 // pred_check_branch
        %127 = sbr.rel (%p125) target = $region24
      $region23: #{forward.5} parent=5 // pred_region
        // Predicated region
        $region25: #{forward.5} parent=23 // pred_check
          %p128 = pneg %p29
        $region26: #{forward.5} parent=23 // pred_check_branch
          %130 = sbr.rel (%p128) target = $region28
        $region27: #{forward.5} parent=23 // pred_region
          %s131 = smul.u32 128, %s9
          %s132 = ssub.s32 361, %s131
          %p133 = scmp.lt.s32.totalorder %s132, 128
          %s134 = scalar_select %p133, %s132, 128
          %s135 = smul.u32 4, %s134
          %p136 = scmp.lt.s32.totalorder %s131, 360
          %s137 = scalar_select %p136, %s131, 360
          %s138 = smul.addr %s137, 4
          %s139 = scalar_lea.vmem %s0, %s138
          %s140 = smul.u32 128, %s9
          %s141 = ssub.s32 361, %s140
          %p142 = scmp.lt.s32.totalorder %s141, 128
          %s143 = scalar_select %p142, %s141, 128
          %s144 = smul.u32 4, %s143
        $region28: #{forward.5} parent=23 // pred_fallthru
          _
      $region24: #{forward.5} parent=5 // pred_fallthru
        _
      %p145 = scmp.le.s32.totalorder 1, %s9
      %p146 = scmp.lt.s32.totalorder %s9, 4
      %p147 = pnand %p145, %p146
      %p148 = pneg %p147
      // Predicated region
      $region29: #{forward.5} parent=5 // pred_check
        _
      $region30: #{forward.5} parent=5 // pred_check_branch
        %150 = sbr.rel (%p147) target = $region32
      $region31: #{forward.5} parent=5 // pred_region
        %s151 = ssub.s32 %s9, 1
        %s152 = smul.u32 128, %s14
        %s153 = ssub.s32 361, %s152
        %p154 = scmp.lt.s32.totalorder %s153, 128
        %s155 = scalar_select %p154, %s153, 128
        %s156 = smul.u32 4, %s155
        %p157 = scmp.lt.s32.totalorder %s152, 360
        %s158 = scalar_select %p157, %s152, 360
        %s159 = smul.addr %s158, 4
        %s160 = scalar_lea.vmem %s0, %s159
        %p161 = pneg %p35
        %p162 = pneg %p32
        %p163 = pneg %p56
        %p164 = pneg %p53
        %p165 = pneg %p77
        %p166 = pneg %p74
        %p167 = pneg %p103
        %p168 = pneg %p100
        %s169 = sand.u32 %s90, 1
        %s170 = sand.u32 %s90, 1
        %s171 = smul.addr %s170, 512
        %s172 = scalar_lea.vmem [#allocation2], %s171
        %s173 = smul.u32 128, %s14
        %s174 = ssub.s32 361, %s173
        %p175 = scmp.lt.s32.totalorder %s174, 128
        %s176 = scalar_select %p175, %s174, 128
        %s177 = smul.u32 4, %s176
        %p178 = scmp.lt.s32.totalorder %s173, 360
        %s179 = scalar_select %p178, %s173, 360
        %s180 = smul.addr %s179, 4
        %s181 = scalar_lea.vmem %s0, %s180
        %s182 = smul.u32 128, %s14
        %s183 = ssub.s32 361, %s182
        %p184 = scmp.lt.s32.totalorder %s183, 128
        %s185 = scalar_select %p184, %s183, 128
        %s186 = smul.u32 4, %s185
        %s187 = smul.u32 128, %s14
        %s188 = ssub.s32 361, %s187
        %p189 = scmp.lt.s32.totalorder %s188, 128
        %s190 = scalar_select %p189, %s188, 128
        %s191 = smul.u32 4, %s190
        %v192 = vld [vmem:[%s181] sm:$0xf]
        %v193 = vld [vmem:[%s181 + $0x4] sm:$0xf]
        %v194 = vld [vmem:[%s181 + $0x8] sm:$0xf]
        %v195 = vld [vmem:[%s181 + $0xc] sm:$0xf]
        %v196 = vld [vmem:[%s181 + $0x10] sm:$0xf]
        %v197 = vld [vmem:[%s181 + $0x14] sm:$0xf]
        %v198 = vld [vmem:[%s181 + $0x18] sm:$0xf]
        %v199 = vld [vmem:[%s181 + $0x1c] sm:$0xf]
        %v200 = vld [vmem:[%s181 + $0x20] sm:$0xf]
        %v201 = vld [vmem:[%s181 + $0x24] sm:$0xf]
        %v202 = vld [vmem:[%s181 + $0x28] sm:$0xf]
        %v203 = vld [vmem:[%s181 + $0x2c] sm:$0xf]
        %v204 = vld [vmem:[%s181 + $0x30] sm:$0xf]
        %v205 = vld [vmem:[%s181 + $0x34] sm:$0xf]
        %v206 = vld [vmem:[%s181 + $0x38] sm:$0xf]
        %v207 = vld [vmem:[%s181 + $0x3c] sm:$0xf]
        %v208 = vld [vmem:[%s181 + $0x40] sm:$0xf]
        %v209 = vld [vmem:[%s181 + $0x44] sm:$0xf]
        %v210 = vld [vmem:[%s181 + $0x48] sm:$0xf]
        %v211 = vld [vmem:[%s181 + $0x4c] sm:$0xf]
        %v212 = vld [vmem:[%s181 + $0x50] sm:$0xf]
        %v213 = vld [vmem:[%s181 + $0x54] sm:$0xf]
        %v214 = vld [vmem:[%s181 + $0x58] sm:$0xf]
        %v215 = vld [vmem:[%s181 + $0x5c] sm:$0xf]
        %v216 = vld [vmem:[%s181 + $0x60] sm:$0xf]
        %v217 = vld [vmem:[%s181 + $0x64] sm:$0xf]
        %v218 = vld [vmem:[%s181 + $0x68] sm:$0xf]
        %v219 = vld [vmem:[%s181 + $0x6c] sm:$0xf]
        %v220 = vld [vmem:[%s181 + $0x70] sm:$0xf]
        %v221 = vld [vmem:[%s181 + $0x74] sm:$0xf]
        %v222 = vld [vmem:[%s181 + $0x78] sm:$0xf]
        %v223 = vld [vmem:[%s181 + $0x7c] sm:$0xf]
        %v224 = vld [vmem:[%s181 + $0x80] sm:$0xf]
        %v225 = vld [vmem:[%s181 + $0x84] sm:$0xf]
        %v226 = vld [vmem:[%s181 + $0x88] sm:$0xf]
        %v227 = vld [vmem:[%s181 + $0x8c] sm:$0xf]
        %v228 = vld [vmem:[%s181 + $0x90] sm:$0xf]
        %v229 = vld [vmem:[%s181 + $0x94] sm:$0xf]
        %v230 = vld [vmem:[%s181 + $0x98] sm:$0xf]
        %v231 = vld [vmem:[%s181 + $0x9c] sm:$0xf]
        %v232 = vld [vmem:[%s181 + $0xa0] sm:$0xf]
        %v233 = vld [vmem:[%s181 + $0xa4] sm:$0xf]
        %v234 = vld [vmem:[%s181 + $0xa8] sm:$0xf]
        %v235 = vld [vmem:[%s181 + $0xac] sm:$0xf]
        %v236 = vld [vmem:[%s181 + $0xb0] sm:$0xf]
        %v237 = vld [vmem:[%s181 + $0xb4] sm:$0xf]
        %v238 = vld [vmem:[%s181 + $0xb8] sm:$0xf]
        %v239 = vld [vmem:[%s181 + $0xbc] sm:$0xf]
        %v240 = vld [vmem:[%s181 + $0xc0] sm:$0xf]
        %v241 = vld [vmem:[%s181 + $0xc4] sm:$0xf]
        %v242 = vld [vmem:[%s181 + $0xc8] sm:$0xf]
        %v243 = vld [vmem:[%s181 + $0xcc] sm:$0xf]
        %v244 = vld [vmem:[%s181 + $0xd0] sm:$0xf]
        %v245 = vld [vmem:[%s181 + $0xd4] sm:$0xf]
        %v246 = vld [vmem:[%s181 + $0xd8] sm:$0xf]
        %v247 = vld [vmem:[%s181 + $0xdc] sm:$0xf]
        %v248 = vld [vmem:[%s181 + $0xe0] sm:$0xf]
        %v249 = vld [vmem:[%s181 + $0xe4] sm:$0xf]
        %v250 = vld [vmem:[%s181 + $0xe8] sm:$0xf]
        %v251 = vld [vmem:[%s181 + $0xec] sm:$0xf]
        %v252 = vld [vmem:[%s181 + $0xf0] sm:$0xf]
        %v253 = vld [vmem:[%s181 + $0xf4] sm:$0xf]
        %v254 = vld [vmem:[%s181 + $0xf8] sm:$0xf]
        %v255 = vld [vmem:[%s181 + $0xfc] sm:$0xf]
        %v256 = vld [vmem:[%s181 + $0x100] sm:$0xf]
        %v257 = vld [vmem:[%s181 + $0x104] sm:$0xf]
        %v258 = vld [vmem:[%s181 + $0x108] sm:$0xf]
        %v259 = vld [vmem:[%s181 + $0x10c] sm:$0xf]
        %v260 = vld [vmem:[%s181 + $0x110] sm:$0xf]
        %v261 = vld [vmem:[%s181 + $0x114] sm:$0xf]
        %v262 = vld [vmem:[%s181 + $0x118] sm:$0xf]
        %v263 = vld [vmem:[%s181 + $0x11c] sm:$0xf]
        %v264 = vld [vmem:[%s181 + $0x120] sm:$0xf]
        %v265 = vld [vmem:[%s181 + $0x124] sm:$0xf]
        %v266 = vld [vmem:[%s181 + $0x128] sm:$0xf]
        %v267 = vld [vmem:[%s181 + $0x12c] sm:$0xf]
        %v268 = vld [vmem:[%s181 + $0x130] sm:$0xf]
        %v269 = vld [vmem:[%s181 + $0x134] sm:$0xf]
        %v270 = vld [vmem:[%s181 + $0x138] sm:$0xf]
        %v271 = vld [vmem:[%s181 + $0x13c] sm:$0xf]
        %v272 = vld [vmem:[%s181 + $0x140] sm:$0xf]
        %v273 = vld [vmem:[%s181 + $0x144] sm:$0xf]
        %v274 = vld [vmem:[%s181 + $0x148] sm:$0xf]
        %v275 = vld [vmem:[%s181 + $0x14c] sm:$0xf]
        %v276 = vld [vmem:[%s181 + $0x150] sm:$0xf]
        %v277 = vld [vmem:[%s181 + $0x154] sm:$0xf]
        %v278 = vld [vmem:[%s181 + $0x158] sm:$0xf]
        %v279 = vld [vmem:[%s181 + $0x15c] sm:$0xf]
        %v280 = vld [vmem:[%s181 + $0x160] sm:$0xf]
        %v281 = vld [vmem:[%s181 + $0x164] sm:$0xf]
        %v282 = vld [vmem:[%s181 + $0x168] sm:$0xf]
        %v283 = vld [vmem:[%s181 + $0x16c] sm:$0xf]
        %v284 = vld [vmem:[%s181 + $0x170] sm:$0xf]
        %v285 = vld [vmem:[%s181 + $0x174] sm:$0xf]
        %v286 = vld [vmem:[%s181 + $0x178] sm:$0xf]
        %v287 = vld [vmem:[%s181 + $0x17c] sm:$0xf]
        %v288 = vld [vmem:[%s181 + $0x180] sm:$0xf]
        %v289 = vld [vmem:[%s181 + $0x184] sm:$0xf]
        %v290 = vld [vmem:[%s181 + $0x188] sm:$0xf]
        %v291 = vld [vmem:[%s181 + $0x18c] sm:$0xf]
        %v292 = vld [vmem:[%s181 + $0x190] sm:$0xf]
        %v293 = vld [vmem:[%s181 + $0x194] sm:$0xf]
        %v294 = vld [vmem:[%s181 + $0x198] sm:$0xf]
        %v295 = vld [vmem:[%s181 + $0x19c] sm:$0xf]
        %v296 = vld [vmem:[%s181 + $0x1a0] sm:$0xf]
        %v297 = vld [vmem:[%s181 + $0x1a4] sm:$0xf]
        %v298 = vld [vmem:[%s181 + $0x1a8] sm:$0xf]
        %v299 = vld [vmem:[%s181 + $0x1ac] sm:$0xf]
        %v300 = vld [vmem:[%s181 + $0x1b0] sm:$0xf]
        %v301 = vld [vmem:[%s181 + $0x1b4] sm:$0xf]
        %v302 = vld [vmem:[%s181 + $0x1b8] sm:$0xf]
        %v303 = vld [vmem:[%s181 + $0x1bc] sm:$0xf]
        %v304 = vld [vmem:[%s181 + $0x1c0] sm:$0xf]
        %v305 = vld [vmem:[%s181 + $0x1c4] sm:$0xf]
        %v306 = vld [vmem:[%s181 + $0x1c8] sm:$0xf]
        %v307 = vld [vmem:[%s181 + $0x1cc] sm:$0xf]
        %v308 = vld [vmem:[%s181 + $0x1d0] sm:$0xf]
        %v309 = vld [vmem:[%s181 + $0x1d4] sm:$0xf]
        %v310 = vld [vmem:[%s181 + $0x1d8] sm:$0xf]
        %v311 = vld [vmem:[%s181 + $0x1dc] sm:$0xf]
        %v312 = vld [vmem:[%s181 + $0x1e0] sm:$0xf]
        %v313 = vld [vmem:[%s181 + $0x1e4] sm:$0xf]
        %v314 = vld [vmem:[%s181 + $0x1e8] sm:$0xf]
        %v315 = vld [vmem:[%s181 + $0x1ec] sm:$0xf]
        %v316 = vld [vmem:[%s181 + $0x1f0] sm:$0xf]
        %v317 = vld [vmem:[%s181 + $0x1f4] sm:$0xf]
        %v318 = vld [vmem:[%s181 + $0x1f8] sm:$0xf]
        %v319 = vld [vmem:[%s181 + $0x1fc] sm:$0xf]
        %v320 = vld [vmem:[%s1] sm:$0xf]
        %v321 = vld [vmem:[%s1 + $0x4] sm:$0xf]
        %v322 = vld [vmem:[%s1 + $0x8] sm:$0xf]
        %v323 = vld [vmem:[%s1 + $0xc] sm:$0xf]
        %v324 = vld [vmem:[%s1 + $0x10] sm:$0xf]
        %v325 = vld [vmem:[%s1 + $0x14] sm:$0xf]
        %v326 = vld [vmem:[%s1 + $0x18] sm:$0xf]
        %v327 = vld [vmem:[%s1 + $0x1c] sm:$0xf]
        %v328 = vld [vmem:[%s1 + $0x20] sm:$0xf]
        %v329 = vld [vmem:[%s1 + $0x24] sm:$0xf]
        %v330 = vld [vmem:[%s1 + $0x28] sm:$0xf]
        %v331 = vld [vmem:[%s1 + $0x2c] sm:$0xf]
        %v332 = vld [vmem:[%s1 + $0x30] sm:$0xf]
        %v333 = vld [vmem:[%s1 + $0x34] sm:$0xf]
        %v334 = vld [vmem:[%s1 + $0x38] sm:$0xf]
        %v335 = vld [vmem:[%s1 + $0x3c] sm:$0xf]
        %v336 = vld [vmem:[%s2] sm:$0x1]
        %v338 = vperm.slane %v336, 0
        %v468 = vunpack.c.l.b16 %v192
        %v469 = vunpack.c.l.b16 %v193
        %v470 = vunpack.c.l.b16 %v194
        %v471 = vunpack.c.l.b16 %v195
        %v472 = vunpack.c.l.b16 %v196
        %v473 = vunpack.c.l.b16 %v197
        %v474 = vunpack.c.l.b16 %v198
        %v475 = vunpack.c.l.b16 %v199
        %v476 = vunpack.c.l.b16 %v200
        %v477 = vunpack.c.l.b16 %v201
        %v478 = vunpack.c.l.b16 %v202
        %v479 = vunpack.c.l.b16 %v203
        %v480 = vunpack.c.l.b16 %v204
        %v481 = vunpack.c.l.b16 %v205
        %v482 = vunpack.c.l.b16 %v206
        %v483 = vunpack.c.l.b16 %v207
        %v484 = vunpack.c.l.b16 %v208
        %v485 = vunpack.c.l.b16 %v209
        %v486 = vunpack.c.l.b16 %v210
        %v487 = vunpack.c.l.b16 %v211
        %v488 = vunpack.c.l.b16 %v212
        %v489 = vunpack.c.l.b16 %v213
        %v490 = vunpack.c.l.b16 %v214
        %v491 = vunpack.c.l.b16 %v215
        %v492 = vunpack.c.l.b16 %v216
        %v493 = vunpack.c.l.b16 %v217
        %v494 = vunpack.c.l.b16 %v218
        %v495 = vunpack.c.l.b16 %v219
        %v496 = vunpack.c.l.b16 %v220
        %v497 = vunpack.c.l.b16 %v221
        %v498 = vunpack.c.l.b16 %v222
        %v499 = vunpack.c.l.b16 %v223
        %v500 = vunpack.c.l.b16 %v224
        %v501 = vunpack.c.l.b16 %v225
        %v502 = vunpack.c.l.b16 %v226
        %v503 = vunpack.c.l.b16 %v227
        %v504 = vunpack.c.l.b16 %v228
        %v505 = vunpack.c.l.b16 %v229
        %v506 = vunpack.c.l.b16 %v230
        %v507 = vunpack.c.l.b16 %v231
        %v508 = vunpack.c.l.b16 %v232
        %v509 = vunpack.c.l.b16 %v233
        %v510 = vunpack.c.l.b16 %v234
        %v511 = vunpack.c.l.b16 %v235
        %v512 = vunpack.c.l.b16 %v236
        %v513 = vunpack.c.l.b16 %v237
        %v514 = vunpack.c.l.b16 %v238
        %v515 = vunpack.c.l.b16 %v239
        %v516 = vunpack.c.l.b16 %v240
        %v517 = vunpack.c.l.b16 %v241
        %v518 = vunpack.c.l.b16 %v242
        %v519 = vunpack.c.l.b16 %v243
        %v520 = vunpack.c.l.b16 %v244
        %v521 = vunpack.c.l.b16 %v245
        %v522 = vunpack.c.l.b16 %v246
        %v523 = vunpack.c.l.b16 %v247
        %v524 = vunpack.c.l.b16 %v248
        %v525 = vunpack.c.l.b16 %v249
        %v526 = vunpack.c.l.b16 %v250
        %v527 = vunpack.c.l.b16 %v251
        %v528 = vunpack.c.l.b16 %v252
        %v529 = vunpack.c.l.b16 %v253
        %v530 = vunpack.c.l.b16 %v254
        %v531 = vunpack.c.l.b16 %v255
        %v532 = vunpack.c.l.b16 %v256
        %v533 = vunpack.c.l.b16 %v257
        %v534 = vunpack.c.l.b16 %v258
        %v535 = vunpack.c.l.b16 %v259
        %v536 = vunpack.c.l.b16 %v260
        %v537 = vunpack.c.l.b16 %v261
        %v538 = vunpack.c.l.b16 %v262
        %v539 = vunpack.c.l.b16 %v263
        %v540 = vunpack.c.l.b16 %v264
        %v541 = vunpack.c.l.b16 %v265
        %v542 = vunpack.c.l.b16 %v266
        %v543 = vunpack.c.l.b16 %v267
        %v544 = vunpack.c.l.b16 %v268
        %v545 = vunpack.c.l.b16 %v269
        %v546 = vunpack.c.l.b16 %v270
        %v547 = vunpack.c.l.b16 %v271
        %v548 = vunpack.c.l.b16 %v272
        %v549 = vunpack.c.l.b16 %v273
        %v550 = vunpack.c.l.b16 %v274
        %v551 = vunpack.c.l.b16 %v275
        %v552 = vunpack.c.l.b16 %v276
        %v553 = vunpack.c.l.b16 %v277
        %v554 = vunpack.c.l.b16 %v278
        %v555 = vunpack.c.l.b16 %v279
        %v556 = vunpack.c.l.b16 %v280
        %v557 = vunpack.c.l.b16 %v281
        %v558 = vunpack.c.l.b16 %v282
        %v559 = vunpack.c.l.b16 %v283
        %v560 = vunpack.c.l.b16 %v284
        %v561 = vunpack.c.l.b16 %v285
        %v562 = vunpack.c.l.b16 %v286
        %v563 = vunpack.c.l.b16 %v287
        %v564 = vunpack.c.l.b16 %v288
        %v565 = vunpack.c.l.b16 %v289
        %v566 = vunpack.c.l.b16 %v290
        %v567 = vunpack.c.l.b16 %v291
        %v568 = vunpack.c.l.b16 %v292
        %v569 = vunpack.c.l.b16 %v293
        %v570 = vunpack.c.l.b16 %v294
        %v571 = vunpack.c.l.b16 %v295
        %v572 = vunpack.c.l.b16 %v296
        %v573 = vunpack.c.l.b16 %v297
        %v574 = vunpack.c.l.b16 %v298
        %v575 = vunpack.c.l.b16 %v299
        %v576 = vunpack.c.l.b16 %v300
        %v577 = vunpack.c.l.b16 %v301
        %v578 = vunpack.c.l.b16 %v302
        %v579 = vunpack.c.l.b16 %v303
        %v580 = vunpack.c.l.b16 %v304
        %v581 = vunpack.c.l.b16 %v305
        %v582 = vunpack.c.l.b16 %v306
        %v583 = vunpack.c.l.b16 %v307
        %v584 = vunpack.c.l.b16 %v308
        %v585 = vunpack.c.l.b16 %v309
        %v586 = vunpack.c.l.b16 %v310
        %v587 = vunpack.c.l.b16 %v311
        %v588 = vunpack.c.l.b16 %v312
        %v589 = vunpack.c.l.b16 %v313
        %v590 = vunpack.c.l.b16 %v314
        %v591 = vunpack.c.l.b16 %v315
        %v592 = vunpack.c.l.b16 %v316
        %v593 = vunpack.c.l.b16 %v317
        %v594 = vunpack.c.l.b16 %v318
        %v595 = vunpack.c.l.b16 %v319
        %v596 = vpack.c.b16 %v469, %v468
        %v597 = vpack.c.b16 %v471, %v470
        %v598 = vpack.c.b16 %v473, %v472
        %v599 = vpack.c.b16 %v475, %v474
        %v600 = vpack.c.b16 %v477, %v476
        %v601 = vpack.c.b16 %v479, %v478
        %v602 = vpack.c.b16 %v481, %v480
        %v603 = vpack.c.b16 %v483, %v482
        %v604 = vpack.c.b16 %v485, %v484
        %v605 = vpack.c.b16 %v487, %v486
        %v606 = vpack.c.b16 %v489, %v488
        %v607 = vpack.c.b16 %v491, %v490
        %v608 = vpack.c.b16 %v493, %v492
        %v609 = vpack.c.b16 %v495, %v494
        %v610 = vpack.c.b16 %v497, %v496
        %v611 = vpack.c.b16 %v499, %v498
        %v612 = vpack.c.b16 %v501, %v500
        %v613 = vpack.c.b16 %v503, %v502
        %v614 = vpack.c.b16 %v505, %v504
        %v615 = vpack.c.b16 %v507, %v506
        %v616 = vpack.c.b16 %v509, %v508
        %v617 = vpack.c.b16 %v511, %v510
        %v618 = vpack.c.b16 %v513, %v512
        %v619 = vpack.c.b16 %v515, %v514
        %v620 = vpack.c.b16 %v517, %v516
        %v621 = vpack.c.b16 %v519, %v518
        %v622 = vpack.c.b16 %v521, %v520
        %v623 = vpack.c.b16 %v523, %v522
        %v624 = vpack.c.b16 %v525, %v524
        %v625 = vpack.c.b16 %v527, %v526
        %v626 = vpack.c.b16 %v529, %v528
        %v627 = vpack.c.b16 %v531, %v530
        %v628 = vpack.c.b16 %v533, %v532
        %v629 = vpack.c.b16 %v535, %v534
        %v630 = vpack.c.b16 %v537, %v536
        %v631 = vpack.c.b16 %v539, %v538
        %v632 = vpack.c.b16 %v541, %v540
        %v633 = vpack.c.b16 %v543, %v542
        %v634 = vpack.c.b16 %v545, %v544
        %v635 = vpack.c.b16 %v547, %v546
        %v636 = vpack.c.b16 %v549, %v548
        %v637 = vpack.c.b16 %v551, %v550
        %v638 = vpack.c.b16 %v553, %v552
        %v639 = vpack.c.b16 %v555, %v554
        %v640 = vpack.c.b16 %v557, %v556
        %v641 = vpack.c.b16 %v559, %v558
        %v642 = vpack.c.b16 %v561, %v560
        %v643 = vpack.c.b16 %v563, %v562
        %v644 = vpack.c.b16 %v565, %v564
        %v645 = vpack.c.b16 %v567, %v566
        %v646 = vpack.c.b16 %v569, %v568
        %v647 = vpack.c.b16 %v571, %v570
        %v648 = vpack.c.b16 %v573, %v572
        %v649 = vpack.c.b16 %v575, %v574
        %v650 = vpack.c.b16 %v577, %v576
        %v651 = vpack.c.b16 %v579, %v578
        %v652 = vpack.c.b16 %v581, %v580
        %v653 = vpack.c.b16 %v583, %v582
        %v654 = vpack.c.b16 %v585, %v584
        %v655 = vpack.c.b16 %v587, %v586
        %v656 = vpack.c.b16 %v589, %v588
        %v657 = vpack.c.b16 %v591, %v590
        %v658 = vpack.c.b16 %v593, %v592
        %v659 = vpack.c.b16 %v595, %v594
        %v740 = vunpack.c.l.b16 %v320
        %v741 = vunpack.c.l.b16 %v321
        %v742 = vunpack.c.l.b16 %v322
        %v743 = vunpack.c.l.b16 %v323
        %v744 = vunpack.c.l.b16 %v324
        %v745 = vunpack.c.l.b16 %v325
        %v746 = vunpack.c.l.b16 %v326
        %v747 = vunpack.c.l.b16 %v327
        %v748 = vunpack.c.l.b16 %v328
        %v749 = vunpack.c.l.b16 %v329
        %v750 = vunpack.c.l.b16 %v330
        %v751 = vunpack.c.l.b16 %v331
        %v752 = vunpack.c.l.b16 %v332
        %v753 = vunpack.c.l.b16 %v333
        %v754 = vunpack.c.l.b16 %v334
        %v755 = vunpack.c.l.b16 %v335
        %v756 = vpack.c.b16 %v741, %v740
        %v757 = vpack.c.b16 %v743, %v742
        %v758 = vpack.c.b16 %v745, %v744
        %v759 = vpack.c.b16 %v747, %v746
        %v760 = vpack.c.b16 %v749, %v748
        %v761 = vpack.c.b16 %v751, %v750
        %v762 = vpack.c.b16 %v753, %v752
        %v763 = vpack.c.b16 %v755, %v754
        %772 = vmatpush.bf16.msra.mxu0 %v763
        %773 = vmatpush.bf16.msra.mxu0 %v762
        %774 = vmatpush.bf16.msra.mxu0 %v761
        %775 = vmatpush.bf16.msra.mxu0 %v760
        %776 = vmatpush.bf16.msra.mxu0 %v759
        %777 = vmatpush.bf16.msra.mxu0 %v758
        %778 = vmatpush.bf16.msra.mxu0 %v757
        %779 = vmatpush.bf16.msra.mxu0 %v756
        %780 = vmatmul.bf16.gmra.mxu0 %v596
        %v781 = vpop.f32.mrf.mxu0
        %v782 = vadd.f32 %v338, %v781
        %v783 = vpop.f32.mrf.mxu0
        %v784 = vadd.f32 %v338, %v783
        %785 = vmatmul.bf16.gmra.mxu0 %v597
        %v786 = vpop.f32.mrf.mxu0
        %v787 = vadd.f32 %v338, %v786
        %v788 = vpop.f32.mrf.mxu0
        %v789 = vadd.f32 %v338, %v788
        %790 = vmatmul.bf16.gmra.mxu0 %v598
        %v791 = vpop.f32.mrf.mxu0
        %v792 = vadd.f32 %v338, %v791
        %v793 = vpop.f32.mrf.mxu0
        %v794 = vadd.f32 %v338, %v793
        %795 = vmatmul.bf16.gmra.mxu0 %v599
        %v796 = vpop.f32.mrf.mxu0
        %v797 = vadd.f32 %v338, %v796
        %v798 = vpop.f32.mrf.mxu0
        %v799 = vadd.f32 %v338, %v798
        %800 = vmatmul.bf16.gmra.mxu0 %v600
        %v801 = vpop.f32.mrf.mxu0
        %v802 = vadd.f32 %v338, %v801
        %v803 = vpop.f32.mrf.mxu0
        %v804 = vadd.f32 %v338, %v803
        %805 = vmatmul.bf16.gmra.mxu0 %v601
        %v806 = vpop.f32.mrf.mxu0
        %v807 = vadd.f32 %v338, %v806
        %v808 = vpop.f32.mrf.mxu0
        %v809 = vadd.f32 %v338, %v808
        %810 = vmatmul.bf16.gmra.mxu0 %v602
        %v811 = vpop.f32.mrf.mxu0
        %v812 = vadd.f32 %v338, %v811
        %v813 = vpop.f32.mrf.mxu0
        %v814 = vadd.f32 %v338, %v813
        %815 = vmatmul.bf16.gmra.mxu0 %v603
        %v816 = vpop.f32.mrf.mxu0
        %v817 = vadd.f32 %v338, %v816
        %v818 = vpop.f32.mrf.mxu0
        %v819 = vadd.f32 %v338, %v818
        %820 = vmatmul.bf16.gmra.mxu0 %v604
        %v821 = vpop.f32.mrf.mxu0
        %v822 = vadd.f32 %v338, %v821
        %v823 = vpop.f32.mrf.mxu0
        %v824 = vadd.f32 %v338, %v823
        %825 = vmatmul.bf16.gmra.mxu0 %v605
        %v826 = vpop.f32.mrf.mxu0
        %v827 = vadd.f32 %v338, %v826
        %v828 = vpop.f32.mrf.mxu0
        %v829 = vadd.f32 %v338, %v828
        %830 = vmatmul.bf16.gmra.mxu0 %v606
        %v831 = vpop.f32.mrf.mxu0
        %v832 = vadd.f32 %v338, %v831
        %v833 = vpop.f32.mrf.mxu0
        %v834 = vadd.f32 %v338, %v833
        %835 = vmatmul.bf16.gmra.mxu0 %v607
        %v836 = vpop.f32.mrf.mxu0
        %v837 = vadd.f32 %v338, %v836
        %v838 = vpop.f32.mrf.mxu0
        %v839 = vadd.f32 %v338, %v838
        %840 = vmatmul.bf16.gmra.mxu0 %v608
        %v841 = vpop.f32.mrf.mxu0
        %v842 = vadd.f32 %v338, %v841
        %v843 = vpop.f32.mrf.mxu0
        %v844 = vadd.f32 %v338, %v843
        %845 = vmatmul.bf16.gmra.mxu0 %v609
        %v846 = vpop.f32.mrf.mxu0
        %v847 = vadd.f32 %v338, %v846
        %v848 = vpop.f32.mrf.mxu0
        %v849 = vadd.f32 %v338, %v848
        %850 = vmatmul.bf16.gmra.mxu0 %v610
        %v851 = vpop.f32.mrf.mxu0
        %v852 = vadd.f32 %v338, %v851
        %v853 = vpop.f32.mrf.mxu0
        %v854 = vadd.f32 %v338, %v853
        %855 = vmatmul.bf16.gmra.mxu0 %v611
        %v856 = vpop.f32.mrf.mxu0
        %v857 = vadd.f32 %v338, %v856
        %v858 = vpop.f32.mrf.mxu0
        %v859 = vadd.f32 %v338, %v858
        %860 = vmatmul.bf16.gmra.mxu0 %v612
        %v861 = vpop.f32.mrf.mxu0
        %v862 = vadd.f32 %v338, %v861
        %v863 = vpop.f32.mrf.mxu0
        %v864 = vadd.f32 %v338, %v863
        %865 = vmatmul.bf16.gmra.mxu0 %v613
        %v866 = vpop.f32.mrf.mxu0
        %v867 = vadd.f32 %v338, %v866
        %v868 = vpop.f32.mrf.mxu0
        %v869 = vadd.f32 %v338, %v868
        %870 = vmatmul.bf16.gmra.mxu0 %v614
        %v871 = vpop.f32.mrf.mxu0
        %v872 = vadd.f32 %v338, %v871
        %v873 = vpop.f32.mrf.mxu0
        %v874 = vadd.f32 %v338, %v873
        %875 = vmatmul.bf16.gmra.mxu0 %v615
        %v876 = vpop.f32.mrf.mxu0
        %v877 = vadd.f32 %v338, %v876
        %v878 = vpop.f32.mrf.mxu0
        %v879 = vadd.f32 %v338, %v878
        %880 = vmatmul.bf16.gmra.mxu0 %v616
        %v881 = vpop.f32.mrf.mxu0
        %v882 = vadd.f32 %v338, %v881
        %v883 = vpop.f32.mrf.mxu0
        %v884 = vadd.f32 %v338, %v883
        %885 = vmatmul.bf16.gmra.mxu0 %v617
        %v886 = vpop.f32.mrf.mxu0
        %v887 = vadd.f32 %v338, %v886
        %v888 = vpop.f32.mrf.mxu0
        %v889 = vadd.f32 %v338, %v888
        %890 = vmatmul.bf16.gmra.mxu0 %v618
        %v891 = vpop.f32.mrf.mxu0
        %v892 = vadd.f32 %v338, %v891
        %v893 = vpop.f32.mrf.mxu0
        %v894 = vadd.f32 %v338, %v893
        %895 = vmatmul.bf16.gmra.mxu0 %v619
        %v896 = vpop.f32.mrf.mxu0
        %v897 = vadd.f32 %v338, %v896
        %v898 = vpop.f32.mrf.mxu0
        %v899 = vadd.f32 %v338, %v898
        %900 = vmatmul.bf16.gmra.mxu0 %v620
        %v901 = vpop.f32.mrf.mxu0
        %v902 = vadd.f32 %v338, %v901
        %v903 = vpop.f32.mrf.mxu0
        %v904 = vadd.f32 %v338, %v903
        %905 = vmatmul.bf16.gmra.mxu0 %v621
        %v906 = vpop.f32.mrf.mxu0
        %v907 = vadd.f32 %v338, %v906
        %v908 = vpop.f32.mrf.mxu0
        %v909 = vadd.f32 %v338, %v908
        %910 = vmatmul.bf16.gmra.mxu0 %v622
        %v911 = vpop.f32.mrf.mxu0
        %v912 = vadd.f32 %v338, %v911
        %v913 = vpop.f32.mrf.mxu0
        %v914 = vadd.f32 %v338, %v913
        %915 = vmatmul.bf16.gmra.mxu0 %v623
        %v916 = vpop.f32.mrf.mxu0
        %v917 = vadd.f32 %v338, %v916
        %v918 = vpop.f32.mrf.mxu0
        %v919 = vadd.f32 %v338, %v918
        %920 = vmatmul.bf16.gmra.mxu0 %v624
        %v921 = vpop.f32.mrf.mxu0
        %v922 = vadd.f32 %v338, %v921
        %v923 = vpop.f32.mrf.mxu0
        %v924 = vadd.f32 %v338, %v923
        %925 = vmatmul.bf16.gmra.mxu0 %v625
        %v926 = vpop.f32.mrf.mxu0
        %v927 = vadd.f32 %v338, %v926
        %v928 = vpop.f32.mrf.mxu0
        %v929 = vadd.f32 %v338, %v928
        %930 = vmatmul.bf16.gmra.mxu0 %v626
        %v931 = vpop.f32.mrf.mxu0
        %v932 = vadd.f32 %v338, %v931
        %v933 = vpop.f32.mrf.mxu0
        %v934 = vadd.f32 %v338, %v933
        %935 = vmatmul.bf16.gmra.mxu0 %v627
        %v936 = vpop.f32.mrf.mxu0
        %v937 = vadd.f32 %v338, %v936
        %v938 = vpop.f32.mrf.mxu0
        %v939 = vadd.f32 %v338, %v938
        %940 = vmatmul.bf16.gmra.mxu0 %v628
        %v941 = vpop.f32.mrf.mxu0
        %v942 = vadd.f32 %v338, %v941
        %v943 = vpop.f32.mrf.mxu0
        %v944 = vadd.f32 %v338, %v943
        %945 = vmatmul.bf16.gmra.mxu0 %v629
        %v946 = vpop.f32.mrf.mxu0
        %v947 = vadd.f32 %v338, %v946
        %v948 = vpop.f32.mrf.mxu0
        %v949 = vadd.f32 %v338, %v948
        %950 = vmatmul.bf16.gmra.mxu0 %v630
        %v951 = vpop.f32.mrf.mxu0
        %v952 = vadd.f32 %v338, %v951
        %v953 = vpop.f32.mrf.mxu0
        %v954 = vadd.f32 %v338, %v953
        %955 = vmatmul.bf16.gmra.mxu0 %v631
        %v956 = vpop.f32.mrf.mxu0
        %v957 = vadd.f32 %v338, %v956
        %v958 = vpop.f32.mrf.mxu0
        %v959 = vadd.f32 %v338, %v958
        %960 = vmatmul.bf16.gmra.mxu0 %v632
        %v961 = vpop.f32.mrf.mxu0
        %v962 = vadd.f32 %v338, %v961
        %v963 = vpop.f32.mrf.mxu0
        %v964 = vadd.f32 %v338, %v963
        %965 = vmatmul.bf16.gmra.mxu0 %v633
        %v966 = vpop.f32.mrf.mxu0
        %v967 = vadd.f32 %v338, %v966
        %v968 = vpop.f32.mrf.mxu0
        %v969 = vadd.f32 %v338, %v968
        %970 = vmatmul.bf16.gmra.mxu0 %v634
        %v971 = vpop.f32.mrf.mxu0
        %v972 = vadd.f32 %v338, %v971
        %v973 = vpop.f32.mrf.mxu0
        %v974 = vadd.f32 %v338, %v973
        %975 = vmatmul.bf16.gmra.mxu0 %v635
        %v976 = vpop.f32.mrf.mxu0
        %v977 = vadd.f32 %v338, %v976
        %v978 = vpop.f32.mrf.mxu0
        %v979 = vadd.f32 %v338, %v978
        %980 = vmatmul.bf16.gmra.mxu0 %v636
        %v981 = vpop.f32.mrf.mxu0
        %v982 = vadd.f32 %v338, %v981
        %v983 = vpop.f32.mrf.mxu0
        %v984 = vadd.f32 %v338, %v983
        %985 = vmatmul.bf16.gmra.mxu0 %v637
        %v986 = vpop.f32.mrf.mxu0
        %v987 = vadd.f32 %v338, %v986
        %v988 = vpop.f32.mrf.mxu0
        %v989 = vadd.f32 %v338, %v988
        %990 = vmatmul.bf16.gmra.mxu0 %v638
        %v991 = vpop.f32.mrf.mxu0
        %v992 = vadd.f32 %v338, %v991
        %v993 = vpop.f32.mrf.mxu0
        %v994 = vadd.f32 %v338, %v993
        %995 = vmatmul.bf16.gmra.mxu0 %v639
        %v996 = vpop.f32.mrf.mxu0
        %v997 = vadd.f32 %v338, %v996
        %v998 = vpop.f32.mrf.mxu0
        %v999 = vadd.f32 %v338, %v998
        %1000 = vmatmul.bf16.gmra.mxu0 %v640
        %v1001 = vpop.f32.mrf.mxu0
        %v1002 = vadd.f32 %v338, %v1001
        %v1003 = vpop.f32.mrf.mxu0
        %v1004 = vadd.f32 %v338, %v1003
        %1005 = vmatmul.bf16.gmra.mxu0 %v641
        %v1006 = vpop.f32.mrf.mxu0
        %v1007 = vadd.f32 %v338, %v1006
        %v1008 = vpop.f32.mrf.mxu0
        %v1009 = vadd.f32 %v338, %v1008
        %1010 = vmatmul.bf16.gmra.mxu0 %v642
        %v1011 = vpop.f32.mrf.mxu0
        %v1012 = vadd.f32 %v338, %v1011
        %v1013 = vpop.f32.mrf.mxu0
        %v1014 = vadd.f32 %v338, %v1013
        %1015 = vmatmul.bf16.gmra.mxu0 %v643
        %v1016 = vpop.f32.mrf.mxu0
        %v1017 = vadd.f32 %v338, %v1016
        %v1018 = vpop.f32.mrf.mxu0
        %v1019 = vadd.f32 %v338, %v1018
        %1020 = vmatmul.bf16.gmra.mxu0 %v644
        %v1021 = vpop.f32.mrf.mxu0
        %v1022 = vadd.f32 %v338, %v1021
        %v1023 = vpop.f32.mrf.mxu0
        %v1024 = vadd.f32 %v338, %v1023
        %1025 = vmatmul.bf16.gmra.mxu0 %v645
        %v1026 = vpop.f32.mrf.mxu0
        %v1027 = vadd.f32 %v338, %v1026
        %v1028 = vpop.f32.mrf.mxu0
        %v1029 = vadd.f32 %v338, %v1028
        %1030 = vmatmul.bf16.gmra.mxu0 %v646
        %v1031 = vpop.f32.mrf.mxu0
        %v1032 = vadd.f32 %v338, %v1031
        %v1033 = vpop.f32.mrf.mxu0
        %v1034 = vadd.f32 %v338, %v1033
        %1035 = vmatmul.bf16.gmra.mxu0 %v647
        %v1036 = vpop.f32.mrf.mxu0
        %v1037 = vadd.f32 %v338, %v1036
        %v1038 = vpop.f32.mrf.mxu0
        %v1039 = vadd.f32 %v338, %v1038
        %1040 = vmatmul.bf16.gmra.mxu0 %v648
        %v1041 = vpop.f32.mrf.mxu0
        %v1042 = vadd.f32 %v338, %v1041
        %v1043 = vpop.f32.mrf.mxu0
        %v1044 = vadd.f32 %v338, %v1043
        %1045 = vmatmul.bf16.gmra.mxu0 %v649
        %v1046 = vpop.f32.mrf.mxu0
        %v1047 = vadd.f32 %v338, %v1046
        %v1048 = vpop.f32.mrf.mxu0
        %v1049 = vadd.f32 %v338, %v1048
        %1050 = vmatmul.bf16.gmra.mxu0 %v650
        %v1051 = vpop.f32.mrf.mxu0
        %v1052 = vadd.f32 %v338, %v1051
        %v1053 = vpop.f32.mrf.mxu0
        %v1054 = vadd.f32 %v338, %v1053
        %1055 = vmatmul.bf16.gmra.mxu0 %v651
        %v1056 = vpop.f32.mrf.mxu0
        %v1057 = vadd.f32 %v338, %v1056
        %v1058 = vpop.f32.mrf.mxu0
        %v1059 = vadd.f32 %v338, %v1058
        %1060 = vmatmul.bf16.gmra.mxu0 %v652
        %v1061 = vpop.f32.mrf.mxu0
        %v1062 = vadd.f32 %v338, %v1061
        %v1063 = vpop.f32.mrf.mxu0
        %v1064 = vadd.f32 %v338, %v1063
        %1065 = vmatmul.bf16.gmra.mxu0 %v653
        %v1066 = vpop.f32.mrf.mxu0
        %v1067 = vadd.f32 %v338, %v1066
        %v1068 = vpop.f32.mrf.mxu0
        %v1069 = vadd.f32 %v338, %v1068
        %1070 = vmatmul.bf16.gmra.mxu0 %v654
        %v1071 = vpop.f32.mrf.mxu0
        %v1072 = vadd.f32 %v338, %v1071
        %v1073 = vpop.f32.mrf.mxu0
        %v1074 = vadd.f32 %v338, %v1073
        %1075 = vmatmul.bf16.gmra.mxu0 %v655
        %v1076 = vpop.f32.mrf.mxu0
        %v1077 = vadd.f32 %v338, %v1076
        %v1078 = vpop.f32.mrf.mxu0
        %v1079 = vadd.f32 %v338, %v1078
        %1080 = vmatmul.bf16.gmra.mxu0 %v656
        %v1081 = vpop.f32.mrf.mxu0
        %v1082 = vadd.f32 %v338, %v1081
        %v1083 = vpop.f32.mrf.mxu0
        %v1084 = vadd.f32 %v338, %v1083
        %1085 = vmatmul.bf16.gmra.mxu0 %v657
        %v1086 = vpop.f32.mrf.mxu0
        %v1087 = vadd.f32 %v338, %v1086
        %v1088 = vpop.f32.mrf.mxu0
        %v1089 = vadd.f32 %v338, %v1088
        %1090 = vmatmul.bf16.gmra.mxu0 %v658
        %v1091 = vpop.f32.mrf.mxu0
        %v1092 = vadd.f32 %v338, %v1091
        %v1093 = vpop.f32.mrf.mxu0
        %v1094 = vadd.f32 %v338, %v1093
        %1095 = vmatmul.bf16.gmra.mxu0 %v659
        %v1096 = vpop.f32.mrf.mxu0
        %v1097 = vadd.f32 %v338, %v1096
        %v1098 = vpop.f32.mrf.mxu0
        %v1099 = vadd.f32 %v338, %v1098
        %1100 = vdwg.mxu0
        %v1101 = vmax.f32 %v782, 0.0
        %v1102 = vmax.f32 %v784, 0.0
        %v1103 = vmax.f32 %v787, 0.0
        %v1104 = vmax.f32 %v789, 0.0
        %v1105 = vmax.f32 %v792, 0.0
        %v1106 = vmax.f32 %v794, 0.0
        %v1107 = vmax.f32 %v797, 0.0
        %v1108 = vmax.f32 %v799, 0.0
        %v1109 = vmax.f32 %v802, 0.0
        %v1110 = vmax.f32 %v804, 0.0
        %v1111 = vmax.f32 %v807, 0.0
        %v1112 = vmax.f32 %v809, 0.0
        %v1113 = vmax.f32 %v812, 0.0
        %v1114 = vmax.f32 %v814, 0.0
        %v1115 = vmax.f32 %v817, 0.0
        %v1116 = vmax.f32 %v819, 0.0
        %v1117 = vmax.f32 %v822, 0.0
        %v1118 = vmax.f32 %v824, 0.0
        %v1119 = vmax.f32 %v827, 0.0
        %v1120 = vmax.f32 %v829, 0.0
        %v1121 = vmax.f32 %v832, 0.0
        %v1122 = vmax.f32 %v834, 0.0
        %v1123 = vmax.f32 %v837, 0.0
        %v1124 = vmax.f32 %v839, 0.0
        %v1125 = vmax.f32 %v842, 0.0
        %v1126 = vmax.f32 %v844, 0.0
        %v1127 = vmax.f32 %v847, 0.0
        %v1128 = vmax.f32 %v849, 0.0
        %v1129 = vmax.f32 %v852, 0.0
        %v1130 = vmax.f32 %v854, 0.0
        %v1131 = vmax.f32 %v857, 0.0
        %v1132 = vmax.f32 %v859, 0.0
        %v1133 = vmax.f32 %v862, 0.0
        %v1134 = vmax.f32 %v864, 0.0
        %v1135 = vmax.f32 %v867, 0.0
        %v1136 = vmax.f32 %v869, 0.0
        %v1137 = vmax.f32 %v872, 0.0
        %v1138 = vmax.f32 %v874, 0.0
        %v1139 = vmax.f32 %v877, 0.0
        %v1140 = vmax.f32 %v879, 0.0
        %v1141 = vmax.f32 %v882, 0.0
        %v1142 = vmax.f32 %v884, 0.0
        %v1143 = vmax.f32 %v887, 0.0
        %v1144 = vmax.f32 %v889, 0.0
        %v1145 = vmax.f32 %v892, 0.0
        %v1146 = vmax.f32 %v894, 0.0
        %v1147 = vmax.f32 %v897, 0.0
        %v1148 = vmax.f32 %v899, 0.0
        %v1149 = vmax.f32 %v902, 0.0
        %v1150 = vmax.f32 %v904, 0.0
        %v1151 = vmax.f32 %v907, 0.0
        %v1152 = vmax.f32 %v909, 0.0
        %v1153 = vmax.f32 %v912, 0.0
        %v1154 = vmax.f32 %v914, 0.0
        %v1155 = vmax.f32 %v917, 0.0
        %v1156 = vmax.f32 %v919, 0.0
        %v1157 = vmax.f32 %v922, 0.0
        %v1158 = vmax.f32 %v924, 0.0
        %v1159 = vmax.f32 %v927, 0.0
        %v1160 = vmax.f32 %v929, 0.0
        %v1161 = vmax.f32 %v932, 0.0
        %v1162 = vmax.f32 %v934, 0.0
        %v1163 = vmax.f32 %v937, 0.0
        %v1164 = vmax.f32 %v939, 0.0
        %v1165 = vmax.f32 %v942, 0.0
        %v1166 = vmax.f32 %v944, 0.0
        %v1167 = vmax.f32 %v947, 0.0
        %v1168 = vmax.f32 %v949, 0.0
        %v1169 = vmax.f32 %v952, 0.0
        %v1170 = vmax.f32 %v954, 0.0
        %v1171 = vmax.f32 %v957, 0.0
        %v1172 = vmax.f32 %v959, 0.0
        %v1173 = vmax.f32 %v962, 0.0
        %v1174 = vmax.f32 %v964, 0.0
        %v1175 = vmax.f32 %v967, 0.0
        %v1176 = vmax.f32 %v969, 0.0
        %v1177 = vmax.f32 %v972, 0.0
        %v1178 = vmax.f32 %v974, 0.0
        %v1179 = vmax.f32 %v977, 0.0
        %v1180 = vmax.f32 %v979, 0.0
        %v1181 = vmax.f32 %v982, 0.0
        %v1182 = vmax.f32 %v984, 0.0
        %v1183 = vmax.f32 %v987, 0.0
        %v1184 = vmax.f32 %v989, 0.0
        %v1185 = vmax.f32 %v992, 0.0
        %v1186 = vmax.f32 %v994, 0.0
        %v1187 = vmax.f32 %v997, 0.0
        %v1188 = vmax.f32 %v999, 0.0
        %v1189 = vmax.f32 %v1002, 0.0
        %v1190 = vmax.f32 %v1004, 0.0
        %v1191 = vmax.f32 %v1007, 0.0
        %v1192 = vmax.f32 %v1009, 0.0
        %v1193 = vmax.f32 %v1012, 0.0
        %v1194 = vmax.f32 %v1014, 0.0
        %v1195 = vmax.f32 %v1017, 0.0
        %v1196 = vmax.f32 %v1019, 0.0
        %v1197 = vmax.f32 %v1022, 0.0
        %v1198 = vmax.f32 %v1024, 0.0
        %v1199 = vmax.f32 %v1027, 0.0
        %v1200 = vmax.f32 %v1029, 0.0
        %v1201 = vmax.f32 %v1032, 0.0
        %v1202 = vmax.f32 %v1034, 0.0
        %v1203 = vmax.f32 %v1037, 0.0
        %v1204 = vmax.f32 %v1039, 0.0
        %v1205 = vmax.f32 %v1042, 0.0
        %v1206 = vmax.f32 %v1044, 0.0
        %v1207 = vmax.f32 %v1047, 0.0
        %v1208 = vmax.f32 %v1049, 0.0
        %v1209 = vmax.f32 %v1052, 0.0
        %v1210 = vmax.f32 %v1054, 0.0
        %v1211 = vmax.f32 %v1057, 0.0
        %v1212 = vmax.f32 %v1059, 0.0
        %v1213 = vmax.f32 %v1062, 0.0
        %v1214 = vmax.f32 %v1064, 0.0
        %v1215 = vmax.f32 %v1067, 0.0
        %v1216 = vmax.f32 %v1069, 0.0
        %v1217 = vmax.f32 %v1072, 0.0
        %v1218 = vmax.f32 %v1074, 0.0
        %v1219 = vmax.f32 %v1077, 0.0
        %v1220 = vmax.f32 %v1079, 0.0
        %v1221 = vmax.f32 %v1082, 0.0
        %v1222 = vmax.f32 %v1084, 0.0
        %v1223 = vmax.f32 %v1087, 0.0
        %v1224 = vmax.f32 %v1089, 0.0
        %v1225 = vmax.f32 %v1092, 0.0
        %v1226 = vmax.f32 %v1094, 0.0
        %v1227 = vmax.f32 %v1097, 0.0
        %v1228 = vmax.f32 %v1099, 0.0
        %v1229 = vpack.c.bf16 %v1101, %v1101
        %v1230 = vpack.c.bf16 %v1102, %v1102
        %v1231 = vpack.c.bf16 %v1103, %v1103
        %v1232 = vpack.c.bf16 %v1104, %v1104
        %v1233 = vpack.c.bf16 %v1105, %v1105
        %v1234 = vpack.c.bf16 %v1106, %v1106
        %v1235 = vpack.c.bf16 %v1107, %v1107
        %v1236 = vpack.c.bf16 %v1108, %v1108
        %v1237 = vpack.c.bf16 %v1109, %v1109
        %v1238 = vpack.c.bf16 %v1110, %v1110
        %v1239 = vpack.c.bf16 %v1111, %v1111
        %v1240 = vpack.c.bf16 %v1112, %v1112
        %v1241 = vpack.c.bf16 %v1113, %v1113
        %v1242 = vpack.c.bf16 %v1114, %v1114
        %v1243 = vpack.c.bf16 %v1115, %v1115
        %v1244 = vpack.c.bf16 %v1116, %v1116
        %v1245 = vpack.c.bf16 %v1117, %v1117
        %v1246 = vpack.c.bf16 %v1118, %v1118
        %v1247 = vpack.c.bf16 %v1119, %v1119
        %v1248 = vpack.c.bf16 %v1120, %v1120
        %v1249 = vpack.c.bf16 %v1121, %v1121
        %v1250 = vpack.c.bf16 %v1122, %v1122
        %v1251 = vpack.c.bf16 %v1123, %v1123
        %v1252 = vpack.c.bf16 %v1124, %v1124
        %v1253 = vpack.c.bf16 %v1125, %v1125
        %v1254 = vpack.c.bf16 %v1126, %v1126
        %v1255 = vpack.c.bf16 %v1127, %v1127
        %v1256 = vpack.c.bf16 %v1128, %v1128
        %v1257 = vpack.c.bf16 %v1129, %v1129
        %v1258 = vpack.c.bf16 %v1130, %v1130
        %v1259 = vpack.c.bf16 %v1131, %v1131
        %v1260 = vpack.c.bf16 %v1132, %v1132
        %v1261 = vpack.c.bf16 %v1133, %v1133
        %v1262 = vpack.c.bf16 %v1134, %v1134
        %v1263 = vpack.c.bf16 %v1135, %v1135
        %v1264 = vpack.c.bf16 %v1136, %v1136
        %v1265 = vpack.c.bf16 %v1137, %v1137
        %v1266 = vpack.c.bf16 %v1138, %v1138
        %v1267 = vpack.c.bf16 %v1139, %v1139
        %v1268 = vpack.c.bf16 %v1140, %v1140
        %v1269 = vpack.c.bf16 %v1141, %v1141
        %v1270 = vpack.c.bf16 %v1142, %v1142
        %v1271 = vpack.c.bf16 %v1143, %v1143
        %v1272 = vpack.c.bf16 %v1144, %v1144
        %v1273 = vpack.c.bf16 %v1145, %v1145
        %v1274 = vpack.c.bf16 %v1146, %v1146
        %v1275 = vpack.c.bf16 %v1147, %v1147
        %v1276 = vpack.c.bf16 %v1148, %v1148
        %v1277 = vpack.c.bf16 %v1149, %v1149
        %v1278 = vpack.c.bf16 %v1150, %v1150
        %v1279 = vpack.c.bf16 %v1151, %v1151
        %v1280 = vpack.c.bf16 %v1152, %v1152
        %v1281 = vpack.c.bf16 %v1153, %v1153
        %v1282 = vpack.c.bf16 %v1154, %v1154
        %v1283 = vpack.c.bf16 %v1155, %v1155
        %v1284 = vpack.c.bf16 %v1156, %v1156
        %v1285 = vpack.c.bf16 %v1157, %v1157
        %v1286 = vpack.c.bf16 %v1158, %v1158
        %v1287 = vpack.c.bf16 %v1159, %v1159
        %v1288 = vpack.c.bf16 %v1160, %v1160
        %v1289 = vpack.c.bf16 %v1161, %v1161
        %v1290 = vpack.c.bf16 %v1162, %v1162
        %v1291 = vpack.c.bf16 %v1163, %v1163
        %v1292 = vpack.c.bf16 %v1164, %v1164
        %v1293 = vpack.c.bf16 %v1165, %v1165
        %v1294 = vpack.c.bf16 %v1166, %v1166
        %v1295 = vpack.c.bf16 %v1167, %v1167
        %v1296 = vpack.c.bf16 %v1168, %v1168
        %v1297 = vpack.c.bf16 %v1169, %v1169
        %v1298 = vpack.c.bf16 %v1170, %v1170
        %v1299 = vpack.c.bf16 %v1171, %v1171
        %v1300 = vpack.c.bf16 %v1172, %v1172
        %v1301 = vpack.c.bf16 %v1173, %v1173
        %v1302 = vpack.c.bf16 %v1174, %v1174
        %v1303 = vpack.c.bf16 %v1175, %v1175
        %v1304 = vpack.c.bf16 %v1176, %v1176
        %v1305 = vpack.c.bf16 %v1177, %v1177
        %v1306 = vpack.c.bf16 %v1178, %v1178
        %v1307 = vpack.c.bf16 %v1179, %v1179
        %v1308 = vpack.c.bf16 %v1180, %v1180
        %v1309 = vpack.c.bf16 %v1181, %v1181
        %v1310 = vpack.c.bf16 %v1182, %v1182
        %v1311 = vpack.c.bf16 %v1183, %v1183
        %v1312 = vpack.c.bf16 %v1184, %v1184
        %v1313 = vpack.c.bf16 %v1185, %v1185
        %v1314 = vpack.c.bf16 %v1186, %v1186
        %v1315 = vpack.c.bf16 %v1187, %v1187
        %v1316 = vpack.c.bf16 %v1188, %v1188
        %v1317 = vpack.c.bf16 %v1189, %v1189
        %v1318 = vpack.c.bf16 %v1190, %v1190
        %v1319 = vpack.c.bf16 %v1191, %v1191
        %v1320 = vpack.c.bf16 %v1192, %v1192
        %v1321 = vpack.c.bf16 %v1193, %v1193
        %v1322 = vpack.c.bf16 %v1194, %v1194
        %v1323 = vpack.c.bf16 %v1195, %v1195
        %v1324 = vpack.c.bf16 %v1196, %v1196
        %v1325 = vpack.c.bf16 %v1197, %v1197
        %v1326 = vpack.c.bf16 %v1198, %v1198
        %v1327 = vpack.c.bf16 %v1199, %v1199
        %v1328 = vpack.c.bf16 %v1200, %v1200
        %v1329 = vpack.c.bf16 %v1201, %v1201
        %v1330 = vpack.c.bf16 %v1202, %v1202
        %v1331 = vpack.c.bf16 %v1203, %v1203
        %v1332 = vpack.c.bf16 %v1204, %v1204
        %v1333 = vpack.c.bf16 %v1205, %v1205
        %v1334 = vpack.c.bf16 %v1206, %v1206
        %v1335 = vpack.c.bf16 %v1207, %v1207
        %v1336 = vpack.c.bf16 %v1208, %v1208
        %v1337 = vpack.c.bf16 %v1209, %v1209
        %v1338 = vpack.c.bf16 %v1210, %v1210
        %v1339 = vpack.c.bf16 %v1211, %v1211
        %v1340 = vpack.c.bf16 %v1212, %v1212
        %v1341 = vpack.c.bf16 %v1213, %v1213
        %v1342 = vpack.c.bf16 %v1214, %v1214
        %v1343 = vpack.c.bf16 %v1215, %v1215
        %v1344 = vpack.c.bf16 %v1216, %v1216
        %v1345 = vpack.c.bf16 %v1217, %v1217
        %v1346 = vpack.c.bf16 %v1218, %v1218
        %v1347 = vpack.c.bf16 %v1219, %v1219
        %v1348 = vpack.c.bf16 %v1220, %v1220
        %v1349 = vpack.c.bf16 %v1221, %v1221
        %v1350 = vpack.c.bf16 %v1222, %v1222
        %v1351 = vpack.c.bf16 %v1223, %v1223
        %v1352 = vpack.c.bf16 %v1224, %v1224
        %v1353 = vpack.c.bf16 %v1225, %v1225
        %v1354 = vpack.c.bf16 %v1226, %v1226
        %v1355 = vpack.c.bf16 %v1227, %v1227
        %v1356 = vpack.c.bf16 %v1228, %v1228
        %vm1357 = vcmask 60416
        %1358 = vst.msk [vmem:[%s172] sm:$0xf] %vm1357, %v1229
        %1359 = vst.msk [vmem:[%s172 + $0x4] sm:$0xf] %vm1357, %v1230
        %1360 = vst.msk [vmem:[%s172 + $0x8] sm:$0xf] %vm1357, %v1231
        %1361 = vst.msk [vmem:[%s172 + $0xc] sm:$0xf] %vm1357, %v1232
        %1362 = vst.msk [vmem:[%s172 + $0x10] sm:$0xf] %vm1357, %v1233
        %1363 = vst.msk [vmem:[%s172 + $0x14] sm:$0xf] %vm1357, %v1234
        %1364 = vst.msk [vmem:[%s172 + $0x18] sm:$0xf] %vm1357, %v1235
        %1365 = vst.msk [vmem:[%s172 + $0x1c] sm:$0xf] %vm1357, %v1236
        %1366 = vst.msk [vmem:[%s172 + $0x20] sm:$0xf] %vm1357, %v1237
        %1367 = vst.msk [vmem:[%s172 + $0x24] sm:$0xf] %vm1357, %v1238
        %1368 = vst.msk [vmem:[%s172 + $0x28] sm:$0xf] %vm1357, %v1239
        %1369 = vst.msk [vmem:[%s172 + $0x2c] sm:$0xf] %vm1357, %v1240
        %1370 = vst.msk [vmem:[%s172 + $0x30] sm:$0xf] %vm1357, %v1241
        %1371 = vst.msk [vmem:[%s172 + $0x34] sm:$0xf] %vm1357, %v1242
        %1372 = vst.msk [vmem:[%s172 + $0x38] sm:$0xf] %vm1357, %v1243
        %1373 = vst.msk [vmem:[%s172 + $0x3c] sm:$0xf] %vm1357, %v1244
        %1374 = vst.msk [vmem:[%s172 + $0x40] sm:$0xf] %vm1357, %v1245
        %1375 = vst.msk [vmem:[%s172 + $0x44] sm:$0xf] %vm1357, %v1246
        %1376 = vst.msk [vmem:[%s172 + $0x48] sm:$0xf] %vm1357, %v1247
        %1377 = vst.msk [vmem:[%s172 + $0x4c] sm:$0xf] %vm1357, %v1248
        %1378 = vst.msk [vmem:[%s172 + $0x50] sm:$0xf] %vm1357, %v1249
        %1379 = vst.msk [vmem:[%s172 + $0x54] sm:$0xf] %vm1357, %v1250
        %1380 = vst.msk [vmem:[%s172 + $0x58] sm:$0xf] %vm1357, %v1251
        %1381 = vst.msk [vmem:[%s172 + $0x5c] sm:$0xf] %vm1357, %v1252
        %1382 = vst.msk [vmem:[%s172 + $0x60] sm:$0xf] %vm1357, %v1253
        %1383 = vst.msk [vmem:[%s172 + $0x64] sm:$0xf] %vm1357, %v1254
        %1384 = vst.msk [vmem:[%s172 + $0x68] sm:$0xf] %vm1357, %v1255
        %1385 = vst.msk [vmem:[%s172 + $0x6c] sm:$0xf] %vm1357, %v1256
        %1386 = vst.msk [vmem:[%s172 + $0x70] sm:$0xf] %vm1357, %v1257
        %1387 = vst.msk [vmem:[%s172 + $0x74] sm:$0xf] %vm1357, %v1258
        %1388 = vst.msk [vmem:[%s172 + $0x78] sm:$0xf] %vm1357, %v1259
        %1389 = vst.msk [vmem:[%s172 + $0x7c] sm:$0xf] %vm1357, %v1260
        %1390 = vst.msk [vmem:[%s172 + $0x80] sm:$0xf] %vm1357, %v1261
        %1391 = vst.msk [vmem:[%s172 + $0x84] sm:$0xf] %vm1357, %v1262
        %1392 = vst.msk [vmem:[%s172 + $0x88] sm:$0xf] %vm1357, %v1263
        %1393 = vst.msk [vmem:[%s172 + $0x8c] sm:$0xf] %vm1357, %v1264
        %1394 = vst.msk [vmem:[%s172 + $0x90] sm:$0xf] %vm1357, %v1265
        %1395 = vst.msk [vmem:[%s172 + $0x94] sm:$0xf] %vm1357, %v1266
        %1396 = vst.msk [vmem:[%s172 + $0x98] sm:$0xf] %vm1357, %v1267
        %1397 = vst.msk [vmem:[%s172 + $0x9c] sm:$0xf] %vm1357, %v1268
        %1398 = vst.msk [vmem:[%s172 + $0xa0] sm:$0xf] %vm1357, %v1269
        %1399 = vst.msk [vmem:[%s172 + $0xa4] sm:$0xf] %vm1357, %v1270
        %1400 = vst.msk [vmem:[%s172 + $0xa8] sm:$0xf] %vm1357, %v1271
        %1401 = vst.msk [vmem:[%s172 + $0xac] sm:$0xf] %vm1357, %v1272
        %1402 = vst.msk [vmem:[%s172 + $0xb0] sm:$0xf] %vm1357, %v1273
        %1403 = vst.msk [vmem:[%s172 + $0xb4] sm:$0xf] %vm1357, %v1274
        %1404 = vst.msk [vmem:[%s172 + $0xb8] sm:$0xf] %vm1357, %v1275
        %1405 = vst.msk [vmem:[%s172 + $0xbc] sm:$0xf] %vm1357, %v1276
        %1406 = vst.msk [vmem:[%s172 + $0xc0] sm:$0xf] %vm1357, %v1277
        %1407 = vst.msk [vmem:[%s172 + $0xc4] sm:$0xf] %vm1357, %v1278
        %1408 = vst.msk [vmem:[%s172 + $0xc8] sm:$0xf] %vm1357, %v1279
        %1409 = vst.msk [vmem:[%s172 + $0xcc] sm:$0xf] %vm1357, %v1280
        %1410 = vst.msk [vmem:[%s172 + $0xd0] sm:$0xf] %vm1357, %v1281
        %1411 = vst.msk [vmem:[%s172 + $0xd4] sm:$0xf] %vm1357, %v1282
        %1412 = vst.msk [vmem:[%s172 + $0xd8] sm:$0xf] %vm1357, %v1283
        %1413 = vst.msk [vmem:[%s172 + $0xdc] sm:$0xf] %vm1357, %v1284
        %1414 = vst.msk [vmem:[%s172 + $0xe0] sm:$0xf] %vm1357, %v1285
        %1415 = vst.msk [vmem:[%s172 + $0xe4] sm:$0xf] %vm1357, %v1286
        %1416 = vst.msk [vmem:[%s172 + $0xe8] sm:$0xf] %vm1357, %v1287
        %1417 = vst.msk [vmem:[%s172 + $0xec] sm:$0xf] %vm1357, %v1288
        %1418 = vst.msk [vmem:[%s172 + $0xf0] sm:$0xf] %vm1357, %v1289
        %1419 = vst.msk [vmem:[%s172 + $0xf4] sm:$0xf] %vm1357, %v1290
        %1420 = vst.msk [vmem:[%s172 + $0xf8] sm:$0xf] %vm1357, %v1291
        %1421 = vst.msk [vmem:[%s172 + $0xfc] sm:$0xf] %vm1357, %v1292
        %1422 = vst.msk [vmem:[%s172 + $0x100] sm:$0xf] %vm1357, %v1293
        %1423 = vst.msk [vmem:[%s172 + $0x104] sm:$0xf] %vm1357, %v1294
        %1424 = vst.msk [vmem:[%s172 + $0x108] sm:$0xf] %vm1357, %v1295
        %1425 = vst.msk [vmem:[%s172 + $0x10c] sm:$0xf] %vm1357, %v1296
        %1426 = vst.msk [vmem:[%s172 + $0x110] sm:$0xf] %vm1357, %v1297
        %1427 = vst.msk [vmem:[%s172 + $0x114] sm:$0xf] %vm1357, %v1298
        %1428 = vst.msk [vmem:[%s172 + $0x118] sm:$0xf] %vm1357, %v1299
        %1429 = vst.msk [vmem:[%s172 + $0x11c] sm:$0xf] %vm1357, %v1300
        %1430 = vst.msk [vmem:[%s172 + $0x120] sm:$0xf] %vm1357, %v1301
        %1431 = vst.msk [vmem:[%s172 + $0x124] sm:$0xf] %vm1357, %v1302
        %1432 = vst.msk [vmem:[%s172 + $0x128] sm:$0xf] %vm1357, %v1303
        %1433 = vst.msk [vmem:[%s172 + $0x12c] sm:$0xf] %vm1357, %v1304
        %1434 = vst.msk [vmem:[%s172 + $0x130] sm:$0xf] %vm1357, %v1305
        %1435 = vst.msk [vmem:[%s172 + $0x134] sm:$0xf] %vm1357, %v1306
        %1436 = vst.msk [vmem:[%s172 + $0x138] sm:$0xf] %vm1357, %v1307
        %1437 = vst.msk [vmem:[%s172 + $0x13c] sm:$0xf] %vm1357, %v1308
        %1438 = vst.msk [vmem:[%s172 + $0x140] sm:$0xf] %vm1357, %v1309
        %1439 = vst.msk [vmem:[%s172 + $0x144] sm:$0xf] %vm1357, %v1310
        %1440 = vst.msk [vmem:[%s172 + $0x148] sm:$0xf] %vm1357, %v1311
        %1441 = vst.msk [vmem:[%s172 + $0x14c] sm:$0xf] %vm1357, %v1312
        %1442 = vst.msk [vmem:[%s172 + $0x150] sm:$0xf] %vm1357, %v1313
        %1443 = vst.msk [vmem:[%s172 + $0x154] sm:$0xf] %vm1357, %v1314
        %1444 = vst.msk [vmem:[%s172 + $0x158] sm:$0xf] %vm1357, %v1315
        %1445 = vst.msk [vmem:[%s172 + $0x15c] sm:$0xf] %vm1357, %v1316
        %1446 = vst.msk [vmem:[%s172 + $0x160] sm:$0xf] %vm1357, %v1317
        %1447 = vst.msk [vmem:[%s172 + $0x164] sm:$0xf] %vm1357, %v1318
        %1448 = vst.msk [vmem:[%s172 + $0x168] sm:$0xf] %vm1357, %v1319
        %1449 = vst.msk [vmem:[%s172 + $0x16c] sm:$0xf] %vm1357, %v1320
        %1450 = vst.msk [vmem:[%s172 + $0x170] sm:$0xf] %vm1357, %v1321
        %1451 = vst.msk [vmem:[%s172 + $0x174] sm:$0xf] %vm1357, %v1322
        %1452 = vst.msk [vmem:[%s172 + $0x178] sm:$0xf] %vm1357, %v1323
        %1453 = vst.msk [vmem:[%s172 + $0x17c] sm:$0xf] %vm1357, %v1324
        %1454 = vst.msk [vmem:[%s172 + $0x180] sm:$0xf] %vm1357, %v1325
        %1455 = vst.msk [vmem:[%s172 + $0x184] sm:$0xf] %vm1357, %v1326
        %1456 = vst.msk [vmem:[%s172 + $0x188] sm:$0xf] %vm1357, %v1327
        %1457 = vst.msk [vmem:[%s172 + $0x18c] sm:$0xf] %vm1357, %v1328
        %1458 = vst.msk [vmem:[%s172 + $0x190] sm:$0xf] %vm1357, %v1329
        %1459 = vst.msk [vmem:[%s172 + $0x194] sm:$0xf] %vm1357, %v1330
        %1460 = vst.msk [vmem:[%s172 + $0x198] sm:$0xf] %vm1357, %v1331
        %1461 = vst.msk [vmem:[%s172 + $0x19c] sm:$0xf] %vm1357, %v1332
        %1462 = vst.msk [vmem:[%s172 + $0x1a0] sm:$0xf] %vm1357, %v1333
        %1463 = vst.msk [vmem:[%s172 + $0x1a4] sm:$0xf] %vm1357, %v1334
        %1464 = vst.msk [vmem:[%s172 + $0x1a8] sm:$0xf] %vm1357, %v1335
        %1465 = vst.msk [vmem:[%s172 + $0x1ac] sm:$0xf] %vm1357, %v1336
        %1466 = vst.msk [vmem:[%s172 + $0x1b0] sm:$0xf] %vm1357, %v1337
        %1467 = vst.msk [vmem:[%s172 + $0x1b4] sm:$0xf] %vm1357, %v1338
        %1468 = vst.msk [vmem:[%s172 + $0x1b8] sm:$0xf] %vm1357, %v1339
        %1469 = vst.msk [vmem:[%s172 + $0x1bc] sm:$0xf] %vm1357, %v1340
        %1470 = vst.msk [vmem:[%s172 + $0x1c0] sm:$0xf] %vm1357, %v1341
        %1471 = vst.msk [vmem:[%s172 + $0x1c4] sm:$0xf] %vm1357, %v1342
        %1472 = vst.msk [vmem:[%s172 + $0x1c8] sm:$0xf] %vm1357, %v1343
        %1473 = vst.msk [vmem:[%s172 + $0x1cc] sm:$0xf] %vm1357, %v1344
        %1474 = vst.msk [vmem:[%s172 + $0x1d0] sm:$0xf] %vm1357, %v1345
        %1475 = vst.msk [vmem:[%s172 + $0x1d4] sm:$0xf] %vm1357, %v1346
        %1476 = vst.msk [vmem:[%s172 + $0x1d8] sm:$0xf] %vm1357, %v1347
        %1477 = vst.msk [vmem:[%s172 + $0x1dc] sm:$0xf] %vm1357, %v1348
        %1478 = vst.msk [vmem:[%s172 + $0x1e0] sm:$0xf] %vm1357, %v1349
        %1479 = vst.msk [vmem:[%s172 + $0x1e4] sm:$0xf] %vm1357, %v1350
        %1480 = vst.msk [vmem:[%s172 + $0x1e8] sm:$0xf] %vm1357, %v1351
        %1481 = vst.msk [vmem:[%s172 + $0x1ec] sm:$0xf] %vm1357, %v1352
        %1482 = vst.msk [vmem:[%s172 + $0x1f0] sm:$0xf] %vm1357, %v1353
        %1483 = vst.msk [vmem:[%s172 + $0x1f4] sm:$0xf] %vm1357, %v1354
        %1484 = vst.msk [vmem:[%s172 + $0x1f8] sm:$0xf] %vm1357, %v1355
        %1485 = vst.msk [vmem:[%s172 + $0x1fc] sm:$0xf] %vm1357, %v1356
        %s1486 = sand.u32 %s90, 1
        %s1487 = sand.u32 %s90, 1
        %s1488 = smul.addr %s1487, 512
        %s1489 = scalar_lea.vmem [#allocation2], %s1488
        // Predicated region
        $region33: #{forward.5} parent=31 // pred_check
          %p1490 = pneg %p100
        $region34: #{forward.5} parent=31 // pred_check_branch
          %1492 = sbr.rel (%p1490) target = $region36
        $region35: #{forward.5} parent=31 // pred_region
          %s1493 = smul.u32 128, %s14
          %s1494 = ssub.s32 361, %s1493
          %p1495 = scmp.lt.s32.totalorder %s1494, 128
          %s1496 = scalar_select %p1495, %s1494, 128
          %s1497 = smul.u32 4, %s1496
          %p1498 = scmp.ne.s32.totalorder 0, %s1497
          %s1499 = smul.addr %s1493, 4
          %s1500 = scalar_lea.vmem %s3, %s1499
          // Predicated region
          $region37: #{forward.5} parent=35 // pred_check
            %p1501 = pneg %p1498
          $region38: #{forward.5} parent=35 // pred_check_branch
            %1503 = sbr.rel (%p1501) target = $region40
          $region39: #{forward.5} parent=35 // pred_region
            // Predicated region
            $region41: #{forward.5} parent=39 // pred_check
              _
            $region42: #{forward.5} parent=39 // pred_check_branch
              %1505 = sbr.rel target = $region44
            $region43: #{forward.5} parent=39 // pred_region
              // Predicated region
              $region63: #{forward.5} parent=43 // pred_check
                _
              $region64: #{forward.5} parent=43 // pred_check_branch
                %1617 = sbr.rel (0) target = $region66
              $region65: #{forward.5} parent=43 // pred_region
                %s1619 = ssub.s32 16, 1
                %s1620 = sshrl.u32 %s1496, 5
                // While loop
                $region67: #{forward.5} parent=65 // loop_pre_header
                  _
                $region68: #{forward.5} parent=65 // loop_header
                  %s1622 = sphi 0, %s1624
                  %p1623 = scmp.ge.s32.totalorder %s1622, %s1620
                  %s1627 = sphi 0, %s1696
                  %s1628 = sphi %s1489, %s1699
                  %s1629 = sphi %s1500, %s1700
                $region69: #{forward.5} parent=65 // loop_header_branch
                  %1626 = sbr.rel (%p1623) target = $region73
                $region70: #{forward.5} parent=65 // loop_body
                  %v1630 = vld [vmem:[%s1628] sm:%s1619]
                  %1631 = vst [vmem:[%s1629] sm:%s1619] %v1630
                  %v1632 = vld [vmem:[%s1628 + $0x4] sm:%s1619]
                  %1633 = vst [vmem:[%s1629 + $0x4] sm:%s1619] %v1632
                  %v1634 = vld [vmem:[%s1628 + $0x8] sm:%s1619]
                  %1635 = vst [vmem:[%s1629 + $0x8] sm:%s1619] %v1634
                  %v1636 = vld [vmem:[%s1628 + $0xc] sm:%s1619]
                  %1637 = vst [vmem:[%s1629 + $0xc] sm:%s1619] %v1636
                  %v1638 = vld [vmem:[%s1628 + $0x10] sm:%s1619]
                  %1639 = vst [vmem:[%s1629 + $0x10] sm:%s1619] %v1638
                  %v1640 = vld [vmem:[%s1628 + $0x14] sm:%s1619]
                  %1641 = vst [vmem:[%s1629 + $0x14] sm:%s1619] %v1640
                  %v1642 = vld [vmem:[%s1628 + $0x18] sm:%s1619]
                  %1643 = vst [vmem:[%s1629 + $0x18] sm:%s1619] %v1642
                  %v1644 = vld [vmem:[%s1628 + $0x1c] sm:%s1619]
                  %1645 = vst [vmem:[%s1629 + $0x1c] sm:%s1619] %v1644
                  %v1646 = vld [vmem:[%s1628 + $0x20] sm:%s1619]
                  %1647 = vst [vmem:[%s1629 + $0x20] sm:%s1619] %v1646
                  %v1648 = vld [vmem:[%s1628 + $0x24] sm:%s1619]
                  %1649 = vst [vmem:[%s1629 + $0x24] sm:%s1619] %v1648
                  %v1650 = vld [vmem:[%s1628 + $0x28] sm:%s1619]
                  %1651 = vst [vmem:[%s1629 + $0x28] sm:%s1619] %v1650
                  %v1652 = vld [vmem:[%s1628 + $0x2c] sm:%s1619]
                  %1653 = vst [vmem:[%s1629 + $0x2c] sm:%s1619] %v1652
                  %v1654 = vld [vmem:[%s1628 + $0x30] sm:%s1619]
                  %1655 = vst [vmem:[%s1629 + $0x30] sm:%s1619] %v1654
                  %v1656 = vld [vmem:[%s1628 + $0x34] sm:%s1619]
                  %1657 = vst [vmem:[%s1629 + $0x34] sm:%s1619] %v1656
                  %v1658 = vld [vmem:[%s1628 + $0x38] sm:%s1619]
                  %1659 = vst [vmem:[%s1629 + $0x38] sm:%s1619] %v1658
                  %v1660 = vld [vmem:[%s1628 + $0x3c] sm:%s1619]
                  %1661 = vst [vmem:[%s1629 + $0x3c] sm:%s1619] %v1660
                  %v1662 = vld [vmem:[%s1628 + $0x40] sm:%s1619]
                  %1663 = vst [vmem:[%s1629 + $0x40] sm:%s1619] %v1662
                  %v1664 = vld [vmem:[%s1628 + $0x44] sm:%s1619]
                  %1665 = vst [vmem:[%s1629 + $0x44] sm:%s1619] %v1664
                  %v1666 = vld [vmem:[%s1628 + $0x48] sm:%s1619]
                  %1667 = vst [vmem:[%s1629 + $0x48] sm:%s1619] %v1666
                  %v1668 = vld [vmem:[%s1628 + $0x4c] sm:%s1619]
                  %1669 = vst [vmem:[%s1629 + $0x4c] sm:%s1619] %v1668
                  %v1670 = vld [vmem:[%s1628 + $0x50] sm:%s1619]
                  %1671 = vst [vmem:[%s1629 + $0x50] sm:%s1619] %v1670
                  %v1672 = vld [vmem:[%s1628 + $0x54] sm:%s1619]
                  %1673 = vst [vmem:[%s1629 + $0x54] sm:%s1619] %v1672
                  %v1674 = vld [vmem:[%s1628 + $0x58] sm:%s1619]
                  %1675 = vst [vmem:[%s1629 + $0x58] sm:%s1619] %v1674
                  %v1676 = vld [vmem:[%s1628 + $0x5c] sm:%s1619]
                  %1677 = vst [vmem:[%s1629 + $0x5c] sm:%s1619] %v1676
                  %v1678 = vld [vmem:[%s1628 + $0x60] sm:%s1619]
                  %1679 = vst [vmem:[%s1629 + $0x60] sm:%s1619] %v1678
                  %v1680 = vld [vmem:[%s1628 + $0x64] sm:%s1619]
                  %1681 = vst [vmem:[%s1629 + $0x64] sm:%s1619] %v1680
                  %v1682 = vld [vmem:[%s1628 + $0x68] sm:%s1619]
                  %1683 = vst [vmem:[%s1629 + $0x68] sm:%s1619] %v1682
                  %v1684 = vld [vmem:[%s1628 + $0x6c] sm:%s1619]
                  %1685 = vst [vmem:[%s1629 + $0x6c] sm:%s1619] %v1684
                  %v1686 = vld [vmem:[%s1628 + $0x70] sm:%s1619]
                  %1687 = vst [vmem:[%s1629 + $0x70] sm:%s1619] %v1686
                  %v1688 = vld [vmem:[%s1628 + $0x74] sm:%s1619]
                  %1689 = vst [vmem:[%s1629 + $0x74] sm:%s1619] %v1688
                  %v1690 = vld [vmem:[%s1628 + $0x78] sm:%s1619]
                  %1691 = vst [vmem:[%s1629 + $0x78] sm:%s1619] %v1690
                  %v1692 = vld [vmem:[%s1628 + $0x7c] sm:%s1619]
                  %1693 = vst [vmem:[%s1629 + $0x7c] sm:%s1619] %v1692
                  %s1694 = sadd.s32 1, %s1627
                  %p1695 = scmp.ge.s32.totalorder %s1694, %s1620
                  %s1696 = scalar_select %p1695, 0, %s1694
                  %s1697 = smul.u32 %s1696, 128
                  %s1698 = smul.u32 %s1696, 128
                  %s1699 = scalar_lea.vmem %s1489, %s1697 [#allocation2]
                  %s1700 = scalar_lea.vmem %s1500, %s1698
                $region71: #{forward.5} parent=65 // loop_footer
                  %s1624 = sadd.s32 %s1622, 1
                $region72: #{forward.5} parent=65 // loop_footer_branch
                  %1621 = sbr.rel target = $region68
                $region73: #{forward.5} parent=65 // loop_exit
                  _
                %s1701 = sshrl.u32 %s1496, 5
                %s1702 = sand.u32 %s1496, 31
                %s1703 = smul.u32 %s1701, 32
                %s1704 = smul.u32 4, %s1703
                %s1705 = scalar_lea.vmem %s1489, %s1704 [#allocation2]
                %s1706 = smul.u32 4, %s1703
                %s1707 = scalar_lea.vmem %s1500, %s1706
                // While loop
                $region74: #{forward.5} parent=65 // loop_pre_header
                  _
                $region75: #{forward.5} parent=65 // loop_header
                  %s1709 = sphi 0, %s1711
                  %p1710 = scmp.ge.s32.totalorder %s1709, %s1702
                  %s1714 = sphi 0, %s1721
                  %s1715 = sphi %s1705, %s1724
                  %s1716 = sphi %s1707, %s1725
                $region76: #{forward.5} parent=65 // loop_header_branch
                  %1713 = sbr.rel (%p1710) target = $region80
                $region77: #{forward.5} parent=65 // loop_body
                  %v1717 = vld [vmem:[%s1715] sm:%s1619]
                  %1718 = vst [vmem:[%s1716] sm:%s1619] %v1717
                  %s1719 = sadd.s32 1, %s1714
                  %p1720 = scmp.ge.s32.totalorder %s1719, %s1702
                  %s1721 = scalar_select %p1720, 0, %s1719
                  %s1722 = smul.u32 %s1721, 4
                  %s1723 = smul.u32 %s1721, 4
                  %s1724 = scalar_lea.vmem %s1705, %s1722 [#allocation2]
                  %s1725 = scalar_lea.vmem %s1707, %s1723
                $region78: #{forward.5} parent=65 // loop_footer
                  %s1711 = sadd.s32 %s1709, 1
                $region79: #{forward.5} parent=65 // loop_footer_branch
                  %1708 = sbr.rel target = $region75
                $region80: #{forward.5} parent=65 // loop_exit
                  _
              $region66: #{forward.5} parent=43 // pred_fallthru
                _
            $region44: #{forward.5} parent=39 // pred_fallthru
              _
            // Predicated region
            $region45: #{forward.5} parent=39 // pred_check
              _
            $region46: #{forward.5} parent=39 // pred_check_branch
              %1507 = sbr.rel (0) target = $region48
            $region47: #{forward.5} parent=39 // pred_region
              %s1509 = ssub.s32 16, 1
              %s1510 = sshrl.u32 %s1496, 5
              // While loop
              $region49: #{forward.5} parent=47 // loop_pre_header
                _
              $region50: #{forward.5} parent=47 // loop_header
                %s1512 = sphi 0, %s1514
                %p1513 = scmp.ge.s32.totalorder %s1512, %s1510
                %s1517 = sphi 0, %s1586
                %s1518 = sphi %s1489, %s1589
                %s1519 = sphi %s1500, %s1590
              $region51: #{forward.5} parent=47 // loop_header_branch
                %1516 = sbr.rel (%p1513) target = $region55
              $region52: #{forward.5} parent=47 // loop_body
                %v1520 = vld [vmem:[%s1518] sm:%s1509]
                %1521 = vst [vmem:[%s1519] sm:%s1509] %v1520
                %v1522 = vld [vmem:[%s1518 + $0x4] sm:%s1509]
                %1523 = vst [vmem:[%s1519 + $0x4] sm:%s1509] %v1522
                %v1524 = vld [vmem:[%s1518 + $0x8] sm:%s1509]
                %1525 = vst [vmem:[%s1519 + $0x8] sm:%s1509] %v1524
                %v1526 = vld [vmem:[%s1518 + $0xc] sm:%s1509]
                %1527 = vst [vmem:[%s1519 + $0xc] sm:%s1509] %v1526
                %v1528 = vld [vmem:[%s1518 + $0x10] sm:%s1509]
                %1529 = vst [vmem:[%s1519 + $0x10] sm:%s1509] %v1528
                %v1530 = vld [vmem:[%s1518 + $0x14] sm:%s1509]
                %1531 = vst [vmem:[%s1519 + $0x14] sm:%s1509] %v1530
                %v1532 = vld [vmem:[%s1518 + $0x18] sm:%s1509]
                %1533 = vst [vmem:[%s1519 + $0x18] sm:%s1509] %v1532
                %v1534 = vld [vmem:[%s1518 + $0x1c] sm:%s1509]
                %1535 = vst [vmem:[%s1519 + $0x1c] sm:%s1509] %v1534
                %v1536 = vld [vmem:[%s1518 + $0x20] sm:%s1509]
                %1537 = vst [vmem:[%s1519 + $0x20] sm:%s1509] %v1536
                %v1538 = vld [vmem:[%s1518 + $0x24] sm:%s1509]
                %1539 = vst [vmem:[%s1519 + $0x24] sm:%s1509] %v1538
                %v1540 = vld [vmem:[%s1518 + $0x28] sm:%s1509]
                %1541 = vst [vmem:[%s1519 + $0x28] sm:%s1509] %v1540
                %v1542 = vld [vmem:[%s1518 + $0x2c] sm:%s1509]
                %1543 = vst [vmem:[%s1519 + $0x2c] sm:%s1509] %v1542
                %v1544 = vld [vmem:[%s1518 + $0x30] sm:%s1509]
                %1545 = vst [vmem:[%s1519 + $0x30] sm:%s1509] %v1544
                %v1546 = vld [vmem:[%s1518 + $0x34] sm:%s1509]
                %1547 = vst [vmem:[%s1519 + $0x34] sm:%s1509] %v1546
                %v1548 = vld [vmem:[%s1518 + $0x38] sm:%s1509]
                %1549 = vst [vmem:[%s1519 + $0x38] sm:%s1509] %v1548
                %v1550 = vld [vmem:[%s1518 + $0x3c] sm:%s1509]
                %1551 = vst [vmem:[%s1519 + $0x3c] sm:%s1509] %v1550
                %v1552 = vld [vmem:[%s1518 + $0x40] sm:%s1509]
                %1553 = vst [vmem:[%s1519 + $0x40] sm:%s1509] %v1552
                %v1554 = vld [vmem:[%s1518 + $0x44] sm:%s1509]
                %1555 = vst [vmem:[%s1519 + $0x44] sm:%s1509] %v1554
                %v1556 = vld [vmem:[%s1518 + $0x48] sm:%s1509]
                %1557 = vst [vmem:[%s1519 + $0x48] sm:%s1509] %v1556
                %v1558 = vld [vmem:[%s1518 + $0x4c] sm:%s1509]
                %1559 = vst [vmem:[%s1519 + $0x4c] sm:%s1509] %v1558
                %v1560 = vld [vmem:[%s1518 + $0x50] sm:%s1509]
                %1561 = vst [vmem:[%s1519 + $0x50] sm:%s1509] %v1560
                %v1562 = vld [vmem:[%s1518 + $0x54] sm:%s1509]
                %1563 = vst [vmem:[%s1519 + $0x54] sm:%s1509] %v1562
                %v1564 = vld [vmem:[%s1518 + $0x58] sm:%s1509]
                %1565 = vst [vmem:[%s1519 + $0x58] sm:%s1509] %v1564
                %v1566 = vld [vmem:[%s1518 + $0x5c] sm:%s1509]
                %1567 = vst [vmem:[%s1519 + $0x5c] sm:%s1509] %v1566
                %v1568 = vld [vmem:[%s1518 + $0x60] sm:%s1509]
                %1569 = vst [vmem:[%s1519 + $0x60] sm:%s1509] %v1568
                %v1570 = vld [vmem:[%s1518 + $0x64] sm:%s1509]
                %1571 = vst [vmem:[%s1519 + $0x64] sm:%s1509] %v1570
                %v1572 = vld [vmem:[%s1518 + $0x68] sm:%s1509]
                %1573 = vst [vmem:[%s1519 + $0x68] sm:%s1509] %v1572
                %v1574 = vld [vmem:[%s1518 + $0x6c] sm:%s1509]
                %1575 = vst [vmem:[%s1519 + $0x6c] sm:%s1509] %v1574
                %v1576 = vld [vmem:[%s1518 + $0x70] sm:%s1509]
                %1577 = vst [vmem:[%s1519 + $0x70] sm:%s1509] %v1576
                %v1578 = vld [vmem:[%s1518 + $0x74] sm:%s1509]
                %1579 = vst [vmem:[%s1519 + $0x74] sm:%s1509] %v1578
                %v1580 = vld [vmem:[%s1518 + $0x78] sm:%s1509]
                %1581 = vst [vmem:[%s1519 + $0x78] sm:%s1509] %v1580
                %v1582 = vld [vmem:[%s1518 + $0x7c] sm:%s1509]
                %1583 = vst [vmem:[%s1519 + $0x7c] sm:%s1509] %v1582
                %s1584 = sadd.s32 1, %s1517
                %p1585 = scmp.ge.s32.totalorder %s1584, %s1510
                %s1586 = scalar_select %p1585, 0, %s1584
                %s1587 = smul.u32 %s1586, 128
                %s1588 = smul.u32 %s1586, 128
                %s1589 = scalar_lea.vmem %s1489, %s1587 [#allocation2]
                %s1590 = scalar_lea.vmem %s1500, %s1588
              $region53: #{forward.5} parent=47 // loop_footer
                %s1514 = sadd.s32 %s1512, 1
              $region54: #{forward.5} parent=47 // loop_footer_branch
                %1511 = sbr.rel target = $region50
              $region55: #{forward.5} parent=47 // loop_exit
                _
              %s1591 = sshrl.u32 %s1496, 5
              %s1592 = sand.u32 %s1496, 31
              %s1593 = smul.u32 %s1591, 32
              %s1594 = smul.u32 4, %s1593
              %s1595 = scalar_lea.vmem %s1489, %s1594 [#allocation2]
              %s1596 = smul.u32 4, %s1593
              %s1597 = scalar_lea.vmem %s1500, %s1596
              // While loop
              $region56: #{forward.5} parent=47 // loop_pre_header
                _
              $region57: #{forward.5} parent=47 // loop_header
                %s1599 = sphi 0, %s1601
                %p1600 = scmp.ge.s32.totalorder %s1599, %s1592
                %s1604 = sphi 0, %s1611
                %s1605 = sphi %s1595, %s1614
                %s1606 = sphi %s1597, %s1615
              $region58: #{forward.5} parent=47 // loop_header_branch
                %1603 = sbr.rel (%p1600) target = $region62
              $region59: #{forward.5} parent=47 // loop_body
                %v1607 = vld [vmem:[%s1605] sm:%s1509]
                %1608 = vst [vmem:[%s1606] sm:%s1509] %v1607
                %s1609 = sadd.s32 1, %s1604
                %p1610 = scmp.ge.s32.totalorder %s1609, %s1592
                %s1611 = scalar_select %p1610, 0, %s1609
                %s1612 = smul.u32 %s1611, 4
                %s1613 = smul.u32 %s1611, 4
                %s1614 = scalar_lea.vmem %s1595, %s1612 [#allocation2]
                %s1615 = scalar_lea.vmem %s1597, %s1613
              $region60: #{forward.5} parent=47 // loop_footer
                %s1601 = sadd.s32 %s1599, 1
              $region61: #{forward.5} parent=47 // loop_footer_branch
                %1598 = sbr.rel target = $region57
              $region62: #{forward.5} parent=47 // loop_exit
                _
            $region48: #{forward.5} parent=39 // pred_fallthru
              _
          $region40: #{forward.5} parent=35 // pred_fallthru
            _
          %1726 = vnop
        $region36: #{forward.5} parent=31 // pred_fallthru
          _
      $region32: #{forward.5} parent=5 // pred_fallthru
        _
      %p1727 = scmp.le.s32.totalorder 2, %s9
      // Predicated region
      $region81: #{forward.5} parent=5 // pred_check
        %p1728 = pneg %p1727
      $region82: #{forward.5} parent=5 // pred_check_branch
        %1730 = sbr.rel (%p1728) target = $region84
      $region83: #{forward.5} parent=5 // pred_region
        %s1731 = ssub.s32 %s9, 2
        // Predicated region
        $region85: #{forward.5} parent=83 // pred_check
          %p1732 = pneg %p106
        $region86: #{forward.5} parent=83 // pred_check_branch
          %1734 = sbr.rel (%p1732) target = $region88
        $region87: #{forward.5} parent=83 // pred_region
          %s1735 = sand.u32 %s91, 1
          %s1736 = sand.u32 %s91, 1
          %s1737 = smul.addr %s1736, 512
          %s1738 = scalar_lea.vmem [#allocation2], %s1737
        $region88: #{forward.5} parent=83 // pred_fallthru
          _
      $region84: #{forward.5} parent=5 // pred_fallthru
        _
    $region6: #{forward.5} parent=1 // loop_footer
      %s13 = sadd.s32 1, %s9
    $region7: #{forward.5} parent=1 // loop_footer_branch
      %8 = sbr.rel target = $region3
    $region8: #{forward.5} parent=1 // loop_exit
      _

// kernel: forward.6
$region0: #{forward.6}
  #allocation0 [shape = 'u32[]', space=smem, size = 0x4, offset = 0x4, fixed_abs, tag = 'smem constant byte address 0x4 - core index']
  #allocation1 [shape = 'u32[72,128]{1,0:T(1,128)}', space=vmem, size = 0x9000, scoped, tag = 'internal scratch']
  %s0 = inlined_call_operand.vmem [shape: bf16[648,128], index: 0, kind: input, shape index: {}]
  %s1 = inlined_call_operand.vmem [shape: bf16[128,8], index: 1, kind: input, shape index: {}]
  %s2 = inlined_call_operand.vmem [shape: f32[1,8], index: 2, kind: input, shape index: {}]
  %s3 = inlined_call_operand.vmem [shape: bf16[648,8], index: 3, kind: output, shape index: {}]
  %s4 = sld [smem:[#allocation0]]
  $region22: #{forward.6} parent=0
    _
  %s6 = ssub.s32 1, %s4
  %s7 = scalar_select 0, %s6, %s4
  // Predicated region
  $region2: #{forward.6} parent=0 // pred_check
    _
  $region3: #{forward.6} parent=0 // pred_check_branch
    %9 = sbr.rel (0) target = $region5
  $region4: #{forward.6} parent=0 // pred_region
    _
  $region5: #{forward.6} parent=0 // pred_fallthru
    _
  // Predicated region
  $region6: #{forward.6} parent=0 // pred_check
    _
  $region7: #{forward.6} parent=0 // pred_check_branch
    %11 = sbr.rel (0) target = $region9
  $region8: #{forward.6} parent=0 // pred_region
    _
  $region9: #{forward.6} parent=0 // pred_fallthru
    _
  // Predicated region
  $region10: #{forward.6} parent=0 // pred_check
    _
  $region11: #{forward.6} parent=0 // pred_check_branch
    %13 = sbr.rel (0) target = $region13
  $region12: #{forward.6} parent=0 // pred_region
    _
  $region13: #{forward.6} parent=0 // pred_fallthru
    _
  %v14 = vld [vmem:[%s0] sm:$0xf]
  %v15 = vld [vmem:[%s0 + $0x4] sm:$0xf]
  %v16 = vld [vmem:[%s0 + $0x8] sm:$0xf]
  %v17 = vld [vmem:[%s0 + $0xc] sm:$0xf]
  %v18 = vld [vmem:[%s0 + $0x10] sm:$0xf]
  %v19 = vld [vmem:[%s0 + $0x14] sm:$0xf]
  %v20 = vld [vmem:[%s0 + $0x18] sm:$0xf]
  %v21 = vld [vmem:[%s0 + $0x1c] sm:$0xf]
  %v22 = vld [vmem:[%s0 + $0x20] sm:$0xf]
  %v23 = vld [vmem:[%s0 + $0x24] sm:$0xf]
  %v24 = vld [vmem:[%s0 + $0x28] sm:$0xf]
  %v25 = vld [vmem:[%s0 + $0x2c] sm:$0xf]
  %v26 = vld [vmem:[%s0 + $0x30] sm:$0xf]
  %v27 = vld [vmem:[%s0 + $0x34] sm:$0xf]
  %v28 = vld [vmem:[%s0 + $0x38] sm:$0xf]
  %v29 = vld [vmem:[%s0 + $0x3c] sm:$0xf]
  %v30 = vld [vmem:[%s0 + $0x40] sm:$0xf]
  %v31 = vld [vmem:[%s0 + $0x44] sm:$0xf]
  %v32 = vld [vmem:[%s0 + $0x48] sm:$0xf]
  %v33 = vld [vmem:[%s0 + $0x4c] sm:$0xf]
  %v34 = vld [vmem:[%s0 + $0x50] sm:$0xf]
  %v35 = vld [vmem:[%s0 + $0x54] sm:$0xf]
  %v36 = vld [vmem:[%s0 + $0x58] sm:$0xf]
  %v37 = vld [vmem:[%s0 + $0x5c] sm:$0xf]
  %v38 = vld [vmem:[%s0 + $0x60] sm:$0xf]
  %v39 = vld [vmem:[%s0 + $0x64] sm:$0xf]
  %v40 = vld [vmem:[%s0 + $0x68] sm:$0xf]
  %v41 = vld [vmem:[%s0 + $0x6c] sm:$0xf]
  %v42 = vld [vmem:[%s0 + $0x70] sm:$0xf]
  %v43 = vld [vmem:[%s0 + $0x74] sm:$0xf]
  %v44 = vld [vmem:[%s0 + $0x78] sm:$0xf]
  %v45 = vld [vmem:[%s0 + $0x7c] sm:$0xf]
  %v46 = vld [vmem:[%s0 + $0x80] sm:$0xf]
  %v47 = vld [vmem:[%s0 + $0x84] sm:$0xf]
  %v48 = vld [vmem:[%s0 + $0x88] sm:$0xf]
  %v49 = vld [vmem:[%s0 + $0x8c] sm:$0xf]
  %v50 = vld [vmem:[%s0 + $0x90] sm:$0xf]
  %v51 = vld [vmem:[%s0 + $0x94] sm:$0xf]
  %v52 = vld [vmem:[%s0 + $0x98] sm:$0xf]
  %v53 = vld [vmem:[%s0 + $0x9c] sm:$0xf]
  %v54 = vld [vmem:[%s0 + $0xa0] sm:$0xf]
  %v55 = vld [vmem:[%s0 + $0xa4] sm:$0xf]
  %v56 = vld [vmem:[%s0 + $0xa8] sm:$0xf]
  %v57 = vld [vmem:[%s0 + $0xac] sm:$0xf]
  %v58 = vld [vmem:[%s0 + $0xb0] sm:$0xf]
  %v59 = vld [vmem:[%s0 + $0xb4] sm:$0xf]
  %v60 = vld [vmem:[%s0 + $0xb8] sm:$0xf]
  %v61 = vld [vmem:[%s0 + $0xbc] sm:$0xf]
  %v62 = vld [vmem:[%s0 + $0xc0] sm:$0xf]
  %v63 = vld [vmem:[%s0 + $0xc4] sm:$0xf]
  %v64 = vld [vmem:[%s0 + $0xc8] sm:$0xf]
  %v65 = vld [vmem:[%s0 + $0xcc] sm:$0xf]
  %v66 = vld [vmem:[%s0 + $0xd0] sm:$0xf]
  %v67 = vld [vmem:[%s0 + $0xd4] sm:$0xf]
  %v68 = vld [vmem:[%s0 + $0xd8] sm:$0xf]
  %v69 = vld [vmem:[%s0 + $0xdc] sm:$0xf]
  %v70 = vld [vmem:[%s0 + $0xe0] sm:$0xf]
  %v71 = vld [vmem:[%s0 + $0xe4] sm:$0xf]
  %v72 = vld [vmem:[%s0 + $0xe8] sm:$0xf]
  %v73 = vld [vmem:[%s0 + $0xec] sm:$0xf]
  %v74 = vld [vmem:[%s0 + $0xf0] sm:$0xf]
  %v75 = vld [vmem:[%s0 + $0xf4] sm:$0xf]
  %v76 = vld [vmem:[%s0 + $0xf8] sm:$0xf]
  %v77 = vld [vmem:[%s0 + $0xfc] sm:$0xf]
  %v78 = vld [vmem:[%s0 + $0x100] sm:$0xf]
  %v79 = vld [vmem:[%s0 + $0x104] sm:$0xf]
  %v80 = vld [vmem:[%s0 + $0x108] sm:$0xf]
  %v81 = vld [vmem:[%s0 + $0x10c] sm:$0xf]
  %v82 = vld [vmem:[%s0 + $0x110] sm:$0xf]
  %v83 = vld [vmem:[%s0 + $0x114] sm:$0xf]
  %v84 = vld [vmem:[%s0 + $0x118] sm:$0xf]
  %v85 = vld [vmem:[%s0 + $0x11c] sm:$0xf]
  %v86 = vld [vmem:[%s0 + $0x120] sm:$0xf]
  %v87 = vld [vmem:[%s0 + $0x124] sm:$0xf]
  %v88 = vld [vmem:[%s0 + $0x128] sm:$0xf]
  %v89 = vld [vmem:[%s0 + $0x12c] sm:$0xf]
  %v90 = vld [vmem:[%s0 + $0x130] sm:$0xf]
  %v91 = vld [vmem:[%s0 + $0x134] sm:$0xf]
  %v92 = vld [vmem:[%s0 + $0x138] sm:$0xf]
  %v93 = vld [vmem:[%s0 + $0x13c] sm:$0xf]
  %v94 = vld [vmem:[%s0 + $0x140] sm:$0xf]
  %v95 = vld [vmem:[%s1] sm:$0xf]
  %v96 = vld [vmem:[%s1 + $0x4] sm:$0xf]
  %v97 = vld [vmem:[%s1 + $0x8] sm:$0xf]
  %v98 = vld [vmem:[%s1 + $0xc] sm:$0xf]
  %v99 = vld [vmem:[%s1 + $0x10] sm:$0xf]
  %v100 = vld [vmem:[%s1 + $0x14] sm:$0xf]
  %v101 = vld [vmem:[%s1 + $0x18] sm:$0xf]
  %v102 = vld [vmem:[%s1 + $0x1c] sm:$0xf]
  %v103 = vld [vmem:[%s1 + $0x20] sm:$0xf]
  %v104 = vld [vmem:[%s1 + $0x24] sm:$0xf]
  %v105 = vld [vmem:[%s1 + $0x28] sm:$0xf]
  %v106 = vld [vmem:[%s1 + $0x2c] sm:$0xf]
  %v107 = vld [vmem:[%s1 + $0x30] sm:$0xf]
  %v108 = vld [vmem:[%s1 + $0x34] sm:$0xf]
  %v109 = vld [vmem:[%s1 + $0x38] sm:$0xf]
  %v110 = vld [vmem:[%s1 + $0x3c] sm:$0xf]
  %v111 = vld [vmem:[%s2] sm:$0x1]
  %v113 = vperm.slane %v111, 0
  %v196 = vunpack.c.l.b16 %v14
  %v197 = vunpack.c.l.b16 %v15
  %v198 = vunpack.c.l.b16 %v16
  %v199 = vunpack.c.l.b16 %v17
  %v200 = vunpack.c.l.b16 %v18
  %v201 = vunpack.c.l.b16 %v19
  %v202 = vunpack.c.l.b16 %v20
  %v203 = vunpack.c.l.b16 %v21
  %v204 = vunpack.c.l.b16 %v22
  %v205 = vunpack.c.l.b16 %v23
  %v206 = vunpack.c.l.b16 %v24
  %v207 = vunpack.c.l.b16 %v25
  %v208 = vunpack.c.l.b16 %v26
  %v209 = vunpack.c.l.b16 %v27
  %v210 = vunpack.c.l.b16 %v28
  %v211 = vunpack.c.l.b16 %v29
  %v212 = vunpack.c.l.b16 %v30
  %v213 = vunpack.c.l.b16 %v31
  %v214 = vunpack.c.l.b16 %v32
  %v215 = vunpack.c.l.b16 %v33
  %v216 = vunpack.c.l.b16 %v34
  %v217 = vunpack.c.l.b16 %v35
  %v218 = vunpack.c.l.b16 %v36
  %v219 = vunpack.c.l.b16 %v37
  %v220 = vunpack.c.l.b16 %v38
  %v221 = vunpack.c.l.b16 %v39
  %v222 = vunpack.c.l.b16 %v40
  %v223 = vunpack.c.l.b16 %v41
  %v224 = vunpack.c.l.b16 %v42
  %v225 = vunpack.c.l.b16 %v43
  %v226 = vunpack.c.l.b16 %v44
  %v227 = vunpack.c.l.b16 %v45
  %v228 = vunpack.c.l.b16 %v46
  %v229 = vunpack.c.l.b16 %v47
  %v230 = vunpack.c.l.b16 %v48
  %v231 = vunpack.c.l.b16 %v49
  %v232 = vunpack.c.l.b16 %v50
  %v233 = vunpack.c.l.b16 %v51
  %v234 = vunpack.c.l.b16 %v52
  %v235 = vunpack.c.l.b16 %v53
  %v236 = vunpack.c.l.b16 %v54
  %v237 = vunpack.c.l.b16 %v55
  %v238 = vunpack.c.l.b16 %v56
  %v239 = vunpack.c.l.b16 %v57
  %v240 = vunpack.c.l.b16 %v58
  %v241 = vunpack.c.l.b16 %v59
  %v242 = vunpack.c.l.b16 %v60
  %v243 = vunpack.c.l.b16 %v61
  %v244 = vunpack.c.l.b16 %v62
  %v245 = vunpack.c.l.b16 %v63
  %v246 = vunpack.c.l.b16 %v64
  %v247 = vunpack.c.l.b16 %v65
  %v248 = vunpack.c.l.b16 %v66
  %v249 = vunpack.c.l.b16 %v67
  %v250 = vunpack.c.l.b16 %v68
  %v251 = vunpack.c.l.b16 %v69
  %v252 = vunpack.c.l.b16 %v70
  %v253 = vunpack.c.l.b16 %v71
  %v254 = vunpack.c.l.b16 %v72
  %v255 = vunpack.c.l.b16 %v73
  %v256 = vunpack.c.l.b16 %v74
  %v257 = vunpack.c.l.b16 %v75
  %v258 = vunpack.c.l.b16 %v76
  %v259 = vunpack.c.l.b16 %v77
  %v260 = vunpack.c.l.b16 %v78
  %v261 = vunpack.c.l.b16 %v79
  %v262 = vunpack.c.l.b16 %v80
  %v263 = vunpack.c.l.b16 %v81
  %v264 = vunpack.c.l.b16 %v82
  %v265 = vunpack.c.l.b16 %v83
  %v266 = vunpack.c.l.b16 %v84
  %v267 = vunpack.c.l.b16 %v85
  %v268 = vunpack.c.l.b16 %v86
  %v269 = vunpack.c.l.b16 %v87
  %v270 = vunpack.c.l.b16 %v88
  %v271 = vunpack.c.l.b16 %v89
  %v272 = vunpack.c.l.b16 %v90
  %v273 = vunpack.c.l.b16 %v91
  %v274 = vunpack.c.l.b16 %v92
  %v275 = vunpack.c.l.b16 %v93
  %v276 = vunpack.c.l.b16 %v94
  %v277 = vpack.c.b16 %v197, %v196
  %v278 = vpack.c.b16 %v199, %v198
  %v279 = vpack.c.b16 %v201, %v200
  %v280 = vpack.c.b16 %v203, %v202
  %v281 = vpack.c.b16 %v205, %v204
  %v282 = vpack.c.b16 %v207, %v206
  %v283 = vpack.c.b16 %v209, %v208
  %v284 = vpack.c.b16 %v211, %v210
  %v285 = vpack.c.b16 %v213, %v212
  %v286 = vpack.c.b16 %v215, %v214
  %v287 = vpack.c.b16 %v217, %v216
  %v288 = vpack.c.b16 %v219, %v218
  %v289 = vpack.c.b16 %v221, %v220
  %v290 = vpack.c.b16 %v223, %v222
  %v291 = vpack.c.b16 %v225, %v224
  %v292 = vpack.c.b16 %v227, %v226
  %v293 = vpack.c.b16 %v229, %v228
  %v294 = vpack.c.b16 %v231, %v230
  %v295 = vpack.c.b16 %v233, %v232
  %v296 = vpack.c.b16 %v235, %v234
  %v297 = vpack.c.b16 %v237, %v236
  %v298 = vpack.c.b16 %v239, %v238
  %v299 = vpack.c.b16 %v241, %v240
  %v300 = vpack.c.b16 %v243, %v242
  %v301 = vpack.c.b16 %v245, %v244
  %v302 = vpack.c.b16 %v247, %v246
  %v303 = vpack.c.b16 %v249, %v248
  %v304 = vpack.c.b16 %v251, %v250
  %v305 = vpack.c.b16 %v253, %v252
  %v306 = vpack.c.b16 %v255, %v254
  %v307 = vpack.c.b16 %v257, %v256
  %v308 = vpack.c.b16 %v259, %v258
  %v309 = vpack.c.b16 %v261, %v260
  %v310 = vpack.c.b16 %v263, %v262
  %v311 = vpack.c.b16 %v265, %v264
  %v312 = vpack.c.b16 %v267, %v266
  %v313 = vpack.c.b16 %v269, %v268
  %v314 = vpack.c.b16 %v271, %v270
  %v315 = vpack.c.b16 %v273, %v272
  %v316 = vpack.c.b16 %v275, %v274
  %v317 = vpack.c.b16 %v276, %v276
  %v375 = vunpack.c.l.b16 %v95
  %v376 = vunpack.c.l.b16 %v96
  %v377 = vunpack.c.l.b16 %v97
  %v378 = vunpack.c.l.b16 %v98
  %v379 = vunpack.c.l.b16 %v99
  %v380 = vunpack.c.l.b16 %v100
  %v381 = vunpack.c.l.b16 %v101
  %v382 = vunpack.c.l.b16 %v102
  %v383 = vunpack.c.l.b16 %v103
  %v384 = vunpack.c.l.b16 %v104
  %v385 = vunpack.c.l.b16 %v105
  %v386 = vunpack.c.l.b16 %v106
  %v387 = vunpack.c.l.b16 %v107
  %v388 = vunpack.c.l.b16 %v108
  %v389 = vunpack.c.l.b16 %v109
  %v390 = vunpack.c.l.b16 %v110
  %v391 = vpack.c.b16 %v376, %v375
  %v392 = vpack.c.b16 %v378, %v377
  %v393 = vpack.c.b16 %v380, %v379
  %v394 = vpack.c.b16 %v382, %v381
  %v395 = vpack.c.b16 %v384, %v383
  %v396 = vpack.c.b16 %v386, %v385
  %v397 = vpack.c.b16 %v388, %v387
  %v398 = vpack.c.b16 %v390, %v389
  %407 = vmatpush.bf16.msra.mxu0 %v398
  %408 = vmatpush.bf16.msra.mxu0 %v397
  %409 = vmatpush.bf16.msra.mxu0 %v396
  %410 = vmatpush.bf16.msra.mxu0 %v395
  %411 = vmatpush.bf16.msra.mxu0 %v394
  %412 = vmatpush.bf16.msra.mxu0 %v393
  %413 = vmatpush.bf16.msra.mxu0 %v392
  %414 = vmatpush.bf16.msra.mxu0 %v391
  %415 = vmatmul.bf16.gmra.mxu0 %v277
  %v416 = vpop.f32.mrf.mxu0
  %v417 = vadd.f32 %v113, %v416
  %v418 = vpop.f32.mrf.mxu0
  %v419 = vadd.f32 %v113, %v418
  %420 = vmatmul.bf16.gmra.mxu0 %v278
  %v421 = vpop.f32.mrf.mxu0
  %v422 = vadd.f32 %v113, %v421
  %v423 = vpop.f32.mrf.mxu0
  %v424 = vadd.f32 %v113, %v423
  %425 = vmatmul.bf16.gmra.mxu0 %v279
  %v426 = vpop.f32.mrf.mxu0
  %v427 = vadd.f32 %v113, %v426
  %v428 = vpop.f32.mrf.mxu0
  %v429 = vadd.f32 %v113, %v428
  %430 = vmatmul.bf16.gmra.mxu0 %v280
  %v431 = vpop.f32.mrf.mxu0
  %v432 = vadd.f32 %v113, %v431
  %v433 = vpop.f32.mrf.mxu0
  %v434 = vadd.f32 %v113, %v433
  %435 = vmatmul.bf16.gmra.mxu0 %v281
  %v436 = vpop.f32.mrf.mxu0
  %v437 = vadd.f32 %v113, %v436
  %v438 = vpop.f32.mrf.mxu0
  %v439 = vadd.f32 %v113, %v438
  %440 = vmatmul.bf16.gmra.mxu0 %v282
  %v441 = vpop.f32.mrf.mxu0
  %v442 = vadd.f32 %v113, %v441
  %v443 = vpop.f32.mrf.mxu0
  %v444 = vadd.f32 %v113, %v443
  %445 = vmatmul.bf16.gmra.mxu0 %v283
  %v446 = vpop.f32.mrf.mxu0
  %v447 = vadd.f32 %v113, %v446
  %v448 = vpop.f32.mrf.mxu0
  %v449 = vadd.f32 %v113, %v448
  %450 = vmatmul.bf16.gmra.mxu0 %v284
  %v451 = vpop.f32.mrf.mxu0
  %v452 = vadd.f32 %v113, %v451
  %v453 = vpop.f32.mrf.mxu0
  %v454 = vadd.f32 %v113, %v453
  %455 = vmatmul.bf16.gmra.mxu0 %v285
  %v456 = vpop.f32.mrf.mxu0
  %v457 = vadd.f32 %v113, %v456
  %v458 = vpop.f32.mrf.mxu0
  %v459 = vadd.f32 %v113, %v458
  %460 = vmatmul.bf16.gmra.mxu0 %v286
  %v461 = vpop.f32.mrf.mxu0
  %v462 = vadd.f32 %v113, %v461
  %v463 = vpop.f32.mrf.mxu0
  %v464 = vadd.f32 %v113, %v463
  %465 = vmatmul.bf16.gmra.mxu0 %v287
  %v466 = vpop.f32.mrf.mxu0
  %v467 = vadd.f32 %v113, %v466
  %v468 = vpop.f32.mrf.mxu0
  %v469 = vadd.f32 %v113, %v468
  %470 = vmatmul.bf16.gmra.mxu0 %v288
  %v471 = vpop.f32.mrf.mxu0
  %v472 = vadd.f32 %v113, %v471
  %v473 = vpop.f32.mrf.mxu0
  %v474 = vadd.f32 %v113, %v473
  %475 = vmatmul.bf16.gmra.mxu0 %v289
  %v476 = vpop.f32.mrf.mxu0
  %v477 = vadd.f32 %v113, %v476
  %v478 = vpop.f32.mrf.mxu0
  %v479 = vadd.f32 %v113, %v478
  %480 = vmatmul.bf16.gmra.mxu0 %v290
  %v481 = vpop.f32.mrf.mxu0
  %v482 = vadd.f32 %v113, %v481
  %v483 = vpop.f32.mrf.mxu0
  %v484 = vadd.f32 %v113, %v483
  %485 = vmatmul.bf16.gmra.mxu0 %v291
  %v486 = vpop.f32.mrf.mxu0
  %v487 = vadd.f32 %v113, %v486
  %v488 = vpop.f32.mrf.mxu0
  %v489 = vadd.f32 %v113, %v488
  %490 = vmatmul.bf16.gmra.mxu0 %v292
  %v491 = vpop.f32.mrf.mxu0
  %v492 = vadd.f32 %v113, %v491
  %v493 = vpop.f32.mrf.mxu0
  %v494 = vadd.f32 %v113, %v493
  %495 = vmatmul.bf16.gmra.mxu0 %v293
  %v496 = vpop.f32.mrf.mxu0
  %v497 = vadd.f32 %v113, %v496
  %v498 = vpop.f32.mrf.mxu0
  %v499 = vadd.f32 %v113, %v498
  %500 = vmatmul.bf16.gmra.mxu0 %v294
  %v501 = vpop.f32.mrf.mxu0
  %v502 = vadd.f32 %v113, %v501
  %v503 = vpop.f32.mrf.mxu0
  %v504 = vadd.f32 %v113, %v503
  %505 = vmatmul.bf16.gmra.mxu0 %v295
  %v506 = vpop.f32.mrf.mxu0
  %v507 = vadd.f32 %v113, %v506
  %v508 = vpop.f32.mrf.mxu0
  %v509 = vadd.f32 %v113, %v508
  %510 = vmatmul.bf16.gmra.mxu0 %v296
  %v511 = vpop.f32.mrf.mxu0
  %v512 = vadd.f32 %v113, %v511
  %v513 = vpop.f32.mrf.mxu0
  %v514 = vadd.f32 %v113, %v513
  %515 = vmatmul.bf16.gmra.mxu0 %v297
  %v516 = vpop.f32.mrf.mxu0
  %v517 = vadd.f32 %v113, %v516
  %v518 = vpop.f32.mrf.mxu0
  %v519 = vadd.f32 %v113, %v518
  %520 = vmatmul.bf16.gmra.mxu0 %v298
  %v521 = vpop.f32.mrf.mxu0
  %v522 = vadd.f32 %v113, %v521
  %v523 = vpop.f32.mrf.mxu0
  %v524 = vadd.f32 %v113, %v523
  %525 = vmatmul.bf16.gmra.mxu0 %v299
  %v526 = vpop.f32.mrf.mxu0
  %v527 = vadd.f32 %v113, %v526
  %v528 = vpop.f32.mrf.mxu0
  %v529 = vadd.f32 %v113, %v528
  %530 = vmatmul.bf16.gmra.mxu0 %v300
  %v531 = vpop.f32.mrf.mxu0
  %v532 = vadd.f32 %v113, %v531
  %v533 = vpop.f32.mrf.mxu0
  %v534 = vadd.f32 %v113, %v533
  %535 = vmatmul.bf16.gmra.mxu0 %v301
  %v536 = vpop.f32.mrf.mxu0
  %v537 = vadd.f32 %v113, %v536
  %v538 = vpop.f32.mrf.mxu0
  %v539 = vadd.f32 %v113, %v538
  %540 = vmatmul.bf16.gmra.mxu0 %v302
  %v541 = vpop.f32.mrf.mxu0
  %v542 = vadd.f32 %v113, %v541
  %v543 = vpop.f32.mrf.mxu0
  %v544 = vadd.f32 %v113, %v543
  %545 = vmatmul.bf16.gmra.mxu0 %v303
  %v546 = vpop.f32.mrf.mxu0
  %v547 = vadd.f32 %v113, %v546
  %v548 = vpop.f32.mrf.mxu0
  %v549 = vadd.f32 %v113, %v548
  %550 = vmatmul.bf16.gmra.mxu0 %v304
  %v551 = vpop.f32.mrf.mxu0
  %v552 = vadd.f32 %v113, %v551
  %v553 = vpop.f32.mrf.mxu0
  %v554 = vadd.f32 %v113, %v553
  %555 = vmatmul.bf16.gmra.mxu0 %v305
  %v556 = vpop.f32.mrf.mxu0
  %v557 = vadd.f32 %v113, %v556
  %v558 = vpop.f32.mrf.mxu0
  %v559 = vadd.f32 %v113, %v558
  %560 = vmatmul.bf16.gmra.mxu0 %v306
  %v561 = vpop.f32.mrf.mxu0
  %v562 = vadd.f32 %v113, %v561
  %v563 = vpop.f32.mrf.mxu0
  %v564 = vadd.f32 %v113, %v563
  %565 = vmatmul.bf16.gmra.mxu0 %v307
  %v566 = vpop.f32.mrf.mxu0
  %v567 = vadd.f32 %v113, %v566
  %v568 = vpop.f32.mrf.mxu0
  %v569 = vadd.f32 %v113, %v568
  %570 = vmatmul.bf16.gmra.mxu0 %v308
  %v571 = vpop.f32.mrf.mxu0
  %v572 = vadd.f32 %v113, %v571
  %v573 = vpop.f32.mrf.mxu0
  %v574 = vadd.f32 %v113, %v573
  %575 = vmatmul.bf16.gmra.mxu0 %v309
  %v576 = vpop.f32.mrf.mxu0
  %v577 = vadd.f32 %v113, %v576
  %v578 = vpop.f32.mrf.mxu0
  %v579 = vadd.f32 %v113, %v578
  %580 = vmatmul.bf16.gmra.mxu0 %v310
  %v581 = vpop.f32.mrf.mxu0
  %v582 = vadd.f32 %v113, %v581
  %v583 = vpop.f32.mrf.mxu0
  %v584 = vadd.f32 %v113, %v583
  %585 = vmatmul.bf16.gmra.mxu0 %v311
  %v586 = vpop.f32.mrf.mxu0
  %v587 = vadd.f32 %v113, %v586
  %v588 = vpop.f32.mrf.mxu0
  %v589 = vadd.f32 %v113, %v588
  %590 = vmatmul.bf16.gmra.mxu0 %v312
  %v591 = vpop.f32.mrf.mxu0
  %v592 = vadd.f32 %v113, %v591
  %v593 = vpop.f32.mrf.mxu0
  %v594 = vadd.f32 %v113, %v593
  %595 = vmatmul.bf16.gmra.mxu0 %v313
  %v596 = vpop.f32.mrf.mxu0
  %v597 = vadd.f32 %v113, %v596
  %v598 = vpop.f32.mrf.mxu0
  %v599 = vadd.f32 %v113, %v598
  %600 = vmatmul.bf16.gmra.mxu0 %v314
  %v601 = vpop.f32.mrf.mxu0
  %v602 = vadd.f32 %v113, %v601
  %v603 = vpop.f32.mrf.mxu0
  %v604 = vadd.f32 %v113, %v603
  %605 = vmatmul.bf16.gmra.mxu0 %v315
  %v606 = vpop.f32.mrf.mxu0
  %v607 = vadd.f32 %v113, %v606
  %v608 = vpop.f32.mrf.mxu0
  %v609 = vadd.f32 %v113, %v608
  %610 = vmatmul.bf16.gmra.mxu0 %v316
  %v611 = vpop.f32.mrf.mxu0
  %v612 = vadd.f32 %v113, %v611
  %v613 = vpop.f32.mrf.mxu0
  %v614 = vadd.f32 %v113, %v613
  %615 = vmatmul.bf16.gmra.mxu0 %v317
  %v616 = vpop.f32.mrf.mxu0
  %v617 = vadd.f32 %v113, %v616
  %v618 = vpop.f32.mrf.mxu0
  %619 = vdwg.mxu0
  %v620 = vmax.f32 %v417, 0.0
  %v621 = vmax.f32 %v419, 0.0
  %v622 = vmax.f32 %v422, 0.0
  %v623 = vmax.f32 %v424, 0.0
  %v624 = vmax.f32 %v427, 0.0
  %v625 = vmax.f32 %v429, 0.0
  %v626 = vmax.f32 %v432, 0.0
  %v627 = vmax.f32 %v434, 0.0
  %v628 = vmax.f32 %v437, 0.0
  %v629 = vmax.f32 %v439, 0.0
  %v630 = vmax.f32 %v442, 0.0
  %v631 = vmax.f32 %v444, 0.0
  %v632 = vmax.f32 %v447, 0.0
  %v633 = vmax.f32 %v449, 0.0
  %v634 = vmax.f32 %v452, 0.0
  %v635 = vmax.f32 %v454, 0.0
  %v636 = vmax.f32 %v457, 0.0
  %v637 = vmax.f32 %v459, 0.0
  %v638 = vmax.f32 %v462, 0.0
  %v639 = vmax.f32 %v464, 0.0
  %v640 = vmax.f32 %v467, 0.0
  %v641 = vmax.f32 %v469, 0.0
  %v642 = vmax.f32 %v472, 0.0
  %v643 = vmax.f32 %v474, 0.0
  %v644 = vmax.f32 %v477, 0.0
  %v645 = vmax.f32 %v479, 0.0
  %v646 = vmax.f32 %v482, 0.0
  %v647 = vmax.f32 %v484, 0.0
  %v648 = vmax.f32 %v487, 0.0
  %v649 = vmax.f32 %v489, 0.0
  %v650 = vmax.f32 %v492, 0.0
  %v651 = vmax.f32 %v494, 0.0
  %v652 = vmax.f32 %v497, 0.0
  %v653 = vmax.f32 %v499, 0.0
  %v654 = vmax.f32 %v502, 0.0
  %v655 = vmax.f32 %v504, 0.0
  %v656 = vmax.f32 %v507, 0.0
  %v657 = vmax.f32 %v509, 0.0
  %v658 = vmax.f32 %v512, 0.0
  %v659 = vmax.f32 %v514, 0.0
  %v660 = vmax.f32 %v517, 0.0
  %v661 = vmax.f32 %v519, 0.0
  %v662 = vmax.f32 %v522, 0.0
  %v663 = vmax.f32 %v524, 0.0
  %v664 = vmax.f32 %v527, 0.0
  %v665 = vmax.f32 %v529, 0.0
  %v666 = vmax.f32 %v532, 0.0
  %v667 = vmax.f32 %v534, 0.0
  %v668 = vmax.f32 %v537, 0.0
  %v669 = vmax.f32 %v539, 0.0
  %v670 = vmax.f32 %v542, 0.0
  %v671 = vmax.f32 %v544, 0.0
  %v672 = vmax.f32 %v547, 0.0
  %v673 = vmax.f32 %v549, 0.0
  %v674 = vmax.f32 %v552, 0.0
  %v675 = vmax.f32 %v554, 0.0
  %v676 = vmax.f32 %v557, 0.0
  %v677 = vmax.f32 %v559, 0.0
  %v678 = vmax.f32 %v562, 0.0
  %v679 = vmax.f32 %v564, 0.0
  %v680 = vmax.f32 %v567, 0.0
  %v681 = vmax.f32 %v569, 0.0
  %v682 = vmax.f32 %v572, 0.0
  %v683 = vmax.f32 %v574, 0.0
  %v684 = vmax.f32 %v577, 0.0
  %v685 = vmax.f32 %v579, 0.0
  %v686 = vmax.f32 %v582, 0.0
  %v687 = vmax.f32 %v584, 0.0
  %v688 = vmax.f32 %v587, 0.0
  %v689 = vmax.f32 %v589, 0.0
  %v690 = vmax.f32 %v592, 0.0
  %v691 = vmax.f32 %v594, 0.0
  %v692 = vmax.f32 %v597, 0.0
  %v693 = vmax.f32 %v599, 0.0
  %v694 = vmax.f32 %v602, 0.0
  %v695 = vmax.f32 %v604, 0.0
  %v696 = vmax.f32 %v607, 0.0
  %v697 = vmax.f32 %v609, 0.0
  %v698 = vmax.f32 %v612, 0.0
  %v699 = vmax.f32 %v614, 0.0
  %v700 = vmax.f32 %v617, 0.0
  %v701 = vpack.c.bf16 %v620, %v620
  %v702 = vpack.c.bf16 %v621, %v621
  %v703 = vpack.c.bf16 %v622, %v622
  %v704 = vpack.c.bf16 %v623, %v623
  %v705 = vpack.c.bf16 %v624, %v624
  %v706 = vpack.c.bf16 %v625, %v625
  %v707 = vpack.c.bf16 %v626, %v626
  %v708 = vpack.c.bf16 %v627, %v627
  %v709 = vpack.c.bf16 %v628, %v628
  %v710 = vpack.c.bf16 %v629, %v629
  %v711 = vpack.c.bf16 %v630, %v630
  %v712 = vpack.c.bf16 %v631, %v631
  %v713 = vpack.c.bf16 %v632, %v632
  %v714 = vpack.c.bf16 %v633, %v633
  %v715 = vpack.c.bf16 %v634, %v634
  %v716 = vpack.c.bf16 %v635, %v635
  %v717 = vpack.c.bf16 %v636, %v636
  %v718 = vpack.c.bf16 %v637, %v637
  %v719 = vpack.c.bf16 %v638, %v638
  %v720 = vpack.c.bf16 %v639, %v639
  %v721 = vpack.c.bf16 %v640, %v640
  %v722 = vpack.c.bf16 %v641, %v641
  %v723 = vpack.c.bf16 %v642, %v642
  %v724 = vpack.c.bf16 %v643, %v643
  %v725 = vpack.c.bf16 %v644, %v644
  %v726 = vpack.c.bf16 %v645, %v645
  %v727 = vpack.c.bf16 %v646, %v646
  %v728 = vpack.c.bf16 %v647, %v647
  %v729 = vpack.c.bf16 %v648, %v648
  %v730 = vpack.c.bf16 %v649, %v649
  %v731 = vpack.c.bf16 %v650, %v650
  %v732 = vpack.c.bf16 %v651, %v651
  %v733 = vpack.c.bf16 %v652, %v652
  %v734 = vpack.c.bf16 %v653, %v653
  %v735 = vpack.c.bf16 %v654, %v654
  %v736 = vpack.c.bf16 %v655, %v655
  %v737 = vpack.c.bf16 %v656, %v656
  %v738 = vpack.c.bf16 %v657, %v657
  %v739 = vpack.c.bf16 %v658, %v658
  %v740 = vpack.c.bf16 %v659, %v659
  %v741 = vpack.c.bf16 %v660, %v660
  %v742 = vpack.c.bf16 %v661, %v661
  %v743 = vpack.c.bf16 %v662, %v662
  %v744 = vpack.c.bf16 %v663, %v663
  %v745 = vpack.c.bf16 %v664, %v664
  %v746 = vpack.c.bf16 %v665, %v665
  %v747 = vpack.c.bf16 %v666, %v666
  %v748 = vpack.c.bf16 %v667, %v667
  %v749 = vpack.c.bf16 %v668, %v668
  %v750 = vpack.c.bf16 %v669, %v669
  %v751 = vpack.c.bf16 %v670, %v670
  %v752 = vpack.c.bf16 %v671, %v671
  %v753 = vpack.c.bf16 %v672, %v672
  %v754 = vpack.c.bf16 %v673, %v673
  %v755 = vpack.c.bf16 %v674, %v674
  %v756 = vpack.c.bf16 %v675, %v675
  %v757 = vpack.c.bf16 %v676, %v676
  %v758 = vpack.c.bf16 %v677, %v677
  %v759 = vpack.c.bf16 %v678, %v678
  %v760 = vpack.c.bf16 %v679, %v679
  %v761 = vpack.c.bf16 %v680, %v680
  %v762 = vpack.c.bf16 %v681, %v681
  %v763 = vpack.c.bf16 %v682, %v682
  %v764 = vpack.c.bf16 %v683, %v683
  %v765 = vpack.c.bf16 %v684, %v684
  %v766 = vpack.c.bf16 %v685, %v685
  %v767 = vpack.c.bf16 %v686, %v686
  %v768 = vpack.c.bf16 %v687, %v687
  %v769 = vpack.c.bf16 %v688, %v688
  %v770 = vpack.c.bf16 %v689, %v689
  %v771 = vpack.c.bf16 %v690, %v690
  %v772 = vpack.c.bf16 %v691, %v691
  %v773 = vpack.c.bf16 %v692, %v692
  %v774 = vpack.c.bf16 %v693, %v693
  %v775 = vpack.c.bf16 %v694, %v694
  %v776 = vpack.c.bf16 %v695, %v695
  %v777 = vpack.c.bf16 %v696, %v696
  %v778 = vpack.c.bf16 %v697, %v697
  %v779 = vpack.c.bf16 %v698, %v698
  %v780 = vpack.c.bf16 %v699, %v699
  %v781 = vpack.c.bf16 %v700, %v700
  %vm782 = vcmask 60416
  %783 = vst.msk [vmem:[%s3] sm:$0xf] %vm782, %v701
  %784 = vst.msk [vmem:[%s3 + $0x4] sm:$0xf] %vm782, %v702
  %785 = vst.msk [vmem:[%s3 + $0x8] sm:$0xf] %vm782, %v703
  %786 = vst.msk [vmem:[%s3 + $0xc] sm:$0xf] %vm782, %v704
  %787 = vst.msk [vmem:[%s3 + $0x10] sm:$0xf] %vm782, %v705
  %788 = vst.msk [vmem:[%s3 + $0x14] sm:$0xf] %vm782, %v706
  %789 = vst.msk [vmem:[%s3 + $0x18] sm:$0xf] %vm782, %v707
  %790 = vst.msk [vmem:[%s3 + $0x1c] sm:$0xf] %vm782, %v708
  %791 = vst.msk [vmem:[%s3 + $0x20] sm:$0xf] %vm782, %v709
  %792 = vst.msk [vmem:[%s3 + $0x24] sm:$0xf] %vm782, %v710
  %793 = vst.msk [vmem:[%s3 + $0x28] sm:$0xf] %vm782, %v711
  %794 = vst.msk [vmem:[%s3 + $0x2c] sm:$0xf] %vm782, %v712
  %795 = vst.msk [vmem:[%s3 + $0x30] sm:$0xf] %vm782, %v713
  %796 = vst.msk [vmem:[%s3 + $0x34] sm:$0xf] %vm782, %v714
  %797 = vst.msk [vmem:[%s3 + $0x38] sm:$0xf] %vm782, %v715
  %798 = vst.msk [vmem:[%s3 + $0x3c] sm:$0xf] %vm782, %v716
  %799 = vst.msk [vmem:[%s3 + $0x40] sm:$0xf] %vm782, %v717
  %800 = vst.msk [vmem:[%s3 + $0x44] sm:$0xf] %vm782, %v718
  %801 = vst.msk [vmem:[%s3 + $0x48] sm:$0xf] %vm782, %v719
  %802 = vst.msk [vmem:[%s3 + $0x4c] sm:$0xf] %vm782, %v720
  %803 = vst.msk [vmem:[%s3 + $0x50] sm:$0xf] %vm782, %v721
  %804 = vst.msk [vmem:[%s3 + $0x54] sm:$0xf] %vm782, %v722
  %805 = vst.msk [vmem:[%s3 + $0x58] sm:$0xf] %vm782, %v723
  %806 = vst.msk [vmem:[%s3 + $0x5c] sm:$0xf] %vm782, %v724
  %807 = vst.msk [vmem:[%s3 + $0x60] sm:$0xf] %vm782, %v725
  %808 = vst.msk [vmem:[%s3 + $0x64] sm:$0xf] %vm782, %v726
  %809 = vst.msk [vmem:[%s3 + $0x68] sm:$0xf] %vm782, %v727
  %810 = vst.msk [vmem:[%s3 + $0x6c] sm:$0xf] %vm782, %v728
  %811 = vst.msk [vmem:[%s3 + $0x70] sm:$0xf] %vm782, %v729
  %812 = vst.msk [vmem:[%s3 + $0x74] sm:$0xf] %vm782, %v730
  %813 = vst.msk [vmem:[%s3 + $0x78] sm:$0xf] %vm782, %v731
  %814 = vst.msk [vmem:[%s3 + $0x7c] sm:$0xf] %vm782, %v732
  %815 = vst.msk [vmem:[%s3 + $0x80] sm:$0xf] %vm782, %v733
  %816 = vst.msk [vmem:[%s3 + $0x84] sm:$0xf] %vm782, %v734
  %817 = vst.msk [vmem:[%s3 + $0x88] sm:$0xf] %vm782, %v735
  %818 = vst.msk [vmem:[%s3 + $0x8c] sm:$0xf] %vm782, %v736
  %819 = vst.msk [vmem:[%s3 + $0x90] sm:$0xf] %vm782, %v737
  %820 = vst.msk [vmem:[%s3 + $0x94] sm:$0xf] %vm782, %v738
  %821 = vst.msk [vmem:[%s3 + $0x98] sm:$0xf] %vm782, %v739
  %822 = vst.msk [vmem:[%s3 + $0x9c] sm:$0xf] %vm782, %v740
  %823 = vst.msk [vmem:[%s3 + $0xa0] sm:$0xf] %vm782, %v741
  %824 = vst.msk [vmem:[%s3 + $0xa4] sm:$0xf] %vm782, %v742
  %825 = vst.msk [vmem:[%s3 + $0xa8] sm:$0xf] %vm782, %v743
  %826 = vst.msk [vmem:[%s3 + $0xac] sm:$0xf] %vm782, %v744
  %827 = vst.msk [vmem:[%s3 + $0xb0] sm:$0xf] %vm782, %v745
  %828 = vst.msk [vmem:[%s3 + $0xb4] sm:$0xf] %vm782, %v746
  %829 = vst.msk [vmem:[%s3 + $0xb8] sm:$0xf] %vm782, %v747
  %830 = vst.msk [vmem:[%s3 + $0xbc] sm:$0xf] %vm782, %v748
  %831 = vst.msk [vmem:[%s3 + $0xc0] sm:$0xf] %vm782, %v749
  %832 = vst.msk [vmem:[%s3 + $0xc4] sm:$0xf] %vm782, %v750
  %833 = vst.msk [vmem:[%s3 + $0xc8] sm:$0xf] %vm782, %v751
  %834 = vst.msk [vmem:[%s3 + $0xcc] sm:$0xf] %vm782, %v752
  %835 = vst.msk [vmem:[%s3 + $0xd0] sm:$0xf] %vm782, %v753
  %836 = vst.msk [vmem:[%s3 + $0xd4] sm:$0xf] %vm782, %v754
  %837 = vst.msk [vmem:[%s3 + $0xd8] sm:$0xf] %vm782, %v755
  %838 = vst.msk [vmem:[%s3 + $0xdc] sm:$0xf] %vm782, %v756
  %839 = vst.msk [vmem:[%s3 + $0xe0] sm:$0xf] %vm782, %v757
  %840 = vst.msk [vmem:[%s3 + $0xe4] sm:$0xf] %vm782, %v758
  %841 = vst.msk [vmem:[%s3 + $0xe8] sm:$0xf] %vm782, %v759
  %842 = vst.msk [vmem:[%s3 + $0xec] sm:$0xf] %vm782, %v760
  %843 = vst.msk [vmem:[%s3 + $0xf0] sm:$0xf] %vm782, %v761
  %844 = vst.msk [vmem:[%s3 + $0xf4] sm:$0xf] %vm782, %v762
  %845 = vst.msk [vmem:[%s3 + $0xf8] sm:$0xf] %vm782, %v763
  %846 = vst.msk [vmem:[%s3 + $0xfc] sm:$0xf] %vm782, %v764
  %847 = vst.msk [vmem:[%s3 + $0x100] sm:$0xf] %vm782, %v765
  %848 = vst.msk [vmem:[%s3 + $0x104] sm:$0xf] %vm782, %v766
  %849 = vst.msk [vmem:[%s3 + $0x108] sm:$0xf] %vm782, %v767
  %850 = vst.msk [vmem:[%s3 + $0x10c] sm:$0xf] %vm782, %v768
  %851 = vst.msk [vmem:[%s3 + $0x110] sm:$0xf] %vm782, %v769
  %852 = vst.msk [vmem:[%s3 + $0x114] sm:$0xf] %vm782, %v770
  %853 = vst.msk [vmem:[%s3 + $0x118] sm:$0xf] %vm782, %v771
  %854 = vst.msk [vmem:[%s3 + $0x11c] sm:$0xf] %vm782, %v772
  %855 = vst.msk [vmem:[%s3 + $0x120] sm:$0xf] %vm782, %v773
  %856 = vst.msk [vmem:[%s3 + $0x124] sm:$0xf] %vm782, %v774
  %857 = vst.msk [vmem:[%s3 + $0x128] sm:$0xf] %vm782, %v775
  %858 = vst.msk [vmem:[%s3 + $0x12c] sm:$0xf] %vm782, %v776
  %859 = vst.msk [vmem:[%s3 + $0x130] sm:$0xf] %vm782, %v777
  %860 = vst.msk [vmem:[%s3 + $0x134] sm:$0xf] %vm782, %v778
  %861 = vst.msk [vmem:[%s3 + $0x138] sm:$0xf] %vm782, %v779
  %862 = vst.msk [vmem:[%s3 + $0x13c] sm:$0xf] %vm782, %v780
  %863 = vst.msk [vmem:[%s3 + $0x140] sm:$0xf] %vm782, %v781
  // Predicated region
  $region14: #{forward.6} parent=0 // pred_check
    _
  $region15: #{forward.6} parent=0 // pred_check_branch
    %865 = sbr.rel (0) target = $region17
  $region16: #{forward.6} parent=0 // pred_region
    _
  $region17: #{forward.6} parent=0 // pred_fallthru
    _
  // Predicated region
  $region18: #{forward.6} parent=0 // pred_check
    _
  $region19: #{forward.6} parent=0 // pred_check_branch
    %867 = sbr.rel (0) target = $region21
  $region20: #{forward.6} parent=0 // pred_region
    _
  $region21: #{forward.6} parent=0 // pred_fallthru
    _

// kernel: forward.7
$region0: #{forward.7}
  #allocation0 [shape = 'u32[]', space=smem, size = 0x4, offset = 0x4, fixed_abs, tag = 'smem constant byte address 0x4 - core index']
  #allocation1 [shape = 'u32[72,128]{1,0:T(1,128)}', space=vmem, size = 0x9000, scoped, tag = 'internal scratch']
  %s0 = inlined_call_operand.vmem [shape: bf16[2,648], index: 0, kind: input, shape index: {}]
  %s1 = inlined_call_operand.vmem [shape: bf16[648,32], index: 1, kind: input, shape index: {}]
  %s2 = inlined_call_operand.vmem [shape: f32[1,32], index: 2, kind: input, shape index: {}]
  %s3 = inlined_call_operand.vmem [shape: f32[1,32], index: 3, kind: input, shape index: {}]
  %s4 = inlined_call_operand.vmem [shape: f32[1,32], index: 4, kind: input, shape index: {}]
  %s5 = inlined_call_operand.vmem [shape: bf16[32,32], index: 5, kind: input, shape index: {}]
  %s6 = inlined_call_operand.vmem [shape: f32[1,32], index: 6, kind: input, shape index: {}]
  %s7 = inlined_call_operand.vmem [shape: bf16[32,32], index: 7, kind: input, shape index: {}]
  %s8 = inlined_call_operand.vmem [shape: f32[1,32], index: 8, kind: input, shape index: {}]
  %s9 = inlined_call_operand.vmem [shape: bf16[32,3], index: 9, kind: input, shape index: {}]
  %s10 = inlined_call_operand.vmem [shape: f32[1,3], index: 10, kind: input, shape index: {}]
  %s11 = inlined_call_operand.hbm [shape: f32[2,3], index: 11, kind: output, shape index: {}]
  %s12 = sld [smem:[#allocation0]]
  $region54: #{forward.7} parent=0
    _
  %s14 = ssub.s32 1, %s12
  %s15 = scalar_select 0, %s14, %s12
  $region1: #{forward.7} parent=0
    #allocation2 [shape = 'u8[1024]{0}', space=vmem, size = 0x400, scoped, tag = 'output window, operand 0, single buffered']
    #allocation3 [shape = 's32[1]{0}', space=sflag, size = 0x4, scoped, tag = 'scoped memory for forward.7']
    %16 = vsyncpa [#allocation3], 0
    // Predicated region
    $region2: #{forward.7} parent=1 // pred_check
      _
    $region3: #{forward.7} parent=1 // pred_check_branch
      %18 = sbr.rel (0) target = $region5
    $region4: #{forward.7} parent=1 // pred_region
      _
    $region5: #{forward.7} parent=1 // pred_fallthru
      _
    // Predicated region
    $region6: #{forward.7} parent=1 // pred_check
      _
    $region7: #{forward.7} parent=1 // pred_check_branch
      %20 = sbr.rel (0) target = $region9
    $region8: #{forward.7} parent=1 // pred_region
      _
    $region9: #{forward.7} parent=1 // pred_fallthru
      _
    // Predicated region
    $region10: #{forward.7} parent=1 // pred_check
      _
    $region11: #{forward.7} parent=1 // pred_check_branch
      %22 = sbr.rel (0) target = $region13
    $region12: #{forward.7} parent=1 // pred_region
      _
    $region13: #{forward.7} parent=1 // pred_fallthru
      _
    // Predicated region
    $region14: #{forward.7} parent=1 // pred_check
      _
    $region15: #{forward.7} parent=1 // pred_check_branch
      %24 = sbr.rel (0) target = $region17
    $region16: #{forward.7} parent=1 // pred_region
      _
    $region17: #{forward.7} parent=1 // pred_fallthru
      _
    // Predicated region
    $region18: #{forward.7} parent=1 // pred_check
      _
    $region19: #{forward.7} parent=1 // pred_check_branch
      %26 = sbr.rel (0) target = $region21
    $region20: #{forward.7} parent=1 // pred_region
      _
    $region21: #{forward.7} parent=1 // pred_fallthru
      _
    // Predicated region
    $region22: #{forward.7} parent=1 // pred_check
      _
    $region23: #{forward.7} parent=1 // pred_check_branch
      %28 = sbr.rel (0) target = $region25
    $region24: #{forward.7} parent=1 // pred_region
      _
    $region25: #{forward.7} parent=1 // pred_fallthru
      _
    // Predicated region
    $region26: #{forward.7} parent=1 // pred_check
      _
    $region27: #{forward.7} parent=1 // pred_check_branch
      %30 = sbr.rel (0) target = $region29
    $region28: #{forward.7} parent=1 // pred_region
      _
    $region29: #{forward.7} parent=1 // pred_fallthru
      _
    // Predicated region
    $region30: #{forward.7} parent=1 // pred_check
      _
    $region31: #{forward.7} parent=1 // pred_check_branch
      %32 = sbr.rel (0) target = $region33
    $region32: #{forward.7} parent=1 // pred_region
      _
    $region33: #{forward.7} parent=1 // pred_fallthru
      _
    // Predicated region
    $region34: #{forward.7} parent=1 // pred_check
      _
    $region35: #{forward.7} parent=1 // pred_check_branch
      %34 = sbr.rel (0) target = $region37
    $region36: #{forward.7} parent=1 // pred_region
      _
    $region37: #{forward.7} parent=1 // pred_fallthru
      _
    // Predicated region
    $region38: #{forward.7} parent=1 // pred_check
      _
    $region39: #{forward.7} parent=1 // pred_check_branch
      %36 = sbr.rel (0) target = $region41
    $region40: #{forward.7} parent=1 // pred_region
      _
    $region41: #{forward.7} parent=1 // pred_fallthru
      _
    // Predicated region
    $region42: #{forward.7} parent=1 // pred_check
      _
    $region43: #{forward.7} parent=1 // pred_check_branch
      %38 = sbr.rel (0) target = $region45
    $region44: #{forward.7} parent=1 // pred_region
      _
    $region45: #{forward.7} parent=1 // pred_fallthru
      _
    %v40 = vld [vmem:[%s0] sm:$0x3f]
    %v41 = vld [vmem:[%s1] sm:$0xf]
    %v42 = vld [vmem:[%s1 + $0x4] sm:$0xf]
    %v43 = vld [vmem:[%s1 + $0x8] sm:$0xf]
    %v44 = vld [vmem:[%s1 + $0xc] sm:$0xf]
    %v45 = vld [vmem:[%s1 + $0x10] sm:$0xf]
    %v46 = vld [vmem:[%s1 + $0x14] sm:$0xf]
    %v47 = vld [vmem:[%s1 + $0x18] sm:$0xf]
    %v48 = vld [vmem:[%s1 + $0x1c] sm:$0xf]
    %v49 = vld [vmem:[%s1 + $0x20] sm:$0xf]
    %v50 = vld [vmem:[%s1 + $0x24] sm:$0xf]
    %v51 = vld [vmem:[%s1 + $0x28] sm:$0xf]
    %v52 = vld [vmem:[%s1 + $0x2c] sm:$0xf]
    %v53 = vld [vmem:[%s1 + $0x30] sm:$0xf]
    %v54 = vld [vmem:[%s1 + $0x34] sm:$0xf]
    %v55 = vld [vmem:[%s1 + $0x38] sm:$0xf]
    %v56 = vld [vmem:[%s1 + $0x3c] sm:$0xf]
    %v57 = vld [vmem:[%s1 + $0x40] sm:$0xf]
    %v58 = vld [vmem:[%s1 + $0x44] sm:$0xf]
    %v59 = vld [vmem:[%s1 + $0x48] sm:$0xf]
    %v60 = vld [vmem:[%s1 + $0x4c] sm:$0xf]
    %v61 = vld [vmem:[%s1 + $0x50] sm:$0xf]
    %v62 = vld [vmem:[%s1 + $0x54] sm:$0xf]
    %v63 = vld [vmem:[%s1 + $0x58] sm:$0xf]
    %v64 = vld [vmem:[%s1 + $0x5c] sm:$0xf]
    %v65 = vld [vmem:[%s1 + $0x60] sm:$0xf]
    %v66 = vld [vmem:[%s1 + $0x64] sm:$0xf]
    %v67 = vld [vmem:[%s1 + $0x68] sm:$0xf]
    %v68 = vld [vmem:[%s1 + $0x6c] sm:$0xf]
    %v69 = vld [vmem:[%s1 + $0x70] sm:$0xf]
    %v70 = vld [vmem:[%s1 + $0x74] sm:$0xf]
    %v71 = vld [vmem:[%s1 + $0x78] sm:$0xf]
    %v72 = vld [vmem:[%s1 + $0x7c] sm:$0xf]
    %v73 = vld [vmem:[%s1 + $0x80] sm:$0xf]
    %v74 = vld [vmem:[%s1 + $0x84] sm:$0xf]
    %v75 = vld [vmem:[%s1 + $0x88] sm:$0xf]
    %v76 = vld [vmem:[%s1 + $0x8c] sm:$0xf]
    %v77 = vld [vmem:[%s1 + $0x90] sm:$0xf]
    %v78 = vld [vmem:[%s1 + $0x94] sm:$0xf]
    %v79 = vld [vmem:[%s1 + $0x98] sm:$0xf]
    %v80 = vld [vmem:[%s1 + $0x9c] sm:$0xf]
    %v81 = vld [vmem:[%s1 + $0xa0] sm:$0xf]
    %v82 = vld [vmem:[%s1 + $0xa4] sm:$0xf]
    %v83 = vld [vmem:[%s1 + $0xa8] sm:$0xf]
    %v84 = vld [vmem:[%s1 + $0xac] sm:$0xf]
    %v85 = vld [vmem:[%s1 + $0xb0] sm:$0xf]
    %v86 = vld [vmem:[%s1 + $0xb4] sm:$0xf]
    %v87 = vld [vmem:[%s1 + $0xb8] sm:$0xf]
    %v88 = vld [vmem:[%s1 + $0xbc] sm:$0xf]
    %v89 = vld [vmem:[%s1 + $0xc0] sm:$0xf]
    %v90 = vld [vmem:[%s1 + $0xc4] sm:$0xf]
    %v91 = vld [vmem:[%s1 + $0xc8] sm:$0xf]
    %v92 = vld [vmem:[%s1 + $0xcc] sm:$0xf]
    %v93 = vld [vmem:[%s1 + $0xd0] sm:$0xf]
    %v94 = vld [vmem:[%s1 + $0xd4] sm:$0xf]
    %v95 = vld [vmem:[%s1 + $0xd8] sm:$0xf]
    %v96 = vld [vmem:[%s1 + $0xdc] sm:$0xf]
    %v97 = vld [vmem:[%s1 + $0xe0] sm:$0xf]
    %v98 = vld [vmem:[%s1 + $0xe4] sm:$0xf]
    %v99 = vld [vmem:[%s1 + $0xe8] sm:$0xf]
    %v100 = vld [vmem:[%s1 + $0xec] sm:$0xf]
    %v101 = vld [vmem:[%s1 + $0xf0] sm:$0xf]
    %v102 = vld [vmem:[%s1 + $0xf4] sm:$0xf]
    %v103 = vld [vmem:[%s1 + $0xf8] sm:$0xf]
    %v104 = vld [vmem:[%s1 + $0xfc] sm:$0xf]
    %v105 = vld [vmem:[%s1 + $0x100] sm:$0xf]
    %v106 = vld [vmem:[%s1 + $0x104] sm:$0xf]
    %v107 = vld [vmem:[%s1 + $0x108] sm:$0xf]
    %v108 = vld [vmem:[%s1 + $0x10c] sm:$0xf]
    %v109 = vld [vmem:[%s1 + $0x110] sm:$0xf]
    %v110 = vld [vmem:[%s1 + $0x114] sm:$0xf]
    %v111 = vld [vmem:[%s1 + $0x118] sm:$0xf]
    %v112 = vld [vmem:[%s1 + $0x11c] sm:$0xf]
    %v113 = vld [vmem:[%s1 + $0x120] sm:$0xf]
    %v114 = vld [vmem:[%s1 + $0x124] sm:$0xf]
    %v115 = vld [vmem:[%s1 + $0x128] sm:$0xf]
    %v116 = vld [vmem:[%s1 + $0x12c] sm:$0xf]
    %v117 = vld [vmem:[%s1 + $0x130] sm:$0xf]
    %v118 = vld [vmem:[%s1 + $0x134] sm:$0xf]
    %v119 = vld [vmem:[%s1 + $0x138] sm:$0xf]
    %v120 = vld [vmem:[%s1 + $0x13c] sm:$0xf]
    %v121 = vld [vmem:[%s1 + $0x140] sm:$0xf]
    %v122 = vld [vmem:[%s2] sm:$0x1]
    %v124 = vperm.slane %v122, 0
    %127 = vst [vmem:[#allocation1] ss:$9 sm:$0xff] %v40
    %v128 = vld [vmem:[#allocation1] sm:$0xff]
    %v129 = vld [vmem:[#allocation1 + $0x9] sm:$0xff]
    %v130 = vld [vmem:[#allocation1 + $0x12] sm:$0xff]
    %v131 = vld [vmem:[#allocation1 + $0x1b] sm:$0xff]
    %v132 = vld [vmem:[#allocation1 + $0x24] sm:$0xff]
    %v133 = vld [vmem:[#allocation1 + $0x2d] sm:$0xff]
    %v220 = vunpack.c.l.b16 %v41
    %v221 = vunpack.c.l.b16 %v42
    %v222 = vunpack.c.l.b16 %v43
    %v223 = vunpack.c.l.b16 %v44
    %v224 = vunpack.c.l.b16 %v45
    %v225 = vunpack.c.l.b16 %v46
    %v226 = vunpack.c.l.b16 %v47
    %v227 = vunpack.c.l.b16 %v48
    %v228 = vunpack.c.l.b16 %v49
    %v229 = vunpack.c.l.b16 %v50
    %v230 = vunpack.c.l.b16 %v51
    %v231 = vunpack.c.l.b16 %v52
    %v232 = vunpack.c.l.b16 %v53
    %v233 = vunpack.c.l.b16 %v54
    %v234 = vunpack.c.l.b16 %v55
    %v235 = vunpack.c.l.b16 %v56
    %v236 = vunpack.c.l.b16 %v57
    %v237 = vunpack.c.l.b16 %v58
    %v238 = vunpack.c.l.b16 %v59
    %v239 = vunpack.c.l.b16 %v60
    %v240 = vunpack.c.l.b16 %v61
    %v241 = vunpack.c.l.b16 %v62
    %v242 = vunpack.c.l.b16 %v63
    %v243 = vunpack.c.l.b16 %v64
    %v244 = vunpack.c.l.b16 %v65
    %v245 = vunpack.c.l.b16 %v66
    %v246 = vunpack.c.l.b16 %v67
    %v247 = vunpack.c.l.b16 %v68
    %v248 = vunpack.c.l.b16 %v69
    %v249 = vunpack.c.l.b16 %v70
    %v250 = vunpack.c.l.b16 %v71
    %v251 = vunpack.c.l.b16 %v72
    %v252 = vunpack.c.l.b16 %v73
    %v253 = vunpack.c.l.b16 %v74
    %v254 = vunpack.c.l.b16 %v75
    %v255 = vunpack.c.l.b16 %v76
    %v256 = vunpack.c.l.b16 %v77
    %v257 = vunpack.c.l.b16 %v78
    %v258 = vunpack.c.l.b16 %v79
    %v259 = vunpack.c.l.b16 %v80
    %v260 = vunpack.c.l.b16 %v81
    %v261 = vunpack.c.l.b16 %v82
    %v262 = vunpack.c.l.b16 %v83
    %v263 = vunpack.c.l.b16 %v84
    %v264 = vunpack.c.l.b16 %v85
    %v265 = vunpack.c.l.b16 %v86
    %v266 = vunpack.c.l.b16 %v87
    %v267 = vunpack.c.l.b16 %v88
    %v268 = vunpack.c.l.b16 %v89
    %v269 = vunpack.c.l.b16 %v90
    %v270 = vunpack.c.l.b16 %v91
    %v271 = vunpack.c.l.b16 %v92
    %v272 = vunpack.c.l.b16 %v93
    %v273 = vunpack.c.l.b16 %v94
    %v274 = vunpack.c.l.b16 %v95
    %v275 = vunpack.c.l.b16 %v96
    %v276 = vunpack.c.l.b16 %v97
    %v277 = vunpack.c.l.b16 %v98
    %v278 = vunpack.c.l.b16 %v99
    %v279 = vunpack.c.l.b16 %v100
    %v280 = vunpack.c.l.b16 %v101
    %v281 = vunpack.c.l.b16 %v102
    %v282 = vunpack.c.l.b16 %v103
    %v283 = vunpack.c.l.b16 %v104
    %v284 = vunpack.c.l.b16 %v105
    %v285 = vunpack.c.l.b16 %v106
    %v286 = vunpack.c.l.b16 %v107
    %v287 = vunpack.c.l.b16 %v108
    %v288 = vunpack.c.l.b16 %v109
    %v289 = vunpack.c.l.b16 %v110
    %v290 = vunpack.c.l.b16 %v111
    %v291 = vunpack.c.l.b16 %v112
    %v292 = vunpack.c.l.b16 %v113
    %v293 = vunpack.c.l.b16 %v114
    %v294 = vunpack.c.l.b16 %v115
    %v295 = vunpack.c.l.b16 %v116
    %v296 = vunpack.c.l.b16 %v117
    %v297 = vunpack.c.l.b16 %v118
    %v298 = vunpack.c.l.b16 %v119
    %v299 = vunpack.c.l.b16 %v120
    %v300 = vunpack.c.l.b16 %v121
    %v301 = vpack.c.b16 %v221, %v220
    %v302 = vpack.c.b16 %v223, %v222
    %v303 = vpack.c.b16 %v225, %v224
    %v304 = vpack.c.b16 %v227, %v226
    %v305 = vpack.c.b16 %v229, %v228
    %v306 = vpack.c.b16 %v231, %v230
    %v307 = vpack.c.b16 %v233, %v232
    %v308 = vpack.c.b16 %v235, %v234
    %v309 = vpack.c.b16 %v237, %v236
    %v310 = vpack.c.b16 %v239, %v238
    %v311 = vpack.c.b16 %v241, %v240
    %v312 = vpack.c.b16 %v243, %v242
    %v313 = vpack.c.b16 %v245, %v244
    %v314 = vpack.c.b16 %v247, %v246
    %v315 = vpack.c.b16 %v249, %v248
    %v316 = vpack.c.b16 %v251, %v250
    %v317 = vpack.c.b16 %v253, %v252
    %v318 = vpack.c.b16 %v255, %v254
    %v319 = vpack.c.b16 %v257, %v256
    %v320 = vpack.c.b16 %v259, %v258
    %v321 = vpack.c.b16 %v261, %v260
    %v322 = vpack.c.b16 %v263, %v262
    %v323 = vpack.c.b16 %v265, %v264
    %v324 = vpack.c.b16 %v267, %v266
    %v325 = vpack.c.b16 %v269, %v268
    %v326 = vpack.c.b16 %v271, %v270
    %v327 = vpack.c.b16 %v273, %v272
    %v328 = vpack.c.b16 %v275, %v274
    %v329 = vpack.c.b16 %v277, %v276
    %v330 = vpack.c.b16 %v279, %v278
    %v331 = vpack.c.b16 %v281, %v280
    %v332 = vpack.c.b16 %v283, %v282
    %v333 = vpack.c.b16 %v285, %v284
    %v334 = vpack.c.b16 %v287, %v286
    %v335 = vpack.c.b16 %v289, %v288
    %v336 = vpack.c.b16 %v291, %v290
    %v337 = vpack.c.b16 %v293, %v292
    %v338 = vpack.c.b16 %v295, %v294
    %v339 = vpack.c.b16 %v297, %v296
    %v340 = vpack.c.b16 %v299, %v298
    %v341 = vpack.c.b16 %v300, %v300
    %vm382 = vcmask 64512
    %v383 = vsel %vm382, %v133, 0
    %vm385 = vcmask 1043456
    %v387 = vsel %vm385, %v341, 0
    %389 = vmatpush.bf16.msra.mxu0 %v308
    %390 = vmatpush.bf16.msra.mxu0 %v307
    %391 = vmatpush.bf16.msra.mxu0 %v306
    %392 = vmatpush.bf16.msra.mxu0 %v305
    %393 = vmatpush.bf16.msra.mxu0 %v304
    %394 = vmatpush.bf16.msra.mxu0 %v303
    %395 = vmatpush.bf16.msra.mxu0 %v302
    %396 = vmatpush.bf16.msra.mxu0 %v301
    %397 = vmatmul.bf16.gmra.mxu0 %v128
    %v398 = vpop.f32.mrf.mxu0
    %v399 = vadd.f32 %v124, %v398
    %v400 = vpop.f32.mrf.mxu0
    %401 = vdwg.mxu0
    %402 = vmatpush.bf16.msra.mxu0 %v316
    %403 = vmatpush.bf16.msra.mxu0 %v315
    %404 = vmatpush.bf16.msra.mxu0 %v314
    %405 = vmatpush.bf16.msra.mxu0 %v313
    %406 = vmatpush.bf16.msra.mxu0 %v312
    %407 = vmatpush.bf16.msra.mxu0 %v311
    %408 = vmatpush.bf16.msra.mxu0 %v310
    %409 = vmatpush.bf16.msra.mxu0 %v309
    %410 = vmatmul.bf16.gmra.mxu0 %v129
    %v411 = vpop.f32.mrf.mxu0
    %v412 = vadd.f32 %v399, %v411
    %v413 = vpop.f32.mrf.mxu0
    %414 = vdwg.mxu0
    %415 = vmatpush.bf16.msra.mxu0 %v324
    %416 = vmatpush.bf16.msra.mxu0 %v323
    %417 = vmatpush.bf16.msra.mxu0 %v322
    %418 = vmatpush.bf16.msra.mxu0 %v321
    %419 = vmatpush.bf16.msra.mxu0 %v320
    %420 = vmatpush.bf16.msra.mxu0 %v319
    %421 = vmatpush.bf16.msra.mxu0 %v318
    %422 = vmatpush.bf16.msra.mxu0 %v317
    %423 = vmatmul.bf16.gmra.mxu0 %v130
    %v424 = vpop.f32.mrf.mxu0
    %v425 = vadd.f32 %v412, %v424
    %v426 = vpop.f32.mrf.mxu0
    %427 = vdwg.mxu0
    %428 = vmatpush.bf16.msra.mxu0 %v332
    %429 = vmatpush.bf16.msra.mxu0 %v331
    %430 = vmatpush.bf16.msra.mxu0 %v330
    %431 = vmatpush.bf16.msra.mxu0 %v329
    %432 = vmatpush.bf16.msra.mxu0 %v328
    %433 = vmatpush.bf16.msra.mxu0 %v327
    %434 = vmatpush.bf16.msra.mxu0 %v326
    %435 = vmatpush.bf16.msra.mxu0 %v325
    %436 = vmatmul.bf16.gmra.mxu0 %v131
    %v437 = vpop.f32.mrf.mxu0
    %v438 = vadd.f32 %v425, %v437
    %v439 = vpop.f32.mrf.mxu0
    %440 = vdwg.mxu0
    %441 = vmatpush.bf16.msra.mxu0 %v340
    %442 = vmatpush.bf16.msra.mxu0 %v339
    %443 = vmatpush.bf16.msra.mxu0 %v338
    %444 = vmatpush.bf16.msra.mxu0 %v337
    %445 = vmatpush.bf16.msra.mxu0 %v336
    %446 = vmatpush.bf16.msra.mxu0 %v335
    %447 = vmatpush.bf16.msra.mxu0 %v334
    %448 = vmatpush.bf16.msra.mxu0 %v333
    %449 = vmatmul.bf16.gmra.mxu0 %v132
    %v450 = vpop.f32.mrf.mxu0
    %v451 = vadd.f32 %v438, %v450
    %v452 = vpop.f32.mrf.mxu0
    %453 = vdwg.mxu0
    %454 = vmatpush.bf16.msra.mxu0 0
    %455 = vmatpush.bf16.msra.mxu0 0
    %456 = vmatpush.bf16.msra.mxu0 0
    %457 = vmatpush.bf16.msra.mxu0 0
    %458 = vmatpush.bf16.msra.mxu0 0
    %459 = vmatpush.bf16.msra.mxu0 0
    %460 = vmatpush.bf16.msra.mxu0 0
    %461 = vmatpush.bf16.msra.mxu0 %v387
    %462 = vmatmul.bf16.gmra.mxu0 %v383
    %v463 = vpop.f32.mrf.mxu0
    %v464 = vadd.f32 %v451, %v463
    %v465 = vpop.f32.mrf.mxu0
    %466 = vdwg.mxu0
    %v467 = vmax.f32 %v464, 0.0
    %v468 = vld [vmem:[%s3] sm:$0x1]
    %v470 = vperm.slane %v468, 0
    %v472 = vmul.f32 %v467, %v470
    %v473 = vld [vmem:[%s4] sm:$0x1]
    %v475 = vperm.slane %v473, 0
    %v477 = vadd.f32 %v472, %v475
    %v478 = vpack.c.bf16 %v477, %v477
    %v479 = vld [vmem:[%s5] sm:$0xf]
    %v480 = vld [vmem:[%s5 + $0x4] sm:$0xf]
    %v481 = vld [vmem:[%s5 + $0x8] sm:$0xf]
    %v482 = vld [vmem:[%s5 + $0xc] sm:$0xf]
    %v483 = vld [vmem:[%s6] sm:$0x1]
    %v485 = vperm.slane %v483, 0
    %v491 = vunpack.c.l.b16 %v479
    %v492 = vunpack.c.l.b16 %v480
    %v493 = vunpack.c.l.b16 %v481
    %v494 = vunpack.c.l.b16 %v482
    %v495 = vpack.c.b16 %v492, %v491
    %v496 = vpack.c.b16 %v494, %v493
    %vm499 = vcmask 261120
    %v501 = vsel %vm499, %v478, 0
    %503 = vmatpush.bf16.msra.mxu0 0
    %504 = vmatpush.bf16.msra.mxu0 0
    %505 = vmatpush.bf16.msra.mxu0 0
    %506 = vmatpush.bf16.msra.mxu0 0
    %507 = vmatpush.bf16.msra.mxu0 0
    %508 = vmatpush.bf16.msra.mxu0 0
    %509 = vmatpush.bf16.msra.mxu0 %v496
    %510 = vmatpush.bf16.msra.mxu0 %v495
    %511 = vmatmul.bf16.gmra.mxu0 %v501
    %v512 = vpop.f32.mrf.mxu0
    %v513 = vadd.f32 %v485, %v512
    %v514 = vpop.f32.mrf.mxu0
    %515 = vdwg.mxu0
    %v516 = vmax.f32 %v513, 0.0
    %v517 = vpack.c.bf16 %v516, %v516
    %v518 = vld [vmem:[%s7] sm:$0xf]
    %v519 = vld [vmem:[%s7 + $0x4] sm:$0xf]
    %v520 = vld [vmem:[%s7 + $0x8] sm:$0xf]
    %v521 = vld [vmem:[%s7 + $0xc] sm:$0xf]
    %v522 = vld [vmem:[%s8] sm:$0x1]
    %v524 = vperm.slane %v522, 0
    %v530 = vunpack.c.l.b16 %v518
    %v531 = vunpack.c.l.b16 %v519
    %v532 = vunpack.c.l.b16 %v520
    %v533 = vunpack.c.l.b16 %v521
    %v534 = vpack.c.b16 %v531, %v530
    %v535 = vpack.c.b16 %v533, %v532
    %v539 = vsel %vm499, %v517, 0
    %541 = vmatpush.bf16.msra.mxu0 0
    %542 = vmatpush.bf16.msra.mxu0 0
    %543 = vmatpush.bf16.msra.mxu0 0
    %544 = vmatpush.bf16.msra.mxu0 0
    %545 = vmatpush.bf16.msra.mxu0 0
    %546 = vmatpush.bf16.msra.mxu0 0
    %547 = vmatpush.bf16.msra.mxu0 %v535
    %548 = vmatpush.bf16.msra.mxu0 %v534
    %549 = vmatmul.bf16.gmra.mxu0 %v539
    %v550 = vpop.f32.mrf.mxu0
    %v551 = vadd.f32 %v524, %v550
    %v552 = vpop.f32.mrf.mxu0
    %553 = vdwg.mxu0
    %v554 = vmax.f32 %v551, 0.0
    %v555 = vpack.c.bf16 %v554, %v554
    %v556 = vld [vmem:[%s9] sm:$0xf]
    %v557 = vld [vmem:[%s9 + $0x4] sm:$0xf]
    %v558 = vld [vmem:[%s9 + $0x8] sm:$0xf]
    %v559 = vld [vmem:[%s9 + $0xc] sm:$0xf]
    %v560 = vld [vmem:[%s10] sm:$0x1]
    %v562 = vperm.slane %v560, 0
    %v568 = vunpack.c.l.b16 %v556
    %v569 = vunpack.c.l.b16 %v557
    %v570 = vunpack.c.l.b16 %v558
    %v571 = vunpack.c.l.b16 %v559
    %v572 = vpack.c.b16 %v569, %v568
    %v573 = vpack.c.b16 %v571, %v570
    %v577 = vsel %vm499, %v555, 0
    %579 = vmatpush.bf16.msra.mxu0 0
    %580 = vmatpush.bf16.msra.mxu0 0
    %581 = vmatpush.bf16.msra.mxu0 0
    %582 = vmatpush.bf16.msra.mxu0 0
    %583 = vmatpush.bf16.msra.mxu0 0
    %584 = vmatpush.bf16.msra.mxu0 0
    %585 = vmatpush.bf16.msra.mxu0 %v573
    %586 = vmatpush.bf16.msra.mxu0 %v572
    %587 = vmatmul.bf16.gmra.mxu0 %v577
    %v588 = vpop.f32.mrf.mxu0
    %v589 = vadd.f32 %v562, %v588
    %v590 = vpop.f32.mrf.mxu0
    %591 = vdwg.mxu0
    %v592 = vmax.f32 %v589, 0.0
    %vm593 = vcmask 17408
    %v594 = vsel %vm593, %v592, -inf
    %595 = vmax.xlane.f32.xlu0 %v594
    %v596 = vpop.xlane.xlu0 %595
    %v597 = vsub.f32 %v592, %v596
    %v598 = vmul.f32 %v597, 1.442695
    %v599 = vpow.pop %v598
    %v600 = vsel %vm593, %v599, 0.0
    %601 = vadd.xlane.f32.xlu0 %v600
    %v602 = vpop.xlane.xlu0 %601
    %v603 = vrcp.pop %v602
    %v604 = vmul.f32 %v602, %v603
    %v605 = vsub.f32 1.0, %v604
    %v606 = vmul.f32 %v603, %v605
    %v607 = vadd.f32 %v603, %v606
    %vm608 = vweird.f32 %v602
    %vm609 = vweird.f32 %v603
    %vm610 = vmor %vm608, %vm609
    %v611 = vsel %vm610, %v603, %v607
    %v612 = vand.u32 2147483647, %v602
    %vm613 = vcmp.eq.f32.partialorder %v612, 8.507059e+37
    %v614 = vand.u32 %v602, 2147483648
    %v615 = vor.u32 1.1754944e-38, %v614
    %v616 = vsel %vm613, %v615, %v611
    %v617 = vmul.f32 %v599, %v616
    %618 = vst.msk [vmem:[#allocation2] sm:$0x3] %vm593, %v617
    // Predicated region
    $region46: #{forward.7} parent=1 // pred_check
      _
    $region47: #{forward.7} parent=1 // pred_check_branch
      %620 = sbr.rel (0) target = $region49
    $region48: #{forward.7} parent=1 // pred_region
      %622 = vsyncadd [#allocation3], 0
      %s624 = sshll.u32 [#allocation2], 4
      %s625 = int_to_ptr.vmem [resolvable:$true] %s624
      %s626 = sshll.u32 %s11, 4
      %s627 = int_to_ptr.hbm [resolvable:$true] %s626
      %629 = dma.vmem_to_hbm [thread:$0]  %s625, 32, %s627, [#allocation3]
    $region49: #{forward.7} parent=1 // pred_fallthru
      _
    // Predicated region
    $region50: #{forward.7} parent=1 // pred_check
      _
    $region51: #{forward.7} parent=1 // pred_check_branch
      %631 = sbr.rel (0) target = $region53
    $region52: #{forward.7} parent=1 // pred_region
      %633 = dma.done [#allocation3], 32
    $region53: #{forward.7} parent=1 // pred_fallthru
      _
    %634 = vsyncpa [#allocation3], 1

</llo_original>
